<compile_context>
chip_gen: v7x
topology: tpu7x:2x2x1
jax: 0.10.0
libtpu: 0.0.40
codegen_flags: <defaults>
</compile_context>

<pallas_src>
import functools

import jax
import jax.numpy as jnp
from jax.experimental import pallas as pl
from jax.experimental.pallas import tpu as pltpu


def _round_up(x, m):
    return ((x + m - 1) // m) * m


# ----------------------------------------------------------------------------
# Pallas kernel bodies
# ----------------------------------------------------------------------------
def _mm_epilogue_kernel(*refs, has_scale, has_bias, has_res, has_clamp, relu):
    # refs = (x, w, [scale], [bias], [residual], [clamp], out)
    x_ref, w_ref = refs[0], refs[1]
    o_ref = refs[-1]
    acc = jnp.dot(x_ref[...], w_ref[...], preferred_element_type=jnp.float32)
    i = 2
    if has_scale:
        acc = acc * refs[i][...]
        i += 1
    if has_bias:
        acc = acc + refs[i][...]
        i += 1
    if has_res:
        acc = acc + refs[i][...].astype(jnp.float32)   # fused residual add
        i += 1
    if has_clamp:
        acc = jnp.maximum(acc, refs[i][...])           # per-column ReLU clamp
        i += 1
    elif relu:
        acc = jnp.maximum(acc, 0.0)
    o_ref[...] = acc.astype(o_ref.dtype)               # bf16 or f32 store


def _maxpool_kernel(*refs):
    # chained VPU maximum over 9 lane-dense tap blocks (no sublane reduce).
    o_ref = refs[-1]
    m = refs[0][...]
    for r in refs[1:-1]:
        m = jnp.maximum(m, r[...])
    o_ref[...] = m


def _l2norm_kernel(x_ref, o_ref, *, eps):
    # block (1, C, H*W): reduce over the small channel axis, lane-dense store.
    x = x_ref[...]
    s = jnp.sum(x * x, axis=1, keepdims=True)
    o_ref[...] = x * jax.lax.rsqrt(jnp.maximum(s, eps))


def _bilinear_mm_kernel(x_ref, ah_ref, awt_ref, o_ref, *, bc):
    # general path (Hs,Ws>1): out = A_h @ X @ A_w^T per plane (static unroll).
    # TODO(synk): batch planes into a single einsum + lane-dense flat output.
    ah = ah_ref[...]
    awt = awt_ref[...]
    for b in range(bc):
        t = jnp.dot(ah, x_ref[b], preferred_element_type=jnp.float32)
        o_ref[b] = jnp.dot(t, awt, preferred_element_type=jnp.float32)


def _bilinear_bcast_kernel(x_ref, o_ref):
    # 1x1 source plane: align_corners bilinear == broadcast; lane-dense store.
    o_ref[...] = jnp.broadcast_to(x_ref[...], o_ref.shape)


# ----------------------------------------------------------------------------
# Matmul wrapper (bf16 MXU inputs, fused f32 scale/bias/residual/ReLU epilogue)
# ----------------------------------------------------------------------------
def matmul_epilogue(x, w, scale=None, bias=None, residual=None, relu=False,
                    relu_clamp=None, out_dtype=jnp.bfloat16):
    """(M,K) @ (K,N) with optional per-column scale/bias, residual add, ReLU."""
    M, K = x.shape
    Kw, N = w.shape
    assert K == Kw
    # Pad M only to the bf16 sublane pack (16), not a full 128 tile.
    tm = min(128, _round_up(M, 16))
    Mp = _round_up(M, tm)
    xb = x.astype(jnp.bfloat16)
    wb = w.astype(jnp.bfloat16)
    if Mp != M:
        xb = jnp.pad(xb, ((0, Mp - M), (0, 0)))

    args = [xb, wb]
    in_specs = [pl.BlockSpec((tm, K), lambda i: (i, 0)),
                pl.BlockSpec((K, N), lambda i: (0, 0))]
    if scale is not None:
        args.append(scale.reshape(1, N).astype(jnp.float32))
        in_specs.append(pl.BlockSpec((1, N), lambda i: (0, 0)))
    if bias is not None:
        args.append(bias.reshape(1, N).astype(jnp.float32))
        in_specs.append(pl.BlockSpec((1, N), lambda i: (0, 0)))
    if residual is not None:
        rb = residual.astype(jnp.bfloat16)
        if Mp != M:
            rb = jnp.pad(rb, ((0, Mp - M), (0, 0)))
        args.append(rb)
        in_specs.append(pl.BlockSpec((tm, N), lambda i: (i, 0)))
    if relu_clamp is not None:
        args.append(relu_clamp.reshape(1, N).astype(jnp.float32))
        in_specs.append(pl.BlockSpec((1, N), lambda i: (0, 0)))

    out = pl.pallas_call(
        functools.partial(_mm_epilogue_kernel,
                          has_scale=scale is not None,
                          has_bias=bias is not None,
                          has_res=residual is not None,
                          has_clamp=relu_clamp is not None,
                          relu=relu),
        out_shape=jax.ShapeDtypeStruct((Mp, N), out_dtype),
        grid=(Mp // tm,),
        in_specs=in_specs,
        out_specs=pl.BlockSpec((tm, N), lambda i: (i, 0)),
        compiler_params=pltpu.CompilerParams(dimension_semantics=("parallel",)),
    )(*args)
    return out[:M] if Mp != M else out


# ----------------------------------------------------------------------------
# Conv / pool / element-wise wrappers (NHWC activations)
# ----------------------------------------------------------------------------
def _im2col(x, kh, kw, stride, pad):
    N, H, W, C = x.shape
    xp = jnp.pad(x, ((0, 0), (pad, pad), (pad, pad), (0, 0)))
    Ho = (H + 2 * pad - kh) // stride + 1
    Wo = (W + 2 * pad - kw) // stride + 1
    patches = [xp[:, i:i + stride * Ho:stride, j:j + stride * Wo:stride, :]
               for i in range(kh) for j in range(kw)]
    cols = jnp.stack(patches, axis=3)                 # (N, Ho, Wo, kh*kw, C)
    return cols.reshape(N * Ho * Wo, kh * kw * C), Ho, Wo


def conv_bn(x, w, scale, bias, stride, pad, relu, residual=None,
            relu_clamp=None, out_dtype=jnp.bfloat16):
    """Conv2d on NHWC activations with folded BN scale/bias, fused epilogue."""
    N, H, W, Cin = x.shape
    Cout, _, kh, kw = w.shape
    xb = x.astype(jnp.bfloat16)            # bf16 BEFORE im2col (halves dup bytes)
    if kh == 1 and kw == 1 and pad == 0:
        xs = xb[:, ::stride, ::stride, :] if stride > 1 else xb
        Ho, Wo = xs.shape[1], xs.shape[2]
        cols = xs.reshape(N * Ho * Wo, Cin)
        w_mat = w.reshape(Cout, Cin).T
    else:
        cols, Ho, Wo = _im2col(xb, kh, kw, stride, pad)
        w_mat = w.transpose(2, 3, 1, 0).reshape(kh * kw * Cin, Cout)
    res2 = residual.reshape(N * Ho * Wo, Cout) if residual is not None else None
    out = matmul_epilogue(cols, w_mat, scale=scale, bias=bias, residual=res2,
                          relu=relu, relu_clamp=relu_clamp, out_dtype=out_dtype)
    return out.reshape(N, Ho, Wo, Cout)


def maxpool3x3_s2(x):
    """3x3 / stride-2 / pad-1 max pool as a chained VPU max over 9 taps."""
    N, H, W, C = x.shape
    k, s, pad = 3, 2, 1
    xp = jnp.pad(x, ((0, 0), (pad, pad), (pad, pad), (0, 0)),
                 constant_values=-jnp.inf)
    Ho = (H + 2 * pad - k) // s + 1
    Wo = (W + 2 * pad - k) // s + 1
    patches = [xp[:, i:i + s * Ho:s, j:j + s * Wo:s, :].reshape(-1)
               for i in range(k) for j in range(k)]
    L = patches[0].shape[0]
    lane = 128
    Lp = _round_up(L, lane)
    if Lp != L:
        patches = [jnp.pad(p_, (0, Lp - L)) for p_ in patches]
    R = Lp // lane
    p2 = [p_.reshape(R, lane) for p_ in patches]      # lane-dense 2D taps
    bt = min(256, R)
    Rp = _round_up(R, bt)
    if Rp != R:
        p2 = [jnp.pad(q, ((0, Rp - R), (0, 0))) for q in p2]
    out = pl.pallas_call(
        _maxpool_kernel,
        out_shape=jax.ShapeDtypeStruct((Rp, lane), x.dtype),
        grid=(Rp // bt,),
        in_specs=[pl.BlockSpec((bt, lane), lambda i: (i, 0))] * (k * k),
        out_specs=pl.BlockSpec((bt, lane), lambda i: (i, 0)),
        compiler_params=pltpu.CompilerParams(dimension_semantics=("parallel",)),
    )(*p2)
    return out.reshape(-1)[:L].reshape(N, Ho, Wo, C)


def l2_normalize_channels(x, eps=1e-12):
    """x: (N, C, H, W) -> x / ||x||_2 along C (eps clamp on sum of squares)."""
    N, C, H, W = x.shape
    x2 = x.reshape(N, C, H * W)
    out = pl.pallas_call(
        functools.partial(_l2norm_kernel, eps=eps),
        out_shape=jax.ShapeDtypeStruct((N, C, H * W), jnp.float32),
        grid=(N,),
        in_specs=[pl.BlockSpec((1, C, H * W), lambda i: (i, 0, 0))],
        out_specs=pl.BlockSpec((1, C, H * W), lambda i: (i, 0, 0)),
        compiler_params=pltpu.CompilerParams(dimension_semantics=("parallel",)),
    )(x2)
    return out.reshape(N, C, H, W)


# ----------------------------------------------------------------------------
# Bilinear (align_corners=True) resize
# ----------------------------------------------------------------------------
def _bilinear_matrix(in_size, out_size):
    if out_size == 1:
        pos = jnp.zeros((1,), jnp.float32)
    else:
        pos = jnp.arange(out_size, dtype=jnp.float32) * \
            (in_size - 1) / (out_size - 1)
    i0 = jnp.clip(jnp.floor(pos).astype(jnp.int32), 0, in_size - 1)
    i1 = jnp.clip(i0 + 1, 0, in_size - 1)
    frac = pos - i0.astype(jnp.float32)
    rows = jnp.arange(out_size)
    A = jnp.zeros((out_size, in_size), jnp.float32)
    A = A.at[rows, i0].add(1.0 - frac)
    A = A.at[rows, i1].add(frac)
    return A


def bilinear_resize_planes(planes, out_h, out_w, bc=8):
    """Resize (P, Hs, Ws) planes -> (P, out_h, out_w), gridded over planes."""
    P, Hs, Ws = planes.shape
    Pp = _round_up(P, bc)
    if Pp != P:
        planes = jnp.pad(planes, ((0, Pp - P), (0, 0), (0, 0)))
    grid = (Pp // bc,)
    cp = pltpu.CompilerParams(dimension_semantics=("parallel",))
    if Hs == 1 and Ws == 1:
        # Lane-dense broadcast: output block last dim = out_h*out_w (full lanes)
        # instead of out_w=32 masked partial stores.
        hw = out_h * out_w
        out = pl.pallas_call(
            _bilinear_bcast_kernel,
            out_shape=jax.ShapeDtypeStruct((Pp, 1, hw), jnp.float32),
            grid=grid,
            in_specs=[pl.BlockSpec((bc, 1, 1), lambda i: (i, 0, 0))],
            out_specs=pl.BlockSpec((bc, 1, hw), lambda i: (i, 0, 0)),
            compiler_params=cp,
        )(planes.astype(jnp.float32))
        out = out.reshape(Pp, out_h, out_w)
    else:
        A_h = _bilinear_matrix(Hs, out_h)              # (out_h, Hs)
        A_wT = _bilinear_matrix(Ws, out_w).T           # (Ws, out_w)
        out = pl.pallas_call(
            functools.partial(_bilinear_mm_kernel, bc=bc),
            out_shape=jax.ShapeDtypeStruct((Pp, out_h, out_w), jnp.float32),
            grid=grid,
            in_specs=[pl.BlockSpec((bc, Hs, Ws), lambda i: (i, 0, 0)),
                      pl.BlockSpec((out_h, Hs), lambda i: (0, 0)),
                      pl.BlockSpec((Ws, out_w), lambda i: (0, 0))],
            out_specs=pl.BlockSpec((bc, out_h, out_w), lambda i: (i, 0, 0)),
            compiler_params=cp,
        )(planes.astype(jnp.float32), A_h, A_wT)
    return out[:P] if Pp != P else out


# ----------------------------------------------------------------------------
# Deterministic parameter construction (scaled-down ResNet-style backbone)
# ----------------------------------------------------------------------------
def _make_conv(key, cin, cout, k):
    std = (2.0 / (cin * k * k)) ** 0.5
    return jax.random.normal(key, (cout, cin, k, k), jnp.float32) * std


def _make_bn(c, eps=1e-5):
    gamma = jnp.ones((c,), jnp.float32)
    beta = jnp.full((c,), 0.01, jnp.float32)
    mean = jnp.zeros((c,), jnp.float32)
    var = jnp.ones((c,), jnp.float32)
    scale = gamma / jnp.sqrt(var + eps)
    bias = beta - mean * scale
    return scale, bias


def _init_bottleneck(key, cin, cmid, cout):
    k1, k2, k3, kd = jax.random.split(key, 4)
    return {
        "w1": _make_conv(k1, cin, cmid, 1), "bn1": _make_bn(cmid),
        "w2": _make_conv(k2, cmid, cmid, 3), "bn2": _make_bn(cmid),
        "w3": _make_conv(k3, cmid, cout, 1), "bn3": _make_bn(cout),
        "wd": _make_conv(kd, cin, cout, 1), "bnd": _make_bn(cout),
    }


def init_params(key, tasks, task_out_ch, c0=4, ch=(16, 32, 64, 128)):
    keys = jax.random.split(key, 6 + len(tasks))
    params = {
        "conv1_w": _make_conv(keys[0], 3, c0, 7),
        "bn1": _make_bn(c0),
        "layer1": _init_bottleneck(keys[1], c0, ch[0] // 4, ch[0]),
        "layer2": _init_bottleneck(keys[2], ch[0], ch[1] // 4, ch[1]),
        "layer3": _init_bottleneck(keys[3], ch[1], ch[2] // 4, ch[2]),
        "layer4": _init_bottleneck(keys[4], ch[2], ch[3] // 4, ch[3]),
        "decoders": [],
    }
    for i, t in enumerate(tasks):
        kw_, kb_ = jax.random.split(keys[5 + i])
        w = _make_conv(kw_, ch[3], task_out_ch[t], 1)
        b = jax.random.normal(kb_, (task_out_ch[t],), jnp.float32) * 0.01
        params["decoders"].append({"w": w, "b": b})
    return params


def bottleneck(x, p, stride):
    cmid = p["w1"].shape[0]
    cout = p["w3"].shape[0]
    if stride == 1:
        # w1 and the downsample conv share the exact same input and output
        # spatial size: fuse into one wider matmul (better MXU N-fill).
        # Per-column ReLU (only on the w1 half) via a clamp row of 0 / -inf.
        w_cat = jnp.concatenate([p["w1"], p["wd"]], axis=0)
        s_cat = jnp.concatenate([p["bn1"][0], p["bnd"][0]])
        b_cat = jnp.concatenate([p["bn1"][1], p["bnd"][1]])
        clamp = jnp.concatenate([jnp.zeros((cmid,), jnp.float32),
                                 jnp.full((cout,), -jnp.inf, jnp.float32)])
        both = conv_bn(x, w_cat, s_cat, b_cat, stride=1, pad=0, relu=False,
                       relu_clamp=clamp)
        out = both[..., :cmid]
        identity = both[..., cmid:]
    else:
        identity = conv_bn(x, p["wd"], *p["bnd"], stride=stride, pad=0,
                           relu=False)
        out = conv_bn(x, p["w1"], *p["bn1"], stride=1, pad=0, relu=True)
    out = conv_bn(out, p["w2"], *p["bn2"], stride=stride, pad=1, relu=True)
    # Residual add + ReLU fused into the w3 1x1-conv epilogue (no add_relu).
    out = conv_bn(out, p["w3"], *p["bn3"], stride=1, pad=0, relu=True,
                  residual=identity)
    return out


# ----------------------------------------------------------------------------
# Forward pass (mirrors ORIG_network_split.forward)
# ----------------------------------------------------------------------------
def forward(params, x, tasks):
    N, _, im_h, im_w = x.shape
    h = jnp.transpose(x, (0, 2, 3, 1))                 # NCHW -> NHWC once
    # shared_conv: 7x7 s2 conv + BN + ReLU + 3x3 s2 maxpool
    h = conv_bn(h, params["conv1_w"], *params["bn1"], stride=2, pad=3,
                relu=True)
    h = maxpool3x3_s2(h)
    h = bottleneck(h, params["layer1"], stride=1)
    h = bottleneck(h, params["layer2"], stride=2)
    h = bottleneck(h, params["layer3"], stride=2)
    h = bottleneck(h, params["layer4"], stride=2)

    Nb, Hs, Ws, Cin = h.shape
    # Fuse all decoder 1x1 convs into a single matmul (concat output channels);
    # keep the decoder / upsample path in f32.
    w_cat = jnp.concatenate(
        [d["w"].reshape(d["w"].shape[0], Cin) for d in params["decoders"]],
        axis=0).T                                      # (Cin, Ctot)
    b_cat = jnp.concatenate([d["b"] for d in params["decoders"]], axis=0)
    Ctot = w_cat.shape[1]
    d = matmul_epilogue(h.reshape(Nb * Hs * Ws, Cin), w_cat, bias=b_cat,
                        out_dtype=jnp.float32)
    d = d.reshape(Nb, Hs, Ws, Ctot).transpose(0, 3, 1, 2)   # tiny NCHW planes

    up = bilinear_resize_planes(d.reshape(Nb * Ctot, Hs, Ws), im_h, im_w)
    up = up.reshape(Nb, Ctot, im_h, im_w)              # already NCHW outputs

    outs, off = [], 0
    for i, t in enumerate(tasks):
        c_t = params["decoders"][i]["w"].shape[0]
        o = up[:, off:off + c_t]
        off += c_t
        if t == "normal":
            o = l2_normalize_channels(o)
        outs.append(o)
    return outs


# ----------------------------------------------------------------------------
if __name__ == "__main__":
    tasks = ("semantic", "depth", "normal")
    task_out_ch = {"semantic": 13, "depth": 1, "normal": 3}

    key = jax.random.PRNGKey(0)
    k_param, k_in = jax.random.split(key)
    params = init_params(k_param, tasks, task_out_ch)

    x = jax.random.normal(k_in, (2, 3, 32, 32), jnp.float32)

    fwd = jax.jit(functools.partial(forward, tasks=tasks))
    outs = jax.block_until_ready(fwd(params, x))

    ok = True
    for t, o in zip(tasks, outs):
        expected = (2, task_out_ch[t], 32, 32)
        if tuple(o.shape) != expected or not bool(jnp.all(jnp.isfinite(o))):
            ok = False
    # 'normal' output must be unit-norm along channels
    n = outs[tasks.index("normal")]
    norms = jnp.sqrt(jnp.sum(n * n, axis=1))
    if not bool(jnp.allclose(norms, 1.0, atol=1e-4)):
        ok = False

    if ok:
        print("KERNEL_OK")
</pallas_src>

<mosaic_0001>
module attributes {stable_mosaic.version = 11 : i64} {
  func.func @_mm_epilogue_kernel(%arg0: i32, %arg1: memref<128x147xbf16, #tpu.memory_space<vmem>>, %arg2: memref<147x4xbf16, #tpu.memory_space<vmem>>, %arg3: memref<1x4xf32, #tpu.memory_space<vmem>>, %arg4: memref<1x4xf32, #tpu.memory_space<vmem>>, %arg5: memref<128x4xbf16, #tpu.memory_space<vmem>>) attributes {dimension_semantics = [#tpu.dimension_semantics<parallel>], iteration_bounds = array<i64: 4>, scalar_prefetch = 0 : i64, scratch_operands = 0 : i64, tpu.core_type = #tpu.core_type<tc>, window_params = [{transform_indices = @transform_0, window_bounds = array<i64: 128, 147>}, {pipeline_mode = #tpu.pipeline_mode<synchronous>, transform_indices = @transform_1, window_bounds = array<i64: 147, 4>}, {pipeline_mode = #tpu.pipeline_mode<synchronous>, transform_indices = @transform_2, window_bounds = array<i64: 1, 4>}, {pipeline_mode = #tpu.pipeline_mode<synchronous>, transform_indices = @transform_3, window_bounds = array<i64: 1, 4>}, {transform_indices = @transform_4, window_bounds = array<i64: 128, 4>}]} {
    %c0 = arith.constant 0 : index
    %c0_0 = arith.constant 0 : index
    %0 = vector.load %arg1[%c0, %c0_0] : memref<128x147xbf16, #tpu.memory_space<vmem>>, vector<128x147xbf16>
    %c0_1 = arith.constant 0 : index
    %c0_2 = arith.constant 0 : index
    %1 = vector.load %arg2[%c0_1, %c0_2] : memref<147x4xbf16, #tpu.memory_space<vmem>>, vector<147x4xbf16>
    %cst = arith.constant dense<0.000000e+00> : vector<128x4xf32>
    %2 = tpu.matmul %0, %1, %cst {dimension_numbers = #tpu.dot_dimension_numbers<[1], [0], [0], [1], [0, 0, 1, 1], [], []>} : vector<128x147xbf16>, vector<147x4xbf16>, vector<128x4xf32> -> vector<128x4xf32>
    %c0_3 = arith.constant 0 : index
    %c0_4 = arith.constant 0 : index
    %3 = vector.load %arg3[%c0_3, %c0_4] : memref<1x4xf32, #tpu.memory_space<vmem>>, vector<1x4xf32>
    %4 = vector.broadcast %3 : vector<1x4xf32> to vector<128x4xf32>
    %5 = arith.mulf %2, %4 : vector<128x4xf32>
    %c0_5 = arith.constant 0 : index
    %c0_6 = arith.constant 0 : index
    %6 = vector.load %arg4[%c0_5, %c0_6] : memref<1x4xf32, #tpu.memory_space<vmem>>, vector<1x4xf32>
    %7 = vector.broadcast %6 : vector<1x4xf32> to vector<128x4xf32>
    %8 = arith.addf %5, %7 : vector<128x4xf32>
    %cst_7 = arith.constant 0.000000e+00 : f32
    %9 = vector.broadcast %cst_7 : f32 to vector<128x4xf32>
    %10 = arith.maximumf %8, %9 : vector<128x4xf32>
    %11 = arith.truncf %10 : vector<128x4xf32> to vector<128x4xbf16>
    %c0_8 = arith.constant 0 : index
    %c0_9 = arith.constant 0 : index
    %12 = vector.load %arg5[%c0_8, %c0_9] : memref<128x4xbf16, #tpu.memory_space<vmem>>, vector<128x4xbf16>
    tpu.vector_store %arg5[%c0_8, %c0_9], %11 {strides = array<i32>} : memref<128x4xbf16, #tpu.memory_space<vmem>>, vector<128x4xbf16>,
    return
  }
  func.func @transform_0(%arg0: i32) -> (i32, i32) {
    %c0_i32 = arith.constant 0 : i32
    %c0_i32_0 = arith.constant 0 : i32
    return %arg0, %c0_i32 : i32, i32
  }
  func.func @transform_1(%arg0: i32) -> (i32, i32) {
    %c0_i32 = arith.constant 0 : i32
    %c0_i32_0 = arith.constant 0 : i32
    %c0_i32_1 = arith.constant 0 : i32
    return %c0_i32, %c0_i32_0 : i32, i32
  }
  func.func @transform_2(%arg0: i32) -> (i32, i32) {
    %c0_i32 = arith.constant 0 : i32
    %c0_i32_0 = arith.constant 0 : i32
    %c0_i32_1 = arith.constant 0 : i32
    return %c0_i32, %c0_i32_0 : i32, i32
  }
  func.func @transform_3(%arg0: i32) -> (i32, i32) {
    %c0_i32 = arith.constant 0 : i32
    %c0_i32_0 = arith.constant 0 : i32
    %c0_i32_1 = arith.constant 0 : i32
    return %c0_i32, %c0_i32_0 : i32, i32
  }
  func.func @transform_4(%arg0: i32) -> (i32, i32) {
    %c0_i32 = arith.constant 0 : i32
    %c0_i32_0 = arith.constant 0 : i32
    return %arg0, %c0_i32 : i32, i32
  }
}

module attributes {stable_mosaic.version = 11 : i64} {
  func.func @_maxpool_kernel(%arg0: i32, %arg1: memref<4x128xbf16, #tpu.memory_space<vmem>>, %arg2: memref<4x128xbf16, #tpu.memory_space<vmem>>, %arg3: memref<4x128xbf16, #tpu.memory_space<vmem>>, %arg4: memref<4x128xbf16, #tpu.memory_space<vmem>>, %arg5: memref<4x128xbf16, #tpu.memory_space<vmem>>, %arg6: memref<4x128xbf16, #tpu.memory_space<vmem>>, %arg7: memref<4x128xbf16, #tpu.memory_space<vmem>>, %arg8: memref<4x128xbf16, #tpu.memory_space<vmem>>, %arg9: memref<4x128xbf16, #tpu.memory_space<vmem>>, %arg10: memref<4x128xbf16, #tpu.memory_space<vmem>>) attributes {dimension_semantics = [#tpu.dimension_semantics<parallel>], iteration_bounds = array<i64: 1>, scalar_prefetch = 0 : i64, scratch_operands = 0 : i64, tpu.core_type = #tpu.core_type<tc>, window_params = [{transform_indices = @transform_0, window_bounds = array<i64: 4, 128>}, {transform_indices = @transform_1, window_bounds = array<i64: 4, 128>}, {transform_indices = @transform_2, window_bounds = array<i64: 4, 128>}, {transform_indices = @transform_3, window_bounds = array<i64: 4, 128>}, {transform_indices = @transform_4, window_bounds = array<i64: 4, 128>}, {transform_indices = @transform_5, window_bounds = array<i64: 4, 128>}, {transform_indices = @transform_6, window_bounds = array<i64: 4, 128>}, {transform_indices = @transform_7, window_bounds = array<i64: 4, 128>}, {transform_indices = @transform_8, window_bounds = array<i64: 4, 128>}, {transform_indices = @transform_9, window_bounds = array<i64: 4, 128>}]} {
    %c0 = arith.constant 0 : index
    %c0_0 = arith.constant 0 : index
    %0 = vector.load %arg1[%c0, %c0_0] : memref<4x128xbf16, #tpu.memory_space<vmem>>, vector<4x128xbf16>
    %c0_1 = arith.constant 0 : index
    %c0_2 = arith.constant 0 : index
    %1 = vector.load %arg2[%c0_1, %c0_2] : memref<4x128xbf16, #tpu.memory_space<vmem>>, vector<4x128xbf16>
    %2 = arith.maximumf %0, %1 : vector<4x128xbf16>
    %c0_3 = arith.constant 0 : index
    %c0_4 = arith.constant 0 : index
    %3 = vector.load %arg3[%c0_3, %c0_4] : memref<4x128xbf16, #tpu.memory_space<vmem>>, vector<4x128xbf16>
    %4 = arith.maximumf %2, %3 : vector<4x128xbf16>
    %c0_5 = arith.constant 0 : index
    %c0_6 = arith.constant 0 : index
    %5 = vector.load %arg4[%c0_5, %c0_6] : memref<4x128xbf16, #tpu.memory_space<vmem>>, vector<4x128xbf16>
    %6 = arith.maximumf %4, %5 : vector<4x128xbf16>
    %c0_7 = arith.constant 0 : index
    %c0_8 = arith.constant 0 : index
    %7 = vector.load %arg5[%c0_7, %c0_8] : memref<4x128xbf16, #tpu.memory_space<vmem>>, vector<4x128xbf16>
    %8 = arith.maximumf %6, %7 : vector<4x128xbf16>
    %c0_9 = arith.constant 0 : index
    %c0_10 = arith.constant 0 : index
    %9 = vector.load %arg6[%c0_9, %c0_10] : memref<4x128xbf16, #tpu.memory_space<vmem>>, vector<4x128xbf16>
    %10 = arith.maximumf %8, %9 : vector<4x128xbf16>
    %c0_11 = arith.constant 0 : index
    %c0_12 = arith.constant 0 : index
    %11 = vector.load %arg7[%c0_11, %c0_12] : memref<4x128xbf16, #tpu.memory_space<vmem>>, vector<4x128xbf16>
    %12 = arith.maximumf %10, %11 : vector<4x128xbf16>
    %c0_13 = arith.constant 0 : index
    %c0_14 = arith.constant 0 : index
    %13 = vector.load %arg8[%c0_13, %c0_14] : memref<4x128xbf16, #tpu.memory_space<vmem>>, vector<4x128xbf16>
    %14 = arith.maximumf %12, %13 : vector<4x128xbf16>
    %c0_15 = arith.constant 0 : index
    %c0_16 = arith.constant 0 : index
    %15 = vector.load %arg9[%c0_15, %c0_16] : memref<4x128xbf16, #tpu.memory_space<vmem>>, vector<4x128xbf16>
    %16 = arith.maximumf %14, %15 : vector<4x128xbf16>
    %c0_17 = arith.constant 0 : index
    %c0_18 = arith.constant 0 : index
    %17 = vector.load %arg10[%c0_17, %c0_18] : memref<4x128xbf16, #tpu.memory_space<vmem>>, vector<4x128xbf16>
    tpu.vector_store %arg10[%c0_17, %c0_18], %16 {strides = array<i32>} : memref<4x128xbf16, #tpu.memory_space<vmem>>, vector<4x128xbf16>,
    return
  }
  func.func @transform_0(%arg0: i32) -> (i32, i32) {
    %c0_i32 = arith.constant 0 : i32
    %c0_i32_0 = arith.constant 0 : i32
    return %arg0, %c0_i32 : i32, i32
  }
  func.func @transform_1(%arg0: i32) -> (i32, i32) {
    %c0_i32 = arith.constant 0 : i32
    %c0_i32_0 = arith.constant 0 : i32
    return %arg0, %c0_i32 : i32, i32
  }
  func.func @transform_2(%arg0: i32) -> (i32, i32) {
    %c0_i32 = arith.constant 0 : i32
    %c0_i32_0 = arith.constant 0 : i32
    return %arg0, %c0_i32 : i32, i32
  }
  func.func @transform_3(%arg0: i32) -> (i32, i32) {
    %c0_i32 = arith.constant 0 : i32
    %c0_i32_0 = arith.constant 0 : i32
    return %arg0, %c0_i32 : i32, i32
  }
  func.func @transform_4(%arg0: i32) -> (i32, i32) {
    %c0_i32 = arith.constant 0 : i32
    %c0_i32_0 = arith.constant 0 : i32
    return %arg0, %c0_i32 : i32, i32
  }
  func.func @transform_5(%arg0: i32) -> (i32, i32) {
    %c0_i32 = arith.constant 0 : i32
    %c0_i32_0 = arith.constant 0 : i32
    return %arg0, %c0_i32 : i32, i32
  }
  func.func @transform_6(%arg0: i32) -> (i32, i32) {
    %c0_i32 = arith.constant 0 : i32
    %c0_i32_0 = arith.constant 0 : i32
    return %arg0, %c0_i32 : i32, i32
  }
  func.func @transform_7(%arg0: i32) -> (i32, i32) {
    %c0_i32 = arith.constant 0 : i32
    %c0_i32_0 = arith.constant 0 : i32
    return %arg0, %c0_i32 : i32, i32
  }
  func.func @transform_8(%arg0: i32) -> (i32, i32) {
    %c0_i32 = arith.constant 0 : i32
    %c0_i32_0 = arith.constant 0 : i32
    return %arg0, %c0_i32 : i32, i32
  }
  func.func @transform_9(%arg0: i32) -> (i32, i32) {
    %c0_i32 = arith.constant 0 : i32
    %c0_i32_0 = arith.constant 0 : i32
    return %arg0, %c0_i32 : i32, i32
  }
}

module attributes {stable_mosaic.version = 11 : i64} {
  func.func @_mm_epilogue_kernel(%arg0: i32, %arg1: memref<128x4xbf16, #tpu.memory_space<vmem>>, %arg2: memref<4x20xbf16, #tpu.memory_space<vmem>>, %arg3: memref<1x20xf32, #tpu.memory_space<vmem>>, %arg4: memref<1x20xf32, #tpu.memory_space<vmem>>, %arg5: memref<1x20xf32, #tpu.memory_space<vmem>>, %arg6: memref<128x20xbf16, #tpu.memory_space<vmem>>) attributes {dimension_semantics = [#tpu.dimension_semantics<parallel>], iteration_bounds = array<i64: 1>, scalar_prefetch = 0 : i64, scratch_operands = 0 : i64, tpu.core_type = #tpu.core_type<tc>, window_params = [{transform_indices = @transform_0, window_bounds = array<i64: 128, 4>}, {pipeline_mode = #tpu.pipeline_mode<synchronous>, transform_indices = @transform_1, window_bounds = array<i64: 4, 20>}, {pipeline_mode = #tpu.pipeline_mode<synchronous>, transform_indices = @transform_2, window_bounds = array<i64: 1, 20>}, {pipeline_mode = #tpu.pipeline_mode<synchronous>, transform_indices = @transform_3, window_bounds = array<i64: 1, 20>}, {pipeline_mode = #tpu.pipeline_mode<synchronous>, transform_indices = @transform_4, window_bounds = array<i64: 1, 20>}, {transform_indices = @transform_5, window_bounds = array<i64: 128, 20>}]} {
    %c0 = arith.constant 0 : index
    %c0_0 = arith.constant 0 : index
    %0 = vector.load %arg1[%c0, %c0_0] : memref<128x4xbf16, #tpu.memory_space<vmem>>, vector<128x4xbf16>
    %c0_1 = arith.constant 0 : index
    %c0_2 = arith.constant 0 : index
    %1 = vector.load %arg2[%c0_1, %c0_2] : memref<4x20xbf16, #tpu.memory_space<vmem>>, vector<4x20xbf16>
    %cst = arith.constant dense<0.000000e+00> : vector<128x20xf32>
    %2 = tpu.matmul %0, %1, %cst {dimension_numbers = #tpu.dot_dimension_numbers<[1], [0], [0], [1], [0, 0, 1, 1], [], []>} : vector<128x4xbf16>, vector<4x20xbf16>, vector<128x20xf32> -> vector<128x20xf32>
    %c0_3 = arith.constant 0 : index
    %c0_4 = arith.constant 0 : index
    %3 = vector.load %arg3[%c0_3, %c0_4] : memref<1x20xf32, #tpu.memory_space<vmem>>, vector<1x20xf32>
    %4 = vector.broadcast %3 : vector<1x20xf32> to vector<128x20xf32>
    %5 = arith.mulf %2, %4 : vector<128x20xf32>
    %c0_5 = arith.constant 0 : index
    %c0_6 = arith.constant 0 : index
    %6 = vector.load %arg4[%c0_5, %c0_6] : memref<1x20xf32, #tpu.memory_space<vmem>>, vector<1x20xf32>
    %7 = vector.broadcast %6 : vector<1x20xf32> to vector<128x20xf32>
    %8 = arith.addf %5, %7 : vector<128x20xf32>
    %c0_7 = arith.constant 0 : index
    %c0_8 = arith.constant 0 : index
    %9 = vector.load %arg5[%c0_7, %c0_8] : memref<1x20xf32, #tpu.memory_space<vmem>>, vector<1x20xf32>
    %10 = vector.broadcast %9 : vector<1x20xf32> to vector<128x20xf32>
    %11 = arith.maximumf %8, %10 : vector<128x20xf32>
    %12 = arith.truncf %11 : vector<128x20xf32> to vector<128x20xbf16>
    %c0_9 = arith.constant 0 : index
    %c0_10 = arith.constant 0 : index
    %13 = vector.load %arg6[%c0_9, %c0_10] : memref<128x20xbf16, #tpu.memory_space<vmem>>, vector<128x20xbf16>
    tpu.vector_store %arg6[%c0_9, %c0_10], %12 {strides = array<i32>} : memref<128x20xbf16, #tpu.memory_space<vmem>>, vector<128x20xbf16>,
    return
  }
  func.func @transform_0(%arg0: i32) -> (i32, i32) {
    %c0_i32 = arith.constant 0 : i32
    %c0_i32_0 = arith.constant 0 : i32
    return %arg0, %c0_i32 : i32, i32
  }
  func.func @transform_1(%arg0: i32) -> (i32, i32) {
    %c0_i32 = arith.constant 0 : i32
    %c0_i32_0 = arith.constant 0 : i32
    %c0_i32_1 = arith.constant 0 : i32
    return %c0_i32, %c0_i32_0 : i32, i32
  }
  func.func @transform_2(%arg0: i32) -> (i32, i32) {
    %c0_i32 = arith.constant 0 : i32
    %c0_i32_0 = arith.constant 0 : i32
    %c0_i32_1 = arith.constant 0 : i32
    return %c0_i32, %c0_i32_0 : i32, i32
  }
  func.func @transform_3(%arg0: i32) -> (i32, i32) {
    %c0_i32 = arith.constant 0 : i32
    %c0_i32_0 = arith.constant 0 : i32
    %c0_i32_1 = arith.constant 0 : i32
    return %c0_i32, %c0_i32_0 : i32, i32
  }
  func.func @transform_4(%arg0: i32) -> (i32, i32) {
    %c0_i32 = arith.constant 0 : i32
    %c0_i32_0 = arith.constant 0 : i32
    %c0_i32_1 = arith.constant 0 : i32
    return %c0_i32, %c0_i32_0 : i32, i32
  }
  func.func @transform_5(%arg0: i32) -> (i32, i32) {
    %c0_i32 = arith.constant 0 : i32
    %c0_i32_0 = arith.constant 0 : i32
    return %arg0, %c0_i32 : i32, i32
  }
}

module attributes {stable_mosaic.version = 11 : i64} {
  func.func @_mm_epilogue_kernel(%arg0: i32, %arg1: memref<128x36xbf16, #tpu.memory_space<vmem>>, %arg2: memref<36x4xbf16, #tpu.memory_space<vmem>>, %arg3: memref<1x4xf32, #tpu.memory_space<vmem>>, %arg4: memref<1x4xf32, #tpu.memory_space<vmem>>, %arg5: memref<128x4xbf16, #tpu.memory_space<vmem>>) attributes {dimension_semantics = [#tpu.dimension_semantics<parallel>], iteration_bounds = array<i64: 1>, scalar_prefetch = 0 : i64, scratch_operands = 0 : i64, tpu.core_type = #tpu.core_type<tc>, window_params = [{transform_indices = @transform_0, window_bounds = array<i64: 128, 36>}, {pipeline_mode = #tpu.pipeline_mode<synchronous>, transform_indices = @transform_1, window_bounds = array<i64: 36, 4>}, {pipeline_mode = #tpu.pipeline_mode<synchronous>, transform_indices = @transform_2, window_bounds = array<i64: 1, 4>}, {pipeline_mode = #tpu.pipeline_mode<synchronous>, transform_indices = @transform_3, window_bounds = array<i64: 1, 4>}, {transform_indices = @transform_4, window_bounds = array<i64: 128, 4>}]} {
    %c0 = arith.constant 0 : index
    %c0_0 = arith.constant 0 : index
    %0 = vector.load %arg1[%c0, %c0_0] : memref<128x36xbf16, #tpu.memory_space<vmem>>, vector<128x36xbf16>
    %c0_1 = arith.constant 0 : index
    %c0_2 = arith.constant 0 : index
    %1 = vector.load %arg2[%c0_1, %c0_2] : memref<36x4xbf16, #tpu.memory_space<vmem>>, vector<36x4xbf16>
    %cst = arith.constant dense<0.000000e+00> : vector<128x4xf32>
    %2 = tpu.matmul %0, %1, %cst {dimension_numbers = #tpu.dot_dimension_numbers<[1], [0], [0], [1], [0, 0, 1, 1], [], []>} : vector<128x36xbf16>, vector<36x4xbf16>, vector<128x4xf32> -> vector<128x4xf32>
    %c0_3 = arith.constant 0 : index
    %c0_4 = arith.constant 0 : index
    %3 = vector.load %arg3[%c0_3, %c0_4] : memref<1x4xf32, #tpu.memory_space<vmem>>, vector<1x4xf32>
    %4 = vector.broadcast %3 : vector<1x4xf32> to vector<128x4xf32>
    %5 = arith.mulf %2, %4 : vector<128x4xf32>
    %c0_5 = arith.constant 0 : index
    %c0_6 = arith.constant 0 : index
    %6 = vector.load %arg4[%c0_5, %c0_6] : memref<1x4xf32, #tpu.memory_space<vmem>>, vector<1x4xf32>
    %7 = vector.broadcast %6 : vector<1x4xf32> to vector<128x4xf32>
    %8 = arith.addf %5, %7 : vector<128x4xf32>
    %cst_7 = arith.constant 0.000000e+00 : f32
    %9 = vector.broadcast %cst_7 : f32 to vector<128x4xf32>
    %10 = arith.maximumf %8, %9 : vector<128x4xf32>
    %11 = arith.truncf %10 : vector<128x4xf32> to vector<128x4xbf16>
    %c0_8 = arith.constant 0 : index
    %c0_9 = arith.constant 0 : index
    %12 = vector.load %arg5[%c0_8, %c0_9] : memref<128x4xbf16, #tpu.memory_space<vmem>>, vector<128x4xbf16>
    tpu.vector_store %arg5[%c0_8, %c0_9], %11 {strides = array<i32>} : memref<128x4xbf16, #tpu.memory_space<vmem>>, vector<128x4xbf16>,
    return
  }
  func.func @transform_0(%arg0: i32) -> (i32, i32) {
    %c0_i32 = arith.constant 0 : i32
    %c0_i32_0 = arith.constant 0 : i32
    return %arg0, %c0_i32 : i32, i32
  }
  func.func @transform_1(%arg0: i32) -> (i32, i32) {
    %c0_i32 = arith.constant 0 : i32
    %c0_i32_0 = arith.constant 0 : i32
    %c0_i32_1 = arith.constant 0 : i32
    return %c0_i32, %c0_i32_0 : i32, i32
  }
  func.func @transform_2(%arg0: i32) -> (i32, i32) {
    %c0_i32 = arith.constant 0 : i32
    %c0_i32_0 = arith.constant 0 : i32
    %c0_i32_1 = arith.constant 0 : i32
    return %c0_i32, %c0_i32_0 : i32, i32
  }
  func.func @transform_3(%arg0: i32) -> (i32, i32) {
    %c0_i32 = arith.constant 0 : i32
    %c0_i32_0 = arith.constant 0 : i32
    %c0_i32_1 = arith.constant 0 : i32
    return %c0_i32, %c0_i32_0 : i32, i32
  }
  func.func @transform_4(%arg0: i32) -> (i32, i32) {
    %c0_i32 = arith.constant 0 : i32
    %c0_i32_0 = arith.constant 0 : i32
    return %arg0, %c0_i32 : i32, i32
  }
}

module attributes {stable_mosaic.version = 11 : i64} {
  func.func @_mm_epilogue_kernel(%arg0: i32, %arg1: memref<128x4xbf16, #tpu.memory_space<vmem>>, %arg2: memref<4x16xbf16, #tpu.memory_space<vmem>>, %arg3: memref<1x16xf32, #tpu.memory_space<vmem>>, %arg4: memref<1x16xf32, #tpu.memory_space<vmem>>, %arg5: memref<128x16xbf16, #tpu.memory_space<vmem>>, %arg6: memref<128x16xbf16, #tpu.memory_space<vmem>>) attributes {dimension_semantics = [#tpu.dimension_semantics<parallel>], iteration_bounds = array<i64: 1>, scalar_prefetch = 0 : i64, scratch_operands = 0 : i64, tpu.core_type = #tpu.core_type<tc>, window_params = [{transform_indices = @transform_0, window_bounds = array<i64: 128, 4>}, {pipeline_mode = #tpu.pipeline_mode<synchronous>, transform_indices = @transform_1, window_bounds = array<i64: 4, 16>}, {pipeline_mode = #tpu.pipeline_mode<synchronous>, transform_indices = @transform_2, window_bounds = array<i64: 1, 16>}, {pipeline_mode = #tpu.pipeline_mode<synchronous>, transform_indices = @transform_3, window_bounds = array<i64: 1, 16>}, {transform_indices = @transform_4, window_bounds = array<i64: 128, 16>}, {transform_indices = @transform_5, window_bounds = array<i64: 128, 16>}]} {
    %c0 = arith.constant 0 : index
    %c0_0 = arith.constant 0 : index
    %0 = vector.load %arg1[%c0, %c0_0] : memref<128x4xbf16, #tpu.memory_space<vmem>>, vector<128x4xbf16>
    %c0_1 = arith.constant 0 : index
    %c0_2 = arith.constant 0 : index
    %1 = vector.load %arg2[%c0_1, %c0_2] : memref<4x16xbf16, #tpu.memory_space<vmem>>, vector<4x16xbf16>
    %cst = arith.constant dense<0.000000e+00> : vector<128x16xf32>
    %2 = tpu.matmul %0, %1, %cst {dimension_numbers = #tpu.dot_dimension_numbers<[1], [0], [0], [1], [0, 0, 1, 1], [], []>} : vector<128x4xbf16>, vector<4x16xbf16>, vector<128x16xf32> -> vector<128x16xf32>
    %c0_3 = arith.constant 0 : index
    %c0_4 = arith.constant 0 : index
    %3 = vector.load %arg3[%c0_3, %c0_4] : memref<1x16xf32, #tpu.memory_space<vmem>>, vector<1x16xf32>
    %4 = vector.broadcast %3 : vector<1x16xf32> to vector<128x16xf32>
    %5 = arith.mulf %2, %4 : vector<128x16xf32>
    %c0_5 = arith.constant 0 : index
    %c0_6 = arith.constant 0 : index
    %6 = vector.load %arg4[%c0_5, %c0_6] : memref<1x16xf32, #tpu.memory_space<vmem>>, vector<1x16xf32>
    %7 = vector.broadcast %6 : vector<1x16xf32> to vector<128x16xf32>
    %8 = arith.addf %5, %7 : vector<128x16xf32>
    %c0_7 = arith.constant 0 : index
    %c0_8 = arith.constant 0 : index
    %9 = vector.load %arg5[%c0_7, %c0_8] : memref<128x16xbf16, #tpu.memory_space<vmem>>, vector<128x16xbf16>
    %10 = arith.extf %9 : vector<128x16xbf16> to vector<128x16xf32>
    %11 = arith.addf %8, %10 : vector<128x16xf32>
    %cst_9 = arith.constant 0.000000e+00 : f32
    %12 = vector.broadcast %cst_9 : f32 to vector<128x16xf32>
    %13 = arith.maximumf %11, %12 : vector<128x16xf32>
    %14 = arith.truncf %13 : vector<128x16xf32> to vector<128x16xbf16>
    %c0_10 = arith.constant 0 : index
    %c0_11 = arith.constant 0 : index
    %15 = vector.load %arg6[%c0_10, %c0_11] : memref<128x16xbf16, #tpu.memory_space<vmem>>, vector<128x16xbf16>
    tpu.vector_store %arg6[%c0_10, %c0_11], %14 {strides = array<i32>} : memref<128x16xbf16, #tpu.memory_space<vmem>>, vector<128x16xbf16>,
    return
  }
  func.func @transform_0(%arg0: i32) -> (i32, i32) {
    %c0_i32 = arith.constant 0 : i32
    %c0_i32_0 = arith.constant 0 : i32
    return %arg0, %c0_i32 : i32, i32
  }
  func.func @transform_1(%arg0: i32) -> (i32, i32) {
    %c0_i32 = arith.constant 0 : i32
    %c0_i32_0 = arith.constant 0 : i32
    %c0_i32_1 = arith.constant 0 : i32
    return %c0_i32, %c0_i32_0 : i32, i32
  }
  func.func @transform_2(%arg0: i32) -> (i32, i32) {
    %c0_i32 = arith.constant 0 : i32
    %c0_i32_0 = arith.constant 0 : i32
    %c0_i32_1 = arith.constant 0 : i32
    return %c0_i32, %c0_i32_0 : i32, i32
  }
  func.func @transform_3(%arg0: i32) -> (i32, i32) {
    %c0_i32 = arith.constant 0 : i32
    %c0_i32_0 = arith.constant 0 : i32
    %c0_i32_1 = arith.constant 0 : i32
    return %c0_i32, %c0_i32_0 : i32, i32
  }
  func.func @transform_4(%arg0: i32) -> (i32, i32) {
    %c0_i32 = arith.constant 0 : i32
    %c0_i32_0 = arith.constant 0 : i32
    return %arg0, %c0_i32 : i32, i32
  }
  func.func @transform_5(%arg0: i32) -> (i32, i32) {
    %c0_i32 = arith.constant 0 : i32
    %c0_i32_0 = arith.constant 0 : i32
    return %arg0, %c0_i32 : i32, i32
  }
}

module attributes {stable_mosaic.version = 11 : i64} {
  func.func @_mm_epilogue_kernel(%arg0: i32, %arg1: memref<128x16xbf16, #tpu.memory_space<vmem>>, %arg2: memref<16x8xbf16, #tpu.memory_space<vmem>>, %arg3: memref<1x8xf32, #tpu.memory_space<vmem>>, %arg4: memref<1x8xf32, #tpu.memory_space<vmem>>, %arg5: memref<128x8xbf16, #tpu.memory_space<vmem>>) attributes {dimension_semantics = [#tpu.dimension_semantics<parallel>], iteration_bounds = array<i64: 1>, scalar_prefetch = 0 : i64, scratch_operands = 0 : i64, tpu.core_type = #tpu.core_type<tc>, window_params = [{transform_indices = @transform_0, window_bounds = array<i64: 128, 16>}, {pipeline_mode = #tpu.pipeline_mode<synchronous>, transform_indices = @transform_1, window_bounds = array<i64: 16, 8>}, {pipeline_mode = #tpu.pipeline_mode<synchronous>, transform_indices = @transform_2, window_bounds = array<i64: 1, 8>}, {pipeline_mode = #tpu.pipeline_mode<synchronous>, transform_indices = @transform_3, window_bounds = array<i64: 1, 8>}, {transform_indices = @transform_4, window_bounds = array<i64: 128, 8>}]} {
    %c0 = arith.constant 0 : index
    %c0_0 = arith.constant 0 : index
    %0 = vector.load %arg1[%c0, %c0_0] : memref<128x16xbf16, #tpu.memory_space<vmem>>, vector<128x16xbf16>
    %c0_1 = arith.constant 0 : index
    %c0_2 = arith.constant 0 : index
    %1 = vector.load %arg2[%c0_1, %c0_2] : memref<16x8xbf16, #tpu.memory_space<vmem>>, vector<16x8xbf16>
    %cst = arith.constant dense<0.000000e+00> : vector<128x8xf32>
    %2 = tpu.matmul %0, %1, %cst {dimension_numbers = #tpu.dot_dimension_numbers<[1], [0], [0], [1], [0, 0, 1, 1], [], []>} : vector<128x16xbf16>, vector<16x8xbf16>, vector<128x8xf32> -> vector<128x8xf32>
    %c0_3 = arith.constant 0 : index
    %c0_4 = arith.constant 0 : index
    %3 = vector.load %arg3[%c0_3, %c0_4] : memref<1x8xf32, #tpu.memory_space<vmem>>, vector<1x8xf32>
    %4 = vector.broadcast %3 : vector<1x8xf32> to vector<128x8xf32>
    %5 = arith.mulf %2, %4 : vector<128x8xf32>
    %c0_5 = arith.constant 0 : index
    %c0_6 = arith.constant 0 : index
    %6 = vector.load %arg4[%c0_5, %c0_6] : memref<1x8xf32, #tpu.memory_space<vmem>>, vector<1x8xf32>
    %7 = vector.broadcast %6 : vector<1x8xf32> to vector<128x8xf32>
    %8 = arith.addf %5, %7 : vector<128x8xf32>
    %cst_7 = arith.constant 0.000000e+00 : f32
    %9 = vector.broadcast %cst_7 : f32 to vector<128x8xf32>
    %10 = arith.maximumf %8, %9 : vector<128x8xf32>
    %11 = arith.truncf %10 : vector<128x8xf32> to vector<128x8xbf16>
    %c0_8 = arith.constant 0 : index
    %c0_9 = arith.constant 0 : index
    %12 = vector.load %arg5[%c0_8, %c0_9] : memref<128x8xbf16, #tpu.memory_space<vmem>>, vector<128x8xbf16>
    tpu.vector_store %arg5[%c0_8, %c0_9], %11 {strides = array<i32>} : memref<128x8xbf16, #tpu.memory_space<vmem>>, vector<128x8xbf16>,
    return
  }
  func.func @transform_0(%arg0: i32) -> (i32, i32) {
    %c0_i32 = arith.constant 0 : i32
    %c0_i32_0 = arith.constant 0 : i32
    return %arg0, %c0_i32 : i32, i32
  }
  func.func @transform_1(%arg0: i32) -> (i32, i32) {
    %c0_i32 = arith.constant 0 : i32
    %c0_i32_0 = arith.constant 0 : i32
    %c0_i32_1 = arith.constant 0 : i32
    return %c0_i32, %c0_i32_0 : i32, i32
  }
  func.func @transform_2(%arg0: i32) -> (i32, i32) {
    %c0_i32 = arith.constant 0 : i32
    %c0_i32_0 = arith.constant 0 : i32
    %c0_i32_1 = arith.constant 0 : i32
    return %c0_i32, %c0_i32_0 : i32, i32
  }
  func.func @transform_3(%arg0: i32) -> (i32, i32) {
    %c0_i32 = arith.constant 0 : i32
    %c0_i32_0 = arith.constant 0 : i32
    %c0_i32_1 = arith.constant 0 : i32
    return %c0_i32, %c0_i32_0 : i32, i32
  }
  func.func @transform_4(%arg0: i32) -> (i32, i32) {
    %c0_i32 = arith.constant 0 : i32
    %c0_i32_0 = arith.constant 0 : i32
    return %arg0, %c0_i32 : i32, i32
  }
}

module attributes {stable_mosaic.version = 11 : i64} {
  func.func @_mm_epilogue_kernel(%arg0: i32, %arg1: memref<32x72xbf16, #tpu.memory_space<vmem>>, %arg2: memref<72x8xbf16, #tpu.memory_space<vmem>>, %arg3: memref<1x8xf32, #tpu.memory_space<vmem>>, %arg4: memref<1x8xf32, #tpu.memory_space<vmem>>, %arg5: memref<32x8xbf16, #tpu.memory_space<vmem>>) attributes {dimension_semantics = [#tpu.dimension_semantics<parallel>], iteration_bounds = array<i64: 1>, scalar_prefetch = 0 : i64, scratch_operands = 0 : i64, tpu.core_type = #tpu.core_type<tc>, window_params = [{transform_indices = @transform_0, window_bounds = array<i64: 32, 72>}, {pipeline_mode = #tpu.pipeline_mode<synchronous>, transform_indices = @transform_1, window_bounds = array<i64: 72, 8>}, {pipeline_mode = #tpu.pipeline_mode<synchronous>, transform_indices = @transform_2, window_bounds = array<i64: 1, 8>}, {pipeline_mode = #tpu.pipeline_mode<synchronous>, transform_indices = @transform_3, window_bounds = array<i64: 1, 8>}, {transform_indices = @transform_4, window_bounds = array<i64: 32, 8>}]} {
    %c0 = arith.constant 0 : index
    %c0_0 = arith.constant 0 : index
    %0 = vector.load %arg1[%c0, %c0_0] : memref<32x72xbf16, #tpu.memory_space<vmem>>, vector<32x72xbf16>
    %c0_1 = arith.constant 0 : index
    %c0_2 = arith.constant 0 : index
    %1 = vector.load %arg2[%c0_1, %c0_2] : memref<72x8xbf16, #tpu.memory_space<vmem>>, vector<72x8xbf16>
    %cst = arith.constant dense<0.000000e+00> : vector<32x8xf32>
    %2 = tpu.matmul %0, %1, %cst {dimension_numbers = #tpu.dot_dimension_numbers<[1], [0], [0], [1], [0, 0, 1, 1], [], []>} : vector<32x72xbf16>, vector<72x8xbf16>, vector<32x8xf32> -> vector<32x8xf32>
    %c0_3 = arith.constant 0 : index
    %c0_4 = arith.constant 0 : index
    %3 = vector.load %arg3[%c0_3, %c0_4] : memref<1x8xf32, #tpu.memory_space<vmem>>, vector<1x8xf32>
    %4 = vector.broadcast %3 : vector<1x8xf32> to vector<32x8xf32>
    %5 = arith.mulf %2, %4 : vector<32x8xf32>
    %c0_5 = arith.constant 0 : index
    %c0_6 = arith.constant 0 : index
    %6 = vector.load %arg4[%c0_5, %c0_6] : memref<1x8xf32, #tpu.memory_space<vmem>>, vector<1x8xf32>
    %7 = vector.broadcast %6 : vector<1x8xf32> to vector<32x8xf32>
    %8 = arith.addf %5, %7 : vector<32x8xf32>
    %cst_7 = arith.constant 0.000000e+00 : f32
    %9 = vector.broadcast %cst_7 : f32 to vector<32x8xf32>
    %10 = arith.maximumf %8, %9 : vector<32x8xf32>
    %11 = arith.truncf %10 : vector<32x8xf32> to vector<32x8xbf16>
    %c0_8 = arith.constant 0 : index
    %c0_9 = arith.constant 0 : index
    %12 = vector.load %arg5[%c0_8, %c0_9] : memref<32x8xbf16, #tpu.memory_space<vmem>>, vector<32x8xbf16>
    tpu.vector_store %arg5[%c0_8, %c0_9], %11 {strides = array<i32>} : memref<32x8xbf16, #tpu.memory_space<vmem>>, vector<32x8xbf16>,
    return
  }
  func.func @transform_0(%arg0: i32) -> (i32, i32) {
    %c0_i32 = arith.constant 0 : i32
    %c0_i32_0 = arith.constant 0 : i32
    return %arg0, %c0_i32 : i32, i32
  }
  func.func @transform_1(%arg0: i32) -> (i32, i32) {
    %c0_i32 = arith.constant 0 : i32
    %c0_i32_0 = arith.constant 0 : i32
    %c0_i32_1 = arith.constant 0 : i32
    return %c0_i32, %c0_i32_0 : i32, i32
  }
  func.func @transform_2(%arg0: i32) -> (i32, i32) {
    %c0_i32 = arith.constant 0 : i32
    %c0_i32_0 = arith.constant 0 : i32
    %c0_i32_1 = arith.constant 0 : i32
    return %c0_i32, %c0_i32_0 : i32, i32
  }
  func.func @transform_3(%arg0: i32) -> (i32, i32) {
    %c0_i32 = arith.constant 0 : i32
    %c0_i32_0 = arith.constant 0 : i32
    %c0_i32_1 = arith.constant 0 : i32
    return %c0_i32, %c0_i32_0 : i32, i32
  }
  func.func @transform_4(%arg0: i32) -> (i32, i32) {
    %c0_i32 = arith.constant 0 : i32
    %c0_i32_0 = arith.constant 0 : i32
    return %arg0, %c0_i32 : i32, i32
  }
}

module attributes {stable_mosaic.version = 11 : i64} {
  func.func @_mm_epilogue_kernel(%arg0: i32, %arg1: memref<32x16xbf16, #tpu.memory_space<vmem>>, %arg2: memref<16x32xbf16, #tpu.memory_space<vmem>>, %arg3: memref<1x32xf32, #tpu.memory_space<vmem>>, %arg4: memref<1x32xf32, #tpu.memory_space<vmem>>, %arg5: memref<32x32xbf16, #tpu.memory_space<vmem>>) attributes {dimension_semantics = [#tpu.dimension_semantics<parallel>], iteration_bounds = array<i64: 1>, scalar_prefetch = 0 : i64, scratch_operands = 0 : i64, tpu.core_type = #tpu.core_type<tc>, window_params = [{transform_indices = @transform_0, window_bounds = array<i64: 32, 16>}, {pipeline_mode = #tpu.pipeline_mode<synchronous>, transform_indices = @transform_1, window_bounds = array<i64: 16, 32>}, {pipeline_mode = #tpu.pipeline_mode<synchronous>, transform_indices = @transform_2, window_bounds = array<i64: 1, 32>}, {pipeline_mode = #tpu.pipeline_mode<synchronous>, transform_indices = @transform_3, window_bounds = array<i64: 1, 32>}, {transform_indices = @transform_4, window_bounds = array<i64: 32, 32>}]} {
    %c0 = arith.constant 0 : index
    %c0_0 = arith.constant 0 : index
    %0 = vector.load %arg1[%c0, %c0_0] : memref<32x16xbf16, #tpu.memory_space<vmem>>, vector<32x16xbf16>
    %c0_1 = arith.constant 0 : index
    %c0_2 = arith.constant 0 : index
    %1 = vector.load %arg2[%c0_1, %c0_2] : memref<16x32xbf16, #tpu.memory_space<vmem>>, vector<16x32xbf16>
    %cst = arith.constant dense<0.000000e+00> : vector<32x32xf32>
    %2 = tpu.matmul %0, %1, %cst {dimension_numbers = #tpu.dot_dimension_numbers<[1], [0], [0], [1], [0, 0, 1, 1], [], []>} : vector<32x16xbf16>, vector<16x32xbf16>, vector<32x32xf32> -> vector<32x32xf32>
    %c0_3 = arith.constant 0 : index
    %c0_4 = arith.constant 0 : index
    %3 = vector.load %arg3[%c0_3, %c0_4] : memref<1x32xf32, #tpu.memory_space<vmem>>, vector<1x32xf32>
    %4 = vector.broadcast %3 : vector<1x32xf32> to vector<32x32xf32>
    %5 = arith.mulf %2, %4 : vector<32x32xf32>
    %c0_5 = arith.constant 0 : index
    %c0_6 = arith.constant 0 : index
    %6 = vector.load %arg4[%c0_5, %c0_6] : memref<1x32xf32, #tpu.memory_space<vmem>>, vector<1x32xf32>
    %7 = vector.broadcast %6 : vector<1x32xf32> to vector<32x32xf32>
    %8 = arith.addf %5, %7 : vector<32x32xf32>
    %9 = arith.truncf %8 : vector<32x32xf32> to vector<32x32xbf16>
    %c0_7 = arith.constant 0 : index
    %c0_8 = arith.constant 0 : index
    %10 = vector.load %arg5[%c0_7, %c0_8] : memref<32x32xbf16, #tpu.memory_space<vmem>>, vector<32x32xbf16>
    tpu.vector_store %arg5[%c0_7, %c0_8], %9 {strides = array<i32>} : memref<32x32xbf16, #tpu.memory_space<vmem>>, vector<32x32xbf16>,
    return
  }
  func.func @transform_0(%arg0: i32) -> (i32, i32) {
    %c0_i32 = arith.constant 0 : i32
    %c0_i32_0 = arith.constant 0 : i32
    return %arg0, %c0_i32 : i32, i32
  }
  func.func @transform_1(%arg0: i32) -> (i32, i32) {
    %c0_i32 = arith.constant 0 : i32
    %c0_i32_0 = arith.constant 0 : i32
    %c0_i32_1 = arith.constant 0 : i32
    return %c0_i32, %c0_i32_0 : i32, i32
  }
  func.func @transform_2(%arg0: i32) -> (i32, i32) {
    %c0_i32 = arith.constant 0 : i32
    %c0_i32_0 = arith.constant 0 : i32
    %c0_i32_1 = arith.constant 0 : i32
    return %c0_i32, %c0_i32_0 : i32, i32
  }
  func.func @transform_3(%arg0: i32) -> (i32, i32) {
    %c0_i32 = arith.constant 0 : i32
    %c0_i32_0 = arith.constant 0 : i32
    %c0_i32_1 = arith.constant 0 : i32
    return %c0_i32, %c0_i32_0 : i32, i32
  }
  func.func @transform_4(%arg0: i32) -> (i32, i32) {
    %c0_i32 = arith.constant 0 : i32
    %c0_i32_0 = arith.constant 0 : i32
    return %arg0, %c0_i32 : i32, i32
  }
}

module attributes {stable_mosaic.version = 11 : i64} {
  func.func @_mm_epilogue_kernel(%arg0: i32, %arg1: memref<32x8xbf16, #tpu.memory_space<vmem>>, %arg2: memref<8x32xbf16, #tpu.memory_space<vmem>>, %arg3: memref<1x32xf32, #tpu.memory_space<vmem>>, %arg4: memref<1x32xf32, #tpu.memory_space<vmem>>, %arg5: memref<32x32xbf16, #tpu.memory_space<vmem>>, %arg6: memref<32x32xbf16, #tpu.memory_space<vmem>>) attributes {dimension_semantics = [#tpu.dimension_semantics<parallel>], iteration_bounds = array<i64: 1>, scalar_prefetch = 0 : i64, scratch_operands = 0 : i64, tpu.core_type = #tpu.core_type<tc>, window_params = [{transform_indices = @transform_0, window_bounds = array<i64: 32, 8>}, {pipeline_mode = #tpu.pipeline_mode<synchronous>, transform_indices = @transform_1, window_bounds = array<i64: 8, 32>}, {pipeline_mode = #tpu.pipeline_mode<synchronous>, transform_indices = @transform_2, window_bounds = array<i64: 1, 32>}, {pipeline_mode = #tpu.pipeline_mode<synchronous>, transform_indices = @transform_3, window_bounds = array<i64: 1, 32>}, {transform_indices = @transform_4, window_bounds = array<i64: 32, 32>}, {transform_indices = @transform_5, window_bounds = array<i64: 32, 32>}]} {
    %c0 = arith.constant 0 : index
    %c0_0 = arith.constant 0 : index
    %0 = vector.load %arg1[%c0, %c0_0] : memref<32x8xbf16, #tpu.memory_space<vmem>>, vector<32x8xbf16>
    %c0_1 = arith.constant 0 : index
    %c0_2 = arith.constant 0 : index
    %1 = vector.load %arg2[%c0_1, %c0_2] : memref<8x32xbf16, #tpu.memory_space<vmem>>, vector<8x32xbf16>
    %cst = arith.constant dense<0.000000e+00> : vector<32x32xf32>
    %2 = tpu.matmul %0, %1, %cst {dimension_numbers = #tpu.dot_dimension_numbers<[1], [0], [0], [1], [0, 0, 1, 1], [], []>} : vector<32x8xbf16>, vector<8x32xbf16>, vector<32x32xf32> -> vector<32x32xf32>
    %c0_3 = arith.constant 0 : index
    %c0_4 = arith.constant 0 : index
    %3 = vector.load %arg3[%c0_3, %c0_4] : memref<1x32xf32, #tpu.memory_space<vmem>>, vector<1x32xf32>
    %4 = vector.broadcast %3 : vector<1x32xf32> to vector<32x32xf32>
    %5 = arith.mulf %2, %4 : vector<32x32xf32>
    %c0_5 = arith.constant 0 : index
    %c0_6 = arith.constant 0 : index
    %6 = vector.load %arg4[%c0_5, %c0_6] : memref<1x32xf32, #tpu.memory_space<vmem>>, vector<1x32xf32>
    %7 = vector.broadcast %6 : vector<1x32xf32> to vector<32x32xf32>
    %8 = arith.addf %5, %7 : vector<32x32xf32>
    %c0_7 = arith.constant 0 : index
    %c0_8 = arith.constant 0 : index
    %9 = vector.load %arg5[%c0_7, %c0_8] : memref<32x32xbf16, #tpu.memory_space<vmem>>, vector<32x32xbf16>
    %10 = arith.extf %9 : vector<32x32xbf16> to vector<32x32xf32>
    %11 = arith.addf %8, %10 : vector<32x32xf32>
    %cst_9 = arith.constant 0.000000e+00 : f32
    %12 = vector.broadcast %cst_9 : f32 to vector<32x32xf32>
    %13 = arith.maximumf %11, %12 : vector<32x32xf32>
    %14 = arith.truncf %13 : vector<32x32xf32> to vector<32x32xbf16>
    %c0_10 = arith.constant 0 : index
    %c0_11 = arith.constant 0 : index
    %15 = vector.load %arg6[%c0_10, %c0_11] : memref<32x32xbf16, #tpu.memory_space<vmem>>, vector<32x32xbf16>
    tpu.vector_store %arg6[%c0_10, %c0_11], %14 {strides = array<i32>} : memref<32x32xbf16, #tpu.memory_space<vmem>>, vector<32x32xbf16>,
    return
  }
  func.func @transform_0(%arg0: i32) -> (i32, i32) {
    %c0_i32 = arith.constant 0 : i32
    %c0_i32_0 = arith.constant 0 : i32
    return %arg0, %c0_i32 : i32, i32
  }
  func.func @transform_1(%arg0: i32) -> (i32, i32) {
    %c0_i32 = arith.constant 0 : i32
    %c0_i32_0 = arith.constant 0 : i32
    %c0_i32_1 = arith.constant 0 : i32
    return %c0_i32, %c0_i32_0 : i32, i32
  }
  func.func @transform_2(%arg0: i32) -> (i32, i32) {
    %c0_i32 = arith.constant 0 : i32
    %c0_i32_0 = arith.constant 0 : i32
    %c0_i32_1 = arith.constant 0 : i32
    return %c0_i32, %c0_i32_0 : i32, i32
  }
  func.func @transform_3(%arg0: i32) -> (i32, i32) {
    %c0_i32 = arith.constant 0 : i32
    %c0_i32_0 = arith.constant 0 : i32
    %c0_i32_1 = arith.constant 0 : i32
    return %c0_i32, %c0_i32_0 : i32, i32
  }
  func.func @transform_4(%arg0: i32) -> (i32, i32) {
    %c0_i32 = arith.constant 0 : i32
    %c0_i32_0 = arith.constant 0 : i32
    return %arg0, %c0_i32 : i32, i32
  }
  func.func @transform_5(%arg0: i32) -> (i32, i32) {
    %c0_i32 = arith.constant 0 : i32
    %c0_i32_0 = arith.constant 0 : i32
    return %arg0, %c0_i32 : i32, i32
  }
}

module attributes {stable_mosaic.version = 11 : i64} {
  func.func @_mm_epilogue_kernel(%arg0: i32, %arg1: memref<32x32xbf16, #tpu.memory_space<vmem>>, %arg2: memref<32x16xbf16, #tpu.memory_space<vmem>>, %arg3: memref<1x16xf32, #tpu.memory_space<vmem>>, %arg4: memref<1x16xf32, #tpu.memory_space<vmem>>, %arg5: memref<32x16xbf16, #tpu.memory_space<vmem>>) attributes {dimension_semantics = [#tpu.dimension_semantics<parallel>], iteration_bounds = array<i64: 1>, scalar_prefetch = 0 : i64, scratch_operands = 0 : i64, tpu.core_type = #tpu.core_type<tc>, window_params = [{transform_indices = @transform_0, window_bounds = array<i64: 32, 32>}, {pipeline_mode = #tpu.pipeline_mode<synchronous>, transform_indices = @transform_1, window_bounds = array<i64: 32, 16>}, {pipeline_mode = #tpu.pipeline_mode<synchronous>, transform_indices = @transform_2, window_bounds = array<i64: 1, 16>}, {pipeline_mode = #tpu.pipeline_mode<synchronous>, transform_indices = @transform_3, window_bounds = array<i64: 1, 16>}, {transform_indices = @transform_4, window_bounds = array<i64: 32, 16>}]} {
    %c0 = arith.constant 0 : index
    %c0_0 = arith.constant 0 : index
    %0 = vector.load %arg1[%c0, %c0_0] : memref<32x32xbf16, #tpu.memory_space<vmem>>, vector<32x32xbf16>
    %c0_1 = arith.constant 0 : index
    %c0_2 = arith.constant 0 : index
    %1 = vector.load %arg2[%c0_1, %c0_2] : memref<32x16xbf16, #tpu.memory_space<vmem>>, vector<32x16xbf16>
    %cst = arith.constant dense<0.000000e+00> : vector<32x16xf32>
    %2 = tpu.matmul %0, %1, %cst {dimension_numbers = #tpu.dot_dimension_numbers<[1], [0], [0], [1], [0, 0, 1, 1], [], []>} : vector<32x32xbf16>, vector<32x16xbf16>, vector<32x16xf32> -> vector<32x16xf32>
    %c0_3 = arith.constant 0 : index
    %c0_4 = arith.constant 0 : index
    %3 = vector.load %arg3[%c0_3, %c0_4] : memref<1x16xf32, #tpu.memory_space<vmem>>, vector<1x16xf32>
    %4 = vector.broadcast %3 : vector<1x16xf32> to vector<32x16xf32>
    %5 = arith.mulf %2, %4 : vector<32x16xf32>
    %c0_5 = arith.constant 0 : index
    %c0_6 = arith.constant 0 : index
    %6 = vector.load %arg4[%c0_5, %c0_6] : memref<1x16xf32, #tpu.memory_space<vmem>>, vector<1x16xf32>
    %7 = vector.broadcast %6 : vector<1x16xf32> to vector<32x16xf32>
    %8 = arith.addf %5, %7 : vector<32x16xf32>
    %cst_7 = arith.constant 0.000000e+00 : f32
    %9 = vector.broadcast %cst_7 : f32 to vector<32x16xf32>
    %10 = arith.maximumf %8, %9 : vector<32x16xf32>
    %11 = arith.truncf %10 : vector<32x16xf32> to vector<32x16xbf16>
    %c0_8 = arith.constant 0 : index
    %c0_9 = arith.constant 0 : index
    %12 = vector.load %arg5[%c0_8, %c0_9] : memref<32x16xbf16, #tpu.memory_space<vmem>>, vector<32x16xbf16>
    tpu.vector_store %arg5[%c0_8, %c0_9], %11 {strides = array<i32>} : memref<32x16xbf16, #tpu.memory_space<vmem>>, vector<32x16xbf16>,
    return
  }
  func.func @transform_0(%arg0: i32) -> (i32, i32) {
    %c0_i32 = arith.constant 0 : i32
    %c0_i32_0 = arith.constant 0 : i32
    return %arg0, %c0_i32 : i32, i32
  }
  func.func @transform_1(%arg0: i32) -> (i32, i32) {
    %c0_i32 = arith.constant 0 : i32
    %c0_i32_0 = arith.constant 0 : i32
    %c0_i32_1 = arith.constant 0 : i32
    return %c0_i32, %c0_i32_0 : i32, i32
  }
  func.func @transform_2(%arg0: i32) -> (i32, i32) {
    %c0_i32 = arith.constant 0 : i32
    %c0_i32_0 = arith.constant 0 : i32
    %c0_i32_1 = arith.constant 0 : i32
    return %c0_i32, %c0_i32_0 : i32, i32
  }
  func.func @transform_3(%arg0: i32) -> (i32, i32) {
    %c0_i32 = arith.constant 0 : i32
    %c0_i32_0 = arith.constant 0 : i32
    %c0_i32_1 = arith.constant 0 : i32
    return %c0_i32, %c0_i32_0 : i32, i32
  }
  func.func @transform_4(%arg0: i32) -> (i32, i32) {
    %c0_i32 = arith.constant 0 : i32
    %c0_i32_0 = arith.constant 0 : i32
    return %arg0, %c0_i32 : i32, i32
  }
}

module attributes {stable_mosaic.version = 11 : i64} {
  func.func @_mm_epilogue_kernel(%arg0: i32, %arg1: memref<16x144xbf16, #tpu.memory_space<vmem>>, %arg2: memref<144x16xbf16, #tpu.memory_space<vmem>>, %arg3: memref<1x16xf32, #tpu.memory_space<vmem>>, %arg4: memref<1x16xf32, #tpu.memory_space<vmem>>, %arg5: memref<16x16xbf16, #tpu.memory_space<vmem>>) attributes {dimension_semantics = [#tpu.dimension_semantics<parallel>], iteration_bounds = array<i64: 1>, scalar_prefetch = 0 : i64, scratch_operands = 0 : i64, tpu.core_type = #tpu.core_type<tc>, window_params = [{transform_indices = @transform_0, window_bounds = array<i64: 16, 144>}, {pipeline_mode = #tpu.pipeline_mode<synchronous>, transform_indices = @transform_1, window_bounds = array<i64: 144, 16>}, {pipeline_mode = #tpu.pipeline_mode<synchronous>, transform_indices = @transform_2, window_bounds = array<i64: 1, 16>}, {pipeline_mode = #tpu.pipeline_mode<synchronous>, transform_indices = @transform_3, window_bounds = array<i64: 1, 16>}, {transform_indices = @transform_4, window_bounds = array<i64: 16, 16>}]} {
    %c0 = arith.constant 0 : index
    %c0_0 = arith.constant 0 : index
    %0 = vector.load %arg1[%c0, %c0_0] : memref<16x144xbf16, #tpu.memory_space<vmem>>, vector<16x144xbf16>
    %c0_1 = arith.constant 0 : index
    %c0_2 = arith.constant 0 : index
    %1 = vector.load %arg2[%c0_1, %c0_2] : memref<144x16xbf16, #tpu.memory_space<vmem>>, vector<144x16xbf16>
    %cst = arith.constant dense<0.000000e+00> : vector<16x16xf32>
    %2 = tpu.matmul %0, %1, %cst {dimension_numbers = #tpu.dot_dimension_numbers<[1], [0], [0], [1], [0, 0, 1, 1], [], []>} : vector<16x144xbf16>, vector<144x16xbf16>, vector<16x16xf32> -> vector<16x16xf32>
    %c0_3 = arith.constant 0 : index
    %c0_4 = arith.constant 0 : index
    %3 = vector.load %arg3[%c0_3, %c0_4] : memref<1x16xf32, #tpu.memory_space<vmem>>, vector<1x16xf32>
    %4 = vector.broadcast %3 : vector<1x16xf32> to vector<16x16xf32>
    %5 = arith.mulf %2, %4 : vector<16x16xf32>
    %c0_5 = arith.constant 0 : index
    %c0_6 = arith.constant 0 : index
    %6 = vector.load %arg4[%c0_5, %c0_6] : memref<1x16xf32, #tpu.memory_space<vmem>>, vector<1x16xf32>
    %7 = vector.broadcast %6 : vector<1x16xf32> to vector<16x16xf32>
    %8 = arith.addf %5, %7 : vector<16x16xf32>
    %cst_7 = arith.constant 0.000000e+00 : f32
    %9 = vector.broadcast %cst_7 : f32 to vector<16x16xf32>
    %10 = arith.maximumf %8, %9 : vector<16x16xf32>
    %11 = arith.truncf %10 : vector<16x16xf32> to vector<16x16xbf16>
    %c0_8 = arith.constant 0 : index
    %c0_9 = arith.constant 0 : index
    %12 = vector.load %arg5[%c0_8, %c0_9] : memref<16x16xbf16, #tpu.memory_space<vmem>>, vector<16x16xbf16>
    tpu.vector_store %arg5[%c0_8, %c0_9], %11 {strides = array<i32>} : memref<16x16xbf16, #tpu.memory_space<vmem>>, vector<16x16xbf16>,
    return
  }
  func.func @transform_0(%arg0: i32) -> (i32, i32) {
    %c0_i32 = arith.constant 0 : i32
    %c0_i32_0 = arith.constant 0 : i32
    return %arg0, %c0_i32 : i32, i32
  }
  func.func @transform_1(%arg0: i32) -> (i32, i32) {
    %c0_i32 = arith.constant 0 : i32
    %c0_i32_0 = arith.constant 0 : i32
    %c0_i32_1 = arith.constant 0 : i32
    return %c0_i32, %c0_i32_0 : i32, i32
  }
  func.func @transform_2(%arg0: i32) -> (i32, i32) {
    %c0_i32 = arith.constant 0 : i32
    %c0_i32_0 = arith.constant 0 : i32
    %c0_i32_1 = arith.constant 0 : i32
    return %c0_i32, %c0_i32_0 : i32, i32
  }
  func.func @transform_3(%arg0: i32) -> (i32, i32) {
    %c0_i32 = arith.constant 0 : i32
    %c0_i32_0 = arith.constant 0 : i32
    %c0_i32_1 = arith.constant 0 : i32
    return %c0_i32, %c0_i32_0 : i32, i32
  }
  func.func @transform_4(%arg0: i32) -> (i32, i32) {
    %c0_i32 = arith.constant 0 : i32
    %c0_i32_0 = arith.constant 0 : i32
    return %arg0, %c0_i32 : i32, i32
  }
}

module attributes {stable_mosaic.version = 11 : i64} {
  func.func @_mm_epilogue_kernel(%arg0: i32, %arg1: memref<16x32xbf16, #tpu.memory_space<vmem>>, %arg2: memref<32x64xbf16, #tpu.memory_space<vmem>>, %arg3: memref<1x64xf32, #tpu.memory_space<vmem>>, %arg4: memref<1x64xf32, #tpu.memory_space<vmem>>, %arg5: memref<16x64xbf16, #tpu.memory_space<vmem>>) attributes {dimension_semantics = [#tpu.dimension_semantics<parallel>], iteration_bounds = array<i64: 1>, scalar_prefetch = 0 : i64, scratch_operands = 0 : i64, tpu.core_type = #tpu.core_type<tc>, window_params = [{transform_indices = @transform_0, window_bounds = array<i64: 16, 32>}, {pipeline_mode = #tpu.pipeline_mode<synchronous>, transform_indices = @transform_1, window_bounds = array<i64: 32, 64>}, {pipeline_mode = #tpu.pipeline_mode<synchronous>, transform_indices = @transform_2, window_bounds = array<i64: 1, 64>}, {pipeline_mode = #tpu.pipeline_mode<synchronous>, transform_indices = @transform_3, window_bounds = array<i64: 1, 64>}, {transform_indices = @transform_4, window_bounds = array<i64: 16, 64>}]} {
    %c0 = arith.constant 0 : index
    %c0_0 = arith.constant 0 : index
    %0 = vector.load %arg1[%c0, %c0_0] : memref<16x32xbf16, #tpu.memory_space<vmem>>, vector<16x32xbf16>
    %c0_1 = arith.constant 0 : index
    %c0_2 = arith.constant 0 : index
    %1 = vector.load %arg2[%c0_1, %c0_2] : memref<32x64xbf16, #tpu.memory_space<vmem>>, vector<32x64xbf16>
    %cst = arith.constant dense<0.000000e+00> : vector<16x64xf32>
    %2 = tpu.matmul %0, %1, %cst {dimension_numbers = #tpu.dot_dimension_numbers<[1], [0], [0], [1], [0, 0, 1, 1], [], []>} : vector<16x32xbf16>, vector<32x64xbf16>, vector<16x64xf32> -> vector<16x64xf32>
    %c0_3 = arith.constant 0 : index
    %c0_4 = arith.constant 0 : index
    %3 = vector.load %arg3[%c0_3, %c0_4] : memref<1x64xf32, #tpu.memory_space<vmem>>, vector<1x64xf32>
    %4 = vector.broadcast %3 : vector<1x64xf32> to vector<16x64xf32>
    %5 = arith.mulf %2, %4 : vector<16x64xf32>
    %c0_5 = arith.constant 0 : index
    %c0_6 = arith.constant 0 : index
    %6 = vector.load %arg4[%c0_5, %c0_6] : memref<1x64xf32, #tpu.memory_space<vmem>>, vector<1x64xf32>
    %7 = vector.broadcast %6 : vector<1x64xf32> to vector<16x64xf32>
    %8 = arith.addf %5, %7 : vector<16x64xf32>
    %9 = arith.truncf %8 : vector<16x64xf32> to vector<16x64xbf16>
    %c0_7 = arith.constant 0 : index
    %c0_8 = arith.constant 0 : index
    %10 = vector.load %arg5[%c0_7, %c0_8] : memref<16x64xbf16, #tpu.memory_space<vmem>>, vector<16x64xbf16>
    tpu.vector_store %arg5[%c0_7, %c0_8], %9 {strides = array<i32>} : memref<16x64xbf16, #tpu.memory_space<vmem>>, vector<16x64xbf16>,
    return
  }
  func.func @transform_0(%arg0: i32) -> (i32, i32) {
    %c0_i32 = arith.constant 0 : i32
    %c0_i32_0 = arith.constant 0 : i32
    return %arg0, %c0_i32 : i32, i32
  }
  func.func @transform_1(%arg0: i32) -> (i32, i32) {
    %c0_i32 = arith.constant 0 : i32
    %c0_i32_0 = arith.constant 0 : i32
    %c0_i32_1 = arith.constant 0 : i32
    return %c0_i32, %c0_i32_0 : i32, i32
  }
  func.func @transform_2(%arg0: i32) -> (i32, i32) {
    %c0_i32 = arith.constant 0 : i32
    %c0_i32_0 = arith.constant 0 : i32
    %c0_i32_1 = arith.constant 0 : i32
    return %c0_i32, %c0_i32_0 : i32, i32
  }
  func.func @transform_3(%arg0: i32) -> (i32, i32) {
    %c0_i32 = arith.constant 0 : i32
    %c0_i32_0 = arith.constant 0 : i32
    %c0_i32_1 = arith.constant 0 : i32
    return %c0_i32, %c0_i32_0 : i32, i32
  }
  func.func @transform_4(%arg0: i32) -> (i32, i32) {
    %c0_i32 = arith.constant 0 : i32
    %c0_i32_0 = arith.constant 0 : i32
    return %arg0, %c0_i32 : i32, i32
  }
}

module attributes {stable_mosaic.version = 11 : i64} {
  func.func @_mm_epilogue_kernel(%arg0: i32, %arg1: memref<16x16xbf16, #tpu.memory_space<vmem>>, %arg2: memref<16x64xbf16, #tpu.memory_space<vmem>>, %arg3: memref<1x64xf32, #tpu.memory_space<vmem>>, %arg4: memref<1x64xf32, #tpu.memory_space<vmem>>, %arg5: memref<16x64xbf16, #tpu.memory_space<vmem>>, %arg6: memref<16x64xbf16, #tpu.memory_space<vmem>>) attributes {dimension_semantics = [#tpu.dimension_semantics<parallel>], iteration_bounds = array<i64: 1>, scalar_prefetch = 0 : i64, scratch_operands = 0 : i64, tpu.core_type = #tpu.core_type<tc>, window_params = [{transform_indices = @transform_0, window_bounds = array<i64: 16, 16>}, {pipeline_mode = #tpu.pipeline_mode<synchronous>, transform_indices = @transform_1, window_bounds = array<i64: 16, 64>}, {pipeline_mode = #tpu.pipeline_mode<synchronous>, transform_indices = @transform_2, window_bounds = array<i64: 1, 64>}, {pipeline_mode = #tpu.pipeline_mode<synchronous>, transform_indices = @transform_3, window_bounds = array<i64: 1, 64>}, {transform_indices = @transform_4, window_bounds = array<i64: 16, 64>}, {transform_indices = @transform_5, window_bounds = array<i64: 16, 64>}]} {
    %c0 = arith.constant 0 : index
    %c0_0 = arith.constant 0 : index
    %0 = vector.load %arg1[%c0, %c0_0] : memref<16x16xbf16, #tpu.memory_space<vmem>>, vector<16x16xbf16>
    %c0_1 = arith.constant 0 : index
    %c0_2 = arith.constant 0 : index
    %1 = vector.load %arg2[%c0_1, %c0_2] : memref<16x64xbf16, #tpu.memory_space<vmem>>, vector<16x64xbf16>
    %cst = arith.constant dense<0.000000e+00> : vector<16x64xf32>
    %2 = tpu.matmul %0, %1, %cst {dimension_numbers = #tpu.dot_dimension_numbers<[1], [0], [0], [1], [0, 0, 1, 1], [], []>} : vector<16x16xbf16>, vector<16x64xbf16>, vector<16x64xf32> -> vector<16x64xf32>
    %c0_3 = arith.constant 0 : index
    %c0_4 = arith.constant 0 : index
    %3 = vector.load %arg3[%c0_3, %c0_4] : memref<1x64xf32, #tpu.memory_space<vmem>>, vector<1x64xf32>
    %4 = vector.broadcast %3 : vector<1x64xf32> to vector<16x64xf32>
    %5 = arith.mulf %2, %4 : vector<16x64xf32>
    %c0_5 = arith.constant 0 : index
    %c0_6 = arith.constant 0 : index
    %6 = vector.load %arg4[%c0_5, %c0_6] : memref<1x64xf32, #tpu.memory_space<vmem>>, vector<1x64xf32>
    %7 = vector.broadcast %6 : vector<1x64xf32> to vector<16x64xf32>
    %8 = arith.addf %5, %7 : vector<16x64xf32>
    %c0_7 = arith.constant 0 : index
    %c0_8 = arith.constant 0 : index
    %9 = vector.load %arg5[%c0_7, %c0_8] : memref<16x64xbf16, #tpu.memory_space<vmem>>, vector<16x64xbf16>
    %10 = arith.extf %9 : vector<16x64xbf16> to vector<16x64xf32>
    %11 = arith.addf %8, %10 : vector<16x64xf32>
    %cst_9 = arith.constant 0.000000e+00 : f32
    %12 = vector.broadcast %cst_9 : f32 to vector<16x64xf32>
    %13 = arith.maximumf %11, %12 : vector<16x64xf32>
    %14 = arith.truncf %13 : vector<16x64xf32> to vector<16x64xbf16>
    %c0_10 = arith.constant 0 : index
    %c0_11 = arith.constant 0 : index
    %15 = vector.load %arg6[%c0_10, %c0_11] : memref<16x64xbf16, #tpu.memory_space<vmem>>, vector<16x64xbf16>
    tpu.vector_store %arg6[%c0_10, %c0_11], %14 {strides = array<i32>} : memref<16x64xbf16, #tpu.memory_space<vmem>>, vector<16x64xbf16>,
    return
  }
  func.func @transform_0(%arg0: i32) -> (i32, i32) {
    %c0_i32 = arith.constant 0 : i32
    %c0_i32_0 = arith.constant 0 : i32
    return %arg0, %c0_i32 : i32, i32
  }
  func.func @transform_1(%arg0: i32) -> (i32, i32) {
    %c0_i32 = arith.constant 0 : i32
    %c0_i32_0 = arith.constant 0 : i32
    %c0_i32_1 = arith.constant 0 : i32
    return %c0_i32, %c0_i32_0 : i32, i32
  }
  func.func @transform_2(%arg0: i32) -> (i32, i32) {
    %c0_i32 = arith.constant 0 : i32
    %c0_i32_0 = arith.constant 0 : i32
    %c0_i32_1 = arith.constant 0 : i32
    return %c0_i32, %c0_i32_0 : i32, i32
  }
  func.func @transform_3(%arg0: i32) -> (i32, i32) {
    %c0_i32 = arith.constant 0 : i32
    %c0_i32_0 = arith.constant 0 : i32
    %c0_i32_1 = arith.constant 0 : i32
    return %c0_i32, %c0_i32_0 : i32, i32
  }
  func.func @transform_4(%arg0: i32) -> (i32, i32) {
    %c0_i32 = arith.constant 0 : i32
    %c0_i32_0 = arith.constant 0 : i32
    return %arg0, %c0_i32 : i32, i32
  }
  func.func @transform_5(%arg0: i32) -> (i32, i32) {
    %c0_i32 = arith.constant 0 : i32
    %c0_i32_0 = arith.constant 0 : i32
    return %arg0, %c0_i32 : i32, i32
  }
}

module attributes {stable_mosaic.version = 11 : i64} {
  func.func @_mm_epilogue_kernel(%arg0: i32, %arg1: memref<16x64xbf16, #tpu.memory_space<vmem>>, %arg2: memref<64x32xbf16, #tpu.memory_space<vmem>>, %arg3: memref<1x32xf32, #tpu.memory_space<vmem>>, %arg4: memref<1x32xf32, #tpu.memory_space<vmem>>, %arg5: memref<16x32xbf16, #tpu.memory_space<vmem>>) attributes {dimension_semantics = [#tpu.dimension_semantics<parallel>], iteration_bounds = array<i64: 1>, scalar_prefetch = 0 : i64, scratch_operands = 0 : i64, tpu.core_type = #tpu.core_type<tc>, window_params = [{transform_indices = @transform_0, window_bounds = array<i64: 16, 64>}, {pipeline_mode = #tpu.pipeline_mode<synchronous>, transform_indices = @transform_1, window_bounds = array<i64: 64, 32>}, {pipeline_mode = #tpu.pipeline_mode<synchronous>, transform_indices = @transform_2, window_bounds = array<i64: 1, 32>}, {pipeline_mode = #tpu.pipeline_mode<synchronous>, transform_indices = @transform_3, window_bounds = array<i64: 1, 32>}, {transform_indices = @transform_4, window_bounds = array<i64: 16, 32>}]} {
    %c0 = arith.constant 0 : index
    %c0_0 = arith.constant 0 : index
    %0 = vector.load %arg1[%c0, %c0_0] : memref<16x64xbf16, #tpu.memory_space<vmem>>, vector<16x64xbf16>
    %c0_1 = arith.constant 0 : index
    %c0_2 = arith.constant 0 : index
    %1 = vector.load %arg2[%c0_1, %c0_2] : memref<64x32xbf16, #tpu.memory_space<vmem>>, vector<64x32xbf16>
    %cst = arith.constant dense<0.000000e+00> : vector<16x32xf32>
    %2 = tpu.matmul %0, %1, %cst {dimension_numbers = #tpu.dot_dimension_numbers<[1], [0], [0], [1], [0, 0, 1, 1], [], []>} : vector<16x64xbf16>, vector<64x32xbf16>, vector<16x32xf32> -> vector<16x32xf32>
    %c0_3 = arith.constant 0 : index
    %c0_4 = arith.constant 0 : index
    %3 = vector.load %arg3[%c0_3, %c0_4] : memref<1x32xf32, #tpu.memory_space<vmem>>, vector<1x32xf32>
    %4 = vector.broadcast %3 : vector<1x32xf32> to vector<16x32xf32>
    %5 = arith.mulf %2, %4 : vector<16x32xf32>
    %c0_5 = arith.constant 0 : index
    %c0_6 = arith.constant 0 : index
    %6 = vector.load %arg4[%c0_5, %c0_6] : memref<1x32xf32, #tpu.memory_space<vmem>>, vector<1x32xf32>
    %7 = vector.broadcast %6 : vector<1x32xf32> to vector<16x32xf32>
    %8 = arith.addf %5, %7 : vector<16x32xf32>
    %cst_7 = arith.constant 0.000000e+00 : f32
    %9 = vector.broadcast %cst_7 : f32 to vector<16x32xf32>
    %10 = arith.maximumf %8, %9 : vector<16x32xf32>
    %11 = arith.truncf %10 : vector<16x32xf32> to vector<16x32xbf16>
    %c0_8 = arith.constant 0 : index
    %c0_9 = arith.constant 0 : index
    %12 = vector.load %arg5[%c0_8, %c0_9] : memref<16x32xbf16, #tpu.memory_space<vmem>>, vector<16x32xbf16>
    tpu.vector_store %arg5[%c0_8, %c0_9], %11 {strides = array<i32>} : memref<16x32xbf16, #tpu.memory_space<vmem>>, vector<16x32xbf16>,
    return
  }
  func.func @transform_0(%arg0: i32) -> (i32, i32) {
    %c0_i32 = arith.constant 0 : i32
    %c0_i32_0 = arith.constant 0 : i32
    return %arg0, %c0_i32 : i32, i32
  }
  func.func @transform_1(%arg0: i32) -> (i32, i32) {
    %c0_i32 = arith.constant 0 : i32
    %c0_i32_0 = arith.constant 0 : i32
    %c0_i32_1 = arith.constant 0 : i32
    return %c0_i32, %c0_i32_0 : i32, i32
  }
  func.func @transform_2(%arg0: i32) -> (i32, i32) {
    %c0_i32 = arith.constant 0 : i32
    %c0_i32_0 = arith.constant 0 : i32
    %c0_i32_1 = arith.constant 0 : i32
    return %c0_i32, %c0_i32_0 : i32, i32
  }
  func.func @transform_3(%arg0: i32) -> (i32, i32) {
    %c0_i32 = arith.constant 0 : i32
    %c0_i32_0 = arith.constant 0 : i32
    %c0_i32_1 = arith.constant 0 : i32
    return %c0_i32, %c0_i32_0 : i32, i32
  }
  func.func @transform_4(%arg0: i32) -> (i32, i32) {
    %c0_i32 = arith.constant 0 : i32
    %c0_i32_0 = arith.constant 0 : i32
    return %arg0, %c0_i32 : i32, i32
  }
}

module attributes {stable_mosaic.version = 11 : i64} {
  func.func @_mm_epilogue_kernel(%arg0: i32, %arg1: memref<16x288xbf16, #tpu.memory_space<vmem>>, %arg2: memref<288x32xbf16, #tpu.memory_space<vmem>>, %arg3: memref<1x32xf32, #tpu.memory_space<vmem>>, %arg4: memref<1x32xf32, #tpu.memory_space<vmem>>, %arg5: memref<16x32xbf16, #tpu.memory_space<vmem>>) attributes {dimension_semantics = [#tpu.dimension_semantics<parallel>], iteration_bounds = array<i64: 1>, scalar_prefetch = 0 : i64, scratch_operands = 0 : i64, tpu.core_type = #tpu.core_type<tc>, window_params = [{transform_indices = @transform_0, window_bounds = array<i64: 16, 288>}, {pipeline_mode = #tpu.pipeline_mode<synchronous>, transform_indices = @transform_1, window_bounds = array<i64: 288, 32>}, {pipeline_mode = #tpu.pipeline_mode<synchronous>, transform_indices = @transform_2, window_bounds = array<i64: 1, 32>}, {pipeline_mode = #tpu.pipeline_mode<synchronous>, transform_indices = @transform_3, window_bounds = array<i64: 1, 32>}, {transform_indices = @transform_4, window_bounds = array<i64: 16, 32>}]} {
    %c0 = arith.constant 0 : index
    %c0_0 = arith.constant 0 : index
    %0 = vector.load %arg1[%c0, %c0_0] : memref<16x288xbf16, #tpu.memory_space<vmem>>, vector<16x288xbf16>
    %c0_1 = arith.constant 0 : index
    %c0_2 = arith.constant 0 : index
    %1 = vector.load %arg2[%c0_1, %c0_2] : memref<288x32xbf16, #tpu.memory_space<vmem>>, vector<288x32xbf16>
    %cst = arith.constant dense<0.000000e+00> : vector<16x32xf32>
    %2 = tpu.matmul %0, %1, %cst {dimension_numbers = #tpu.dot_dimension_numbers<[1], [0], [0], [1], [0, 0, 1, 1], [], []>} : vector<16x288xbf16>, vector<288x32xbf16>, vector<16x32xf32> -> vector<16x32xf32>
    %c0_3 = arith.constant 0 : index
    %c0_4 = arith.constant 0 : index
    %3 = vector.load %arg3[%c0_3, %c0_4] : memref<1x32xf32, #tpu.memory_space<vmem>>, vector<1x32xf32>
    %4 = vector.broadcast %3 : vector<1x32xf32> to vector<16x32xf32>
    %5 = arith.mulf %2, %4 : vector<16x32xf32>
    %c0_5 = arith.constant 0 : index
    %c0_6 = arith.constant 0 : index
    %6 = vector.load %arg4[%c0_5, %c0_6] : memref<1x32xf32, #tpu.memory_space<vmem>>, vector<1x32xf32>
    %7 = vector.broadcast %6 : vector<1x32xf32> to vector<16x32xf32>
    %8 = arith.addf %5, %7 : vector<16x32xf32>
    %cst_7 = arith.constant 0.000000e+00 : f32
    %9 = vector.broadcast %cst_7 : f32 to vector<16x32xf32>
    %10 = arith.maximumf %8, %9 : vector<16x32xf32>
    %11 = arith.truncf %10 : vector<16x32xf32> to vector<16x32xbf16>
    %c0_8 = arith.constant 0 : index
    %c0_9 = arith.constant 0 : index
    %12 = vector.load %arg5[%c0_8, %c0_9] : memref<16x32xbf16, #tpu.memory_space<vmem>>, vector<16x32xbf16>
    tpu.vector_store %arg5[%c0_8, %c0_9], %11 {strides = array<i32>} : memref<16x32xbf16, #tpu.memory_space<vmem>>, vector<16x32xbf16>,
    return
  }
  func.func @transform_0(%arg0: i32) -> (i32, i32) {
    %c0_i32 = arith.constant 0 : i32
    %c0_i32_0 = arith.constant 0 : i32
    return %arg0, %c0_i32 : i32, i32
  }
  func.func @transform_1(%arg0: i32) -> (i32, i32) {
    %c0_i32 = arith.constant 0 : i32
    %c0_i32_0 = arith.constant 0 : i32
    %c0_i32_1 = arith.constant 0 : i32
    return %c0_i32, %c0_i32_0 : i32, i32
  }
  func.func @transform_2(%arg0: i32) -> (i32, i32) {
    %c0_i32 = arith.constant 0 : i32
    %c0_i32_0 = arith.constant 0 : i32
    %c0_i32_1 = arith.constant 0 : i32
    return %c0_i32, %c0_i32_0 : i32, i32
  }
  func.func @transform_3(%arg0: i32) -> (i32, i32) {
    %c0_i32 = arith.constant 0 : i32
    %c0_i32_0 = arith.constant 0 : i32
    %c0_i32_1 = arith.constant 0 : i32
    return %c0_i32, %c0_i32_0 : i32, i32
  }
  func.func @transform_4(%arg0: i32) -> (i32, i32) {
    %c0_i32 = arith.constant 0 : i32
    %c0_i32_0 = arith.constant 0 : i32
    return %arg0, %c0_i32 : i32, i32
  }
}

module attributes {stable_mosaic.version = 11 : i64} {
  func.func @_mm_epilogue_kernel(%arg0: i32, %arg1: memref<16x32xbf16, #tpu.memory_space<vmem>>, %arg2: memref<32x128xbf16, #tpu.memory_space<vmem>>, %arg3: memref<1x128xf32, #tpu.memory_space<vmem>>, %arg4: memref<1x128xf32, #tpu.memory_space<vmem>>, %arg5: memref<16x128xbf16, #tpu.memory_space<vmem>>, %arg6: memref<16x128xbf16, #tpu.memory_space<vmem>>) attributes {dimension_semantics = [#tpu.dimension_semantics<parallel>], iteration_bounds = array<i64: 1>, scalar_prefetch = 0 : i64, scratch_operands = 0 : i64, tpu.core_type = #tpu.core_type<tc>, window_params = [{transform_indices = @transform_0, window_bounds = array<i64: 16, 32>}, {pipeline_mode = #tpu.pipeline_mode<synchronous>, transform_indices = @transform_1, window_bounds = array<i64: 32, 128>}, {pipeline_mode = #tpu.pipeline_mode<synchronous>, transform_indices = @transform_2, window_bounds = array<i64: 1, 128>}, {pipeline_mode = #tpu.pipeline_mode<synchronous>, transform_indices = @transform_3, window_bounds = array<i64: 1, 128>}, {transform_indices = @transform_4, window_bounds = array<i64: 16, 128>}, {transform_indices = @transform_5, window_bounds = array<i64: 16, 128>}]} {
    %c0 = arith.constant 0 : index
    %c0_0 = arith.constant 0 : index
    %0 = vector.load %arg1[%c0, %c0_0] : memref<16x32xbf16, #tpu.memory_space<vmem>>, vector<16x32xbf16>
    %c0_1 = arith.constant 0 : index
    %c0_2 = arith.constant 0 : index
    %1 = vector.load %arg2[%c0_1, %c0_2] : memref<32x128xbf16, #tpu.memory_space<vmem>>, vector<32x128xbf16>
    %cst = arith.constant dense<0.000000e+00> : vector<16x128xf32>
    %2 = tpu.matmul %0, %1, %cst {dimension_numbers = #tpu.dot_dimension_numbers<[1], [0], [0], [1], [0, 0, 1, 1], [], []>} : vector<16x32xbf16>, vector<32x128xbf16>, vector<16x128xf32> -> vector<16x128xf32>
    %c0_3 = arith.constant 0 : index
    %c0_4 = arith.constant 0 : index
    %3 = vector.load %arg3[%c0_3, %c0_4] : memref<1x128xf32, #tpu.memory_space<vmem>>, vector<1x128xf32>
    %4 = vector.broadcast %3 : vector<1x128xf32> to vector<16x128xf32>
    %5 = arith.mulf %2, %4 : vector<16x128xf32>
    %c0_5 = arith.constant 0 : index
    %c0_6 = arith.constant 0 : index
    %6 = vector.load %arg4[%c0_5, %c0_6] : memref<1x128xf32, #tpu.memory_space<vmem>>, vector<1x128xf32>
    %7 = vector.broadcast %6 : vector<1x128xf32> to vector<16x128xf32>
    %8 = arith.addf %5, %7 : vector<16x128xf32>
    %c0_7 = arith.constant 0 : index
    %c0_8 = arith.constant 0 : index
    %9 = vector.load %arg5[%c0_7, %c0_8] : memref<16x128xbf16, #tpu.memory_space<vmem>>, vector<16x128xbf16>
    %10 = arith.extf %9 : vector<16x128xbf16> to vector<16x128xf32>
    %11 = arith.addf %8, %10 : vector<16x128xf32>
    %cst_9 = arith.constant 0.000000e+00 : f32
    %12 = vector.broadcast %cst_9 : f32 to vector<16x128xf32>
    %13 = arith.maximumf %11, %12 : vector<16x128xf32>
    %14 = arith.truncf %13 : vector<16x128xf32> to vector<16x128xbf16>
    %c0_10 = arith.constant 0 : index
    %c0_11 = arith.constant 0 : index
    %15 = vector.load %arg6[%c0_10, %c0_11] : memref<16x128xbf16, #tpu.memory_space<vmem>>, vector<16x128xbf16>
    tpu.vector_store %arg6[%c0_10, %c0_11], %14 {strides = array<i32>} : memref<16x128xbf16, #tpu.memory_space<vmem>>, vector<16x128xbf16>,
    return
  }
  func.func @transform_0(%arg0: i32) -> (i32, i32) {
    %c0_i32 = arith.constant 0 : i32
    %c0_i32_0 = arith.constant 0 : i32
    return %arg0, %c0_i32 : i32, i32
  }
  func.func @transform_1(%arg0: i32) -> (i32, i32) {
    %c0_i32 = arith.constant 0 : i32
    %c0_i32_0 = arith.constant 0 : i32
    %c0_i32_1 = arith.constant 0 : i32
    return %c0_i32, %c0_i32_0 : i32, i32
  }
  func.func @transform_2(%arg0: i32) -> (i32, i32) {
    %c0_i32 = arith.constant 0 : i32
    %c0_i32_0 = arith.constant 0 : i32
    %c0_i32_1 = arith.constant 0 : i32
    return %c0_i32, %c0_i32_0 : i32, i32
  }
  func.func @transform_3(%arg0: i32) -> (i32, i32) {
    %c0_i32 = arith.constant 0 : i32
    %c0_i32_0 = arith.constant 0 : i32
    %c0_i32_1 = arith.constant 0 : i32
    return %c0_i32, %c0_i32_0 : i32, i32
  }
  func.func @transform_4(%arg0: i32) -> (i32, i32) {
    %c0_i32 = arith.constant 0 : i32
    %c0_i32_0 = arith.constant 0 : i32
    return %arg0, %c0_i32 : i32, i32
  }
  func.func @transform_5(%arg0: i32) -> (i32, i32) {
    %c0_i32 = arith.constant 0 : i32
    %c0_i32_0 = arith.constant 0 : i32
    return %arg0, %c0_i32 : i32, i32
  }
}

module attributes {stable_mosaic.version = 11 : i64} {
  func.func @_mm_epilogue_kernel(%arg0: i32, %arg1: memref<16x64xbf16, #tpu.memory_space<vmem>>, %arg2: memref<64x128xbf16, #tpu.memory_space<vmem>>, %arg3: memref<1x128xf32, #tpu.memory_space<vmem>>, %arg4: memref<1x128xf32, #tpu.memory_space<vmem>>, %arg5: memref<16x128xbf16, #tpu.memory_space<vmem>>) attributes {dimension_semantics = [#tpu.dimension_semantics<parallel>], iteration_bounds = array<i64: 1>, scalar_prefetch = 0 : i64, scratch_operands = 0 : i64, tpu.core_type = #tpu.core_type<tc>, window_params = [{transform_indices = @transform_0, window_bounds = array<i64: 16, 64>}, {pipeline_mode = #tpu.pipeline_mode<synchronous>, transform_indices = @transform_1, window_bounds = array<i64: 64, 128>}, {pipeline_mode = #tpu.pipeline_mode<synchronous>, transform_indices = @transform_2, window_bounds = array<i64: 1, 128>}, {pipeline_mode = #tpu.pipeline_mode<synchronous>, transform_indices = @transform_3, window_bounds = array<i64: 1, 128>}, {transform_indices = @transform_4, window_bounds = array<i64: 16, 128>}]} {
    %c0 = arith.constant 0 : index
    %c0_0 = arith.constant 0 : index
    %0 = vector.load %arg1[%c0, %c0_0] : memref<16x64xbf16, #tpu.memory_space<vmem>>, vector<16x64xbf16>
    %c0_1 = arith.constant 0 : index
    %c0_2 = arith.constant 0 : index
    %1 = vector.load %arg2[%c0_1, %c0_2] : memref<64x128xbf16, #tpu.memory_space<vmem>>, vector<64x128xbf16>
    %cst = arith.constant dense<0.000000e+00> : vector<16x128xf32>
    %2 = tpu.matmul %0, %1, %cst {dimension_numbers = #tpu.dot_dimension_numbers<[1], [0], [0], [1], [0, 0, 1, 1], [], []>} : vector<16x64xbf16>, vector<64x128xbf16>, vector<16x128xf32> -> vector<16x128xf32>
    %c0_3 = arith.constant 0 : index
    %c0_4 = arith.constant 0 : index
    %3 = vector.load %arg3[%c0_3, %c0_4] : memref<1x128xf32, #tpu.memory_space<vmem>>, vector<1x128xf32>
    %4 = vector.broadcast %3 : vector<1x128xf32> to vector<16x128xf32>
    %5 = arith.mulf %2, %4 : vector<16x128xf32>
    %c0_5 = arith.constant 0 : index
    %c0_6 = arith.constant 0 : index
    %6 = vector.load %arg4[%c0_5, %c0_6] : memref<1x128xf32, #tpu.memory_space<vmem>>, vector<1x128xf32>
    %7 = vector.broadcast %6 : vector<1x128xf32> to vector<16x128xf32>
    %8 = arith.addf %5, %7 : vector<16x128xf32>
    %9 = arith.truncf %8 : vector<16x128xf32> to vector<16x128xbf16>
    %c0_7 = arith.constant 0 : index
    %c0_8 = arith.constant 0 : index
    %10 = vector.load %arg5[%c0_7, %c0_8] : memref<16x128xbf16, #tpu.memory_space<vmem>>, vector<16x128xbf16>
    tpu.vector_store %arg5[%c0_7, %c0_8], %9 {strides = array<i32>} : memref<16x128xbf16, #tpu.memory_space<vmem>>, vector<16x128xbf16>,
    return
  }
  func.func @transform_0(%arg0: i32) -> (i32, i32) {
    %c0_i32 = arith.constant 0 : i32
    %c0_i32_0 = arith.constant 0 : i32
    return %arg0, %c0_i32 : i32, i32
  }
  func.func @transform_1(%arg0: i32) -> (i32, i32) {
    %c0_i32 = arith.constant 0 : i32
    %c0_i32_0 = arith.constant 0 : i32
    %c0_i32_1 = arith.constant 0 : i32
    return %c0_i32, %c0_i32_0 : i32, i32
  }
  func.func @transform_2(%arg0: i32) -> (i32, i32) {
    %c0_i32 = arith.constant 0 : i32
    %c0_i32_0 = arith.constant 0 : i32
    %c0_i32_1 = arith.constant 0 : i32
    return %c0_i32, %c0_i32_0 : i32, i32
  }
  func.func @transform_3(%arg0: i32) -> (i32, i32) {
    %c0_i32 = arith.constant 0 : i32
    %c0_i32_0 = arith.constant 0 : i32
    %c0_i32_1 = arith.constant 0 : i32
    return %c0_i32, %c0_i32_0 : i32, i32
  }
  func.func @transform_4(%arg0: i32) -> (i32, i32) {
    %c0_i32 = arith.constant 0 : i32
    %c0_i32_0 = arith.constant 0 : i32
    return %arg0, %c0_i32 : i32, i32
  }
}

module attributes {stable_mosaic.version = 11 : i64} {
  func.func @_mm_epilogue_kernel(%arg0: i32, %arg1: memref<16x128xbf16, #tpu.memory_space<vmem>>, %arg2: memref<128x17xbf16, #tpu.memory_space<vmem>>, %arg3: memref<1x17xf32, #tpu.memory_space<vmem>>, %arg4: memref<16x17xf32, #tpu.memory_space<vmem>>) attributes {dimension_semantics = [#tpu.dimension_semantics<parallel>], iteration_bounds = array<i64: 1>, scalar_prefetch = 0 : i64, scratch_operands = 0 : i64, tpu.core_type = #tpu.core_type<tc>, window_params = [{transform_indices = @transform_0, window_bounds = array<i64: 16, 128>}, {pipeline_mode = #tpu.pipeline_mode<synchronous>, transform_indices = @transform_1, window_bounds = array<i64: 128, 17>}, {pipeline_mode = #tpu.pipeline_mode<synchronous>, transform_indices = @transform_2, window_bounds = array<i64: 1, 17>}, {transform_indices = @transform_3, window_bounds = array<i64: 16, 17>}]} {
    %c0 = arith.constant 0 : index
    %c0_0 = arith.constant 0 : index
    %0 = vector.load %arg1[%c0, %c0_0] : memref<16x128xbf16, #tpu.memory_space<vmem>>, vector<16x128xbf16>
    %c0_1 = arith.constant 0 : index
    %c0_2 = arith.constant 0 : index
    %1 = vector.load %arg2[%c0_1, %c0_2] : memref<128x17xbf16, #tpu.memory_space<vmem>>, vector<128x17xbf16>
    %cst = arith.constant dense<0.000000e+00> : vector<16x17xf32>
    %2 = tpu.matmul %0, %1, %cst {dimension_numbers = #tpu.dot_dimension_numbers<[1], [0], [0], [1], [0, 0, 1, 1], [], []>} : vector<16x128xbf16>, vector<128x17xbf16>, vector<16x17xf32> -> vector<16x17xf32>
    %c0_3 = arith.constant 0 : index
    %c0_4 = arith.constant 0 : index
    %3 = vector.load %arg3[%c0_3, %c0_4] : memref<1x17xf32, #tpu.memory_space<vmem>>, vector<1x17xf32>
    %4 = vector.broadcast %3 : vector<1x17xf32> to vector<16x17xf32>
    %5 = arith.addf %2, %4 : vector<16x17xf32>
    %c0_5 = arith.constant 0 : index
    %c0_6 = arith.constant 0 : index
    %6 = vector.load %arg4[%c0_5, %c0_6] : memref<16x17xf32, #tpu.memory_space<vmem>>, vector<16x17xf32>
    tpu.vector_store %arg4[%c0_5, %c0_6], %5 {strides = array<i32>} : memref<16x17xf32, #tpu.memory_space<vmem>>, vector<16x17xf32>,
    return
  }
  func.func @transform_0(%arg0: i32) -> (i32, i32) {
    %c0_i32 = arith.constant 0 : i32
    %c0_i32_0 = arith.constant 0 : i32
    return %arg0, %c0_i32 : i32, i32
  }
  func.func @transform_1(%arg0: i32) -> (i32, i32) {
    %c0_i32 = arith.constant 0 : i32
    %c0_i32_0 = arith.constant 0 : i32
    %c0_i32_1 = arith.constant 0 : i32
    return %c0_i32, %c0_i32_0 : i32, i32
  }
  func.func @transform_2(%arg0: i32) -> (i32, i32) {
    %c0_i32 = arith.constant 0 : i32
    %c0_i32_0 = arith.constant 0 : i32
    %c0_i32_1 = arith.constant 0 : i32
    return %c0_i32, %c0_i32_0 : i32, i32
  }
  func.func @transform_3(%arg0: i32) -> (i32, i32) {
    %c0_i32 = arith.constant 0 : i32
    %c0_i32_0 = arith.constant 0 : i32
    return %arg0, %c0_i32 : i32, i32
  }
}

module attributes {stable_mosaic.version = 11 : i64} {
  func.func @_bilinear_bcast_kernel(%arg0: i32, %arg1: memref<8x1x1xf32, #tpu.memory_space<vmem>>, %arg2: memref<8x1x1024xf32, #tpu.memory_space<vmem>>) attributes {dimension_semantics = [#tpu.dimension_semantics<parallel>], iteration_bounds = array<i64: 5>, scalar_prefetch = 0 : i64, scratch_operands = 0 : i64, tpu.core_type = #tpu.core_type<tc>, window_params = [{transform_indices = @transform_0, window_bounds = array<i64: 8, 1, 1>}, {transform_indices = @transform_1, window_bounds = array<i64: 8, 1, 1024>}]} {
    %c0 = arith.constant 0 : index
    %c0_0 = arith.constant 0 : index
    %c0_1 = arith.constant 0 : index
    %0 = vector.load %arg1[%c0, %c0_0, %c0_1] : memref<8x1x1xf32, #tpu.memory_space<vmem>>, vector<8x1x1xf32>
    %1 = vector.shape_cast %0 : vector<8x1x1xf32> to vector<8x1x1xf32>
    %2 = vector.broadcast %1 : vector<8x1x1xf32> to vector<8x1x1024xf32>
    %c0_2 = arith.constant 0 : index
    %c0_3 = arith.constant 0 : index
    %c0_4 = arith.constant 0 : index
    %3 = vector.load %arg2[%c0_2, %c0_3, %c0_4] : memref<8x1x1024xf32, #tpu.memory_space<vmem>>, vector<8x1x1024xf32>
    tpu.vector_store %arg2[%c0_2, %c0_3, %c0_4], %2 {strides = array<i32>} : memref<8x1x1024xf32, #tpu.memory_space<vmem>>, vector<8x1x1024xf32>,
    return
  }
  func.func @transform_0(%arg0: i32) -> (i32, i32, i32) {
    %c0_i32 = arith.constant 0 : i32
    %c0_i32_0 = arith.constant 0 : i32
    %c0_i32_1 = arith.constant 0 : i32
    return %arg0, %c0_i32, %c0_i32_0 : i32, i32, i32
  }
  func.func @transform_1(%arg0: i32) -> (i32, i32, i32) {
    %c0_i32 = arith.constant 0 : i32
    %c0_i32_0 = arith.constant 0 : i32
    %c0_i32_1 = arith.constant 0 : i32
    return %arg0, %c0_i32, %c0_i32_0 : i32, i32, i32
  }
}

module attributes {stable_mosaic.version = 11 : i64} {
  func.func @_l2norm_kernel(%arg0: i32, %arg1: memref<1x3x1024xf32, #tpu.memory_space<vmem>>, %arg2: memref<1x3x1024xf32, #tpu.memory_space<vmem>>) attributes {dimension_semantics = [#tpu.dimension_semantics<parallel>], iteration_bounds = array<i64: 2>, scalar_prefetch = 0 : i64, scratch_operands = 0 : i64, tpu.core_type = #tpu.core_type<tc>, window_params = [{transform_indices = @transform_0, window_bounds = array<i64: 1, 3, 1024>}, {transform_indices = @transform_1, window_bounds = array<i64: 1, 3, 1024>}]} {
    %c0 = arith.constant 0 : index
    %c0_0 = arith.constant 0 : index
    %c0_1 = arith.constant 0 : index
    %0 = vector.load %arg1[%c0, %c0_0, %c0_1] : memref<1x3x1024xf32, #tpu.memory_space<vmem>>, vector<1x3x1024xf32>
    %1 = arith.mulf %0, %0 : vector<1x3x1024xf32>
    %cst = arith.constant dense<0.000000e+00> : vector<1x1024xf32>
    %2 = vector.multi_reduction <add>, %1, %cst [1] : vector<1x3x1024xf32> to vector<1x1024xf32>
    %3 = vector.shape_cast %2 : vector<1x1024xf32> to vector<1x1x1024xf32>
    %cst_2 = arith.constant 9.99999996E-13 : f32
    %4 = vector.broadcast %cst_2 : f32 to vector<1x1x1024xf32>
    %5 = arith.maximumf %3, %4 : vector<1x1x1024xf32>
    %6 = math.rsqrt %5 : vector<1x1x1024xf32>
    %7 = vector.broadcast %6 : vector<1x1x1024xf32> to vector<1x3x1024xf32>
    %8 = arith.mulf %0, %7 : vector<1x3x1024xf32>
    %c0_3 = arith.constant 0 : index
    %c0_4 = arith.constant 0 : index
    %c0_5 = arith.constant 0 : index
    %9 = vector.load %arg2[%c0_3, %c0_4, %c0_5] : memref<1x3x1024xf32, #tpu.memory_space<vmem>>, vector<1x3x1024xf32>
    tpu.vector_store %arg2[%c0_3, %c0_4, %c0_5], %8 {strides = array<i32>} : memref<1x3x1024xf32, #tpu.memory_space<vmem>>, vector<1x3x1024xf32>,
    return
  }
  func.func @transform_0(%arg0: i32) -> (i32, i32, i32) {
    %c0_i32 = arith.constant 0 : i32
    %c0_i32_0 = arith.constant 0 : i32
    %c0_i32_1 = arith.constant 0 : i32
    return %arg0, %c0_i32, %c0_i32_0 : i32, i32, i32
  }
  func.func @transform_1(%arg0: i32) -> (i32, i32, i32) {
    %c0_i32 = arith.constant 0 : i32
    %c0_i32_0 = arith.constant 0 : i32
    %c0_i32_1 = arith.constant 0 : i32
    return %arg0, %c0_i32, %c0_i32_0 : i32, i32, i32
  }
}

</mosaic_0001>

<llo_original>
// kernel: forward.20
$region0: #{forward.20}
  #allocation0 [shape = 'u32[]', space=smem, size = 0x4, offset = 0x4, fixed_abs, tag = 'smem constant byte address 0x4 - core index']
  #allocation1 [shape = 'u32[144,128]{1,0:T(1,128)}', space=vmem, size = 0x12000, scoped, tag = 'internal scratch']
  %s0 = inlined_call_operand.vmem [shape: bf16[512,147], index: 0, kind: input, shape index: {}]
  %s1 = inlined_call_operand.vmem [shape: bf16[147,4], index: 1, kind: input, shape index: {}]
  %s2 = inlined_call_operand.vmem [shape: f32[1,4], index: 2, kind: input, shape index: {}]
  %s3 = inlined_call_operand.vmem [shape: f32[1,4], index: 3, kind: input, shape index: {}]
  %s4 = inlined_call_operand.vmem [shape: bf16[512,4], index: 4, kind: output, shape index: {}]
  %s5 = sld [smem:[#allocation0]]
  $region49: #{forward.20} parent=0
    _
  %s7 = ssub.s32 1, %s5
  %s8 = scalar_select 0, %s7, %s5
  loop: start=0, step=1, limit=6
  $region2: #{forward.20} parent=0 // loop_pre_header
    _
  $region3: #{forward.20} parent=0 // loop_header
    %s10 = sphi 0, %s14
    %p11 = scmp.ge.s32.totalorder %s10, 6
    %s20 = sphi 0, %s22
    %s23 = sphi 0, %s20
    %s24 = sphi 0, %s23
    %s40 = sphi 0, %s24
    %s44 = sphi 0, %s44
    %s46 = sphi 0, %s44
    %s47 = sphi 0, %s46
    %s61 = sphi 0, %s47
    %s65 = sphi 0, %s65
    %s67 = sphi 0, %s65
    %s68 = sphi 0, %s67
    %s82 = sphi 0, %s68
    %s86 = sphi 0, %s86
    %s88 = sphi 0, %s86
    %s89 = sphi 0, %s88
    %s103 = sphi 0, %s89
    %s109 = sphi 0, %s111
    %s112 = sphi 0, %s109
    %s113 = sphi 0, %s112
    %s129 = sphi 0, %s113
  $region4: #{forward.20} parent=0 // loop_header_branch
    %13 = sbr.rel (%p11) target = $region8
  $region5: #{forward.20} parent=0 // loop_body
    %s15 = ssub.s32 %s10, 1
    %s16 = ssub.s32 %s10, 2
    %s17 = sadd.s32 %s10, 1
    %s18 = ssub.s32 %s10, %s17
    %p19 = scmp.eq.s32.totalorder %s18, 0
    %s21 = sadd.s32 %s20, 1
    %s22 = scalar_select %p19, %s20, %s21
    %p25 = pneg %p19
    %p26 = scmp.eq.s32.totalorder %s10, 3
    %p27 = por %p25, %p26
    %p28 = scmp.ne.s32.totalorder %s20, %s23
    %p29 = scmp.eq.s32.totalorder %s10, 0
    %p30 = por %p28, %p29
    %p31 = scmp.ne.s32.totalorder %s20, %s23
    %p32 = scmp.eq.s32.totalorder %s15, 3
    %p33 = por %p31, %p32
    %p34 = scmp.ne.s32.totalorder %s23, %s24
    %p35 = scmp.eq.s32.totalorder %s15, 0
    %p36 = por %p34, %p35
    %p37 = scmp.ne.s32.totalorder %s23, %s24
    %p38 = scmp.eq.s32.totalorder %s16, 3
    %p39 = por %p37, %p38
    %p41 = scmp.ne.s32.totalorder %s24, %s40
    %p42 = scmp.eq.s32.totalorder %s16, 0
    %p43 = por %p41, %p42
    %s45 = sadd.s32 %s44, 1
    %p48 = scmp.eq.s32.totalorder %s10, 3
    %p49 = scmp.ne.s32.totalorder %s44, %s46
    %p50 = scmp.eq.s32.totalorder %s10, 0
    %p51 = por %p49, %p50
    %p52 = scmp.ne.s32.totalorder %s44, %s46
    %p53 = scmp.eq.s32.totalorder %s15, 3
    %p54 = por %p52, %p53
    %p55 = scmp.ne.s32.totalorder %s46, %s47
    %p56 = scmp.eq.s32.totalorder %s15, 0
    %p57 = por %p55, %p56
    %p58 = scmp.ne.s32.totalorder %s46, %s47
    %p59 = scmp.eq.s32.totalorder %s16, 3
    %p60 = por %p58, %p59
    %p62 = scmp.ne.s32.totalorder %s47, %s61
    %p63 = scmp.eq.s32.totalorder %s16, 0
    %p64 = por %p62, %p63
    %s66 = sadd.s32 %s65, 1
    %p69 = scmp.eq.s32.totalorder %s10, 3
    %p70 = scmp.ne.s32.totalorder %s65, %s67
    %p71 = scmp.eq.s32.totalorder %s10, 0
    %p72 = por %p70, %p71
    %p73 = scmp.ne.s32.totalorder %s65, %s67
    %p74 = scmp.eq.s32.totalorder %s15, 3
    %p75 = por %p73, %p74
    %p76 = scmp.ne.s32.totalorder %s67, %s68
    %p77 = scmp.eq.s32.totalorder %s15, 0
    %p78 = por %p76, %p77
    %p79 = scmp.ne.s32.totalorder %s67, %s68
    %p80 = scmp.eq.s32.totalorder %s16, 3
    %p81 = por %p79, %p80
    %p83 = scmp.ne.s32.totalorder %s68, %s82
    %p84 = scmp.eq.s32.totalorder %s16, 0
    %p85 = por %p83, %p84
    %s87 = sadd.s32 %s86, 1
    %p90 = scmp.eq.s32.totalorder %s10, 3
    %p91 = scmp.ne.s32.totalorder %s86, %s88
    %p92 = scmp.eq.s32.totalorder %s10, 0
    %p93 = por %p91, %p92
    %p94 = scmp.ne.s32.totalorder %s86, %s88
    %p95 = scmp.eq.s32.totalorder %s15, 3
    %p96 = por %p94, %p95
    %p97 = scmp.ne.s32.totalorder %s88, %s89
    %p98 = scmp.eq.s32.totalorder %s15, 0
    %p99 = por %p97, %p98
    %p100 = scmp.ne.s32.totalorder %s88, %s89
    %p101 = scmp.eq.s32.totalorder %s16, 3
    %p102 = por %p100, %p101
    %p104 = scmp.ne.s32.totalorder %s89, %s103
    %p105 = scmp.eq.s32.totalorder %s16, 0
    %p106 = por %p104, %p105
    %s107 = ssub.s32 %s10, %s17
    %p108 = scmp.eq.s32.totalorder %s107, 0
    %s110 = sadd.s32 %s109, 1
    %s111 = scalar_select %p108, %s109, %s110
    %p114 = pneg %p108
    %p115 = scmp.eq.s32.totalorder %s10, 3
    %p116 = por %p114, %p115
    %p117 = scmp.ne.s32.totalorder %s109, %s112
    %p118 = scmp.eq.s32.totalorder %s10, 0
    %p119 = por %p117, %p118
    %p120 = scmp.ne.s32.totalorder %s109, %s112
    %p121 = scmp.eq.s32.totalorder %s15, 3
    %p122 = por %p120, %p121
    %p123 = scmp.ne.s32.totalorder %s112, %s113
    %p124 = scmp.eq.s32.totalorder %s15, 0
    %p125 = por %p123, %p124
    %p126 = scmp.ne.s32.totalorder %s112, %s113
    %p127 = scmp.eq.s32.totalorder %s16, 3
    %p128 = por %p126, %p127
    %p130 = scmp.ne.s32.totalorder %s113, %s129
    %p131 = scmp.eq.s32.totalorder %s16, 0
    %p132 = por %p130, %p131
    %p133 = scmp.le.s32.totalorder 1, %s10
    %p134 = scmp.lt.s32.totalorder %s10, 5
    %p135 = pnand %p133, %p134
    %p136 = pneg %p135
    // Predicated region
    $region9: #{forward.20} parent=5 // pred_check
      _
    $region10: #{forward.20} parent=5 // pred_check_branch
      %138 = sbr.rel (%p135) target = $region12
    $region11: #{forward.20} parent=5 // pred_region
      %s139 = ssub.s32 %s10, 1
      // Predicated region
      $region13: #{forward.20} parent=11 // pred_check
        %p140 = pneg %p57
      $region14: #{forward.20} parent=11 // pred_check_branch
        %142 = sbr.rel (%p140) target = $region16
      $region15: #{forward.20} parent=11 // pred_region
        _
      $region16: #{forward.20} parent=11 // pred_fallthru
        _
      // Predicated region
      $region17: #{forward.20} parent=11 // pred_check
        %p143 = pneg %p78
      $region18: #{forward.20} parent=11 // pred_check_branch
        %145 = sbr.rel (%p143) target = $region20
      $region19: #{forward.20} parent=11 // pred_region
        _
      $region20: #{forward.20} parent=11 // pred_fallthru
        _
      // Predicated region
      $region21: #{forward.20} parent=11 // pred_check
        %p146 = pneg %p99
      $region22: #{forward.20} parent=11 // pred_check_branch
        %148 = sbr.rel (%p146) target = $region24
      $region23: #{forward.20} parent=11 // pred_region
        _
      $region24: #{forward.20} parent=11 // pred_fallthru
        _
    $region12: #{forward.20} parent=5 // pred_fallthru
      _
    %p149 = scmp.lt.s32.totalorder %s10, 4
    // Predicated region
    $region25: #{forward.20} parent=5 // pred_check
      %p150 = pneg %p149
    $region26: #{forward.20} parent=5 // pred_check_branch
      %152 = sbr.rel (%p150) target = $region28
    $region27: #{forward.20} parent=5 // pred_region
      // Predicated region
      $region29: #{forward.20} parent=27 // pred_check
        %p153 = pneg %p30
      $region30: #{forward.20} parent=27 // pred_check_branch
        %155 = sbr.rel (%p153) target = $region32
      $region31: #{forward.20} parent=27 // pred_region
        %s156 = smul.u32 16, %s10
        %p157 = scmp.lt.s32.totalorder %s156, 63
        %s158 = scalar_select %p157, %s156, 63
        %s159 = smul.addr %s158, 2
        %s160 = smul.addr %s159, 4
        %s161 = scalar_lea.vmem %s0, %s160
        %s162 = smul.u32 16, %s10
      $region32: #{forward.20} parent=27 // pred_fallthru
        _
    $region28: #{forward.20} parent=5 // pred_fallthru
      _
    %p163 = scmp.le.s32.totalorder 1, %s10
    %p164 = scmp.lt.s32.totalorder %s10, 5
    %p165 = pnand %p163, %p164
    %p166 = pneg %p165
    // Predicated region
    $region33: #{forward.20} parent=5 // pred_check
      _
    $region34: #{forward.20} parent=5 // pred_check_branch
      %168 = sbr.rel (%p165) target = $region36
    $region35: #{forward.20} parent=5 // pred_region
      %s169 = ssub.s32 %s10, 1
      %s170 = smul.u32 16, %s15
      %p171 = scmp.lt.s32.totalorder %s170, 63
      %s172 = scalar_select %p171, %s170, 63
      %s173 = smul.addr %s172, 2
      %s174 = smul.addr %s173, 4
      %s175 = scalar_lea.vmem %s0, %s174
      %p176 = pneg %p36
      %p177 = pneg %p33
      %p178 = pneg %p57
      %p179 = pneg %p54
      %p180 = pneg %p78
      %p181 = pneg %p75
      %p182 = pneg %p99
      %p183 = pneg %p96
      %p184 = pneg %p125
      %p185 = pneg %p122
      %s186 = smul.u32 16, %s15
      %p187 = scmp.lt.s32.totalorder %s186, 63
      %s188 = scalar_select %p187, %s186, 63
      %s189 = smul.addr %s188, 4
      %s190 = scalar_lea.vmem %s4, %s189
      %s191 = smul.u32 16, %s15
      %p192 = scmp.lt.s32.totalorder %s191, 63
      %s193 = scalar_select %p192, %s191, 63
      %s194 = smul.addr %s193, 2
      %s195 = smul.addr %s194, 4
      %s196 = scalar_lea.vmem %s0, %s195
      %s197 = smul.u32 16, %s15
      %s198 = smul.u32 16, %s15
      %p199 = scmp.lt.s32.totalorder %s198, 63
      %s200 = scalar_select %p199, %s198, 63
      %s201 = smul.addr %s200, 4
      %s202 = scalar_lea.vmem %s4, %s201
      %s203 = smul.u32 16, %s15
      %v205 = vld [vmem:[%s196] sm:$0xff]
      %v206 = vld [vmem:[%s196 + $0x8] sm:$0xff]
      %v207 = vld [vmem:[%s196 + $0x10] sm:$0xff]
      %v208 = vld [vmem:[%s196 + $0x18] sm:$0xff]
      %v209 = vld [vmem:[%s196 + $0x20] sm:$0xff]
      %v210 = vld [vmem:[%s196 + $0x28] sm:$0xff]
      %v211 = vld [vmem:[%s196 + $0x30] sm:$0xff]
      %v212 = vld [vmem:[%s196 + $0x38] sm:$0xff]
      %v213 = vld [vmem:[%s196 + $0x40] sm:$0xff]
      %v214 = vld [vmem:[%s196 + $0x48] sm:$0xff]
      %v215 = vld [vmem:[%s196 + $0x50] sm:$0xff]
      %v216 = vld [vmem:[%s196 + $0x58] sm:$0xff]
      %v217 = vld [vmem:[%s196 + $0x60] sm:$0xff]
      %v218 = vld [vmem:[%s196 + $0x68] sm:$0xff]
      %v219 = vld [vmem:[%s196 + $0x70] sm:$0xff]
      %v220 = vld [vmem:[%s196 + $0x78] sm:$0xff]
      %v221 = vld [vmem:[%s1] sm:$0xf]
      %v222 = vld [vmem:[%s1 + $0x4] sm:$0xf]
      %v223 = vld [vmem:[%s1 + $0x8] sm:$0xf]
      %v224 = vld [vmem:[%s1 + $0xc] sm:$0xf]
      %v225 = vld [vmem:[%s1 + $0x10] sm:$0xf]
      %v226 = vld [vmem:[%s1 + $0x14] sm:$0xf]
      %v227 = vld [vmem:[%s1 + $0x18] sm:$0xf]
      %v228 = vld [vmem:[%s1 + $0x1c] sm:$0xf]
      %v229 = vld [vmem:[%s1 + $0x20] sm:$0xf]
      %v230 = vld [vmem:[%s1 + $0x24] sm:$0xf]
      %v231 = vld [vmem:[%s1 + $0x28] sm:$0xf]
      %v232 = vld [vmem:[%s1 + $0x2c] sm:$0xf]
      %v233 = vld [vmem:[%s1 + $0x30] sm:$0xf]
      %v234 = vld [vmem:[%s1 + $0x34] sm:$0xf]
      %v235 = vld [vmem:[%s1 + $0x38] sm:$0xf]
      %v236 = vld [vmem:[%s1 + $0x3c] sm:$0xf]
      %v237 = vld [vmem:[%s1 + $0x40] sm:$0xf]
      %v238 = vld [vmem:[%s1 + $0x44] sm:$0xf]
      %v239 = vld [vmem:[%s1 + $0x48] sm:$0x3]
      %v256 = vunpack.c.l.b16 %v205
      %v257 = vunpack.c.h.b16 %v205
      %v258 = vunpack.c.l.b16 %v206
      %v259 = vunpack.c.h.b16 %v206
      %v260 = vunpack.c.l.b16 %v207
      %v261 = vunpack.c.h.b16 %v207
      %v262 = vunpack.c.l.b16 %v208
      %v263 = vunpack.c.h.b16 %v208
      %v264 = vunpack.c.l.b16 %v209
      %v265 = vunpack.c.h.b16 %v209
      %v266 = vunpack.c.l.b16 %v210
      %v267 = vunpack.c.h.b16 %v210
      %v268 = vunpack.c.l.b16 %v211
      %v269 = vunpack.c.h.b16 %v211
      %v270 = vunpack.c.l.b16 %v212
      %v271 = vunpack.c.h.b16 %v212
      %v272 = vunpack.c.l.b16 %v213
      %v273 = vunpack.c.h.b16 %v213
      %v274 = vunpack.c.l.b16 %v214
      %v275 = vunpack.c.h.b16 %v214
      %v276 = vunpack.c.l.b16 %v215
      %v277 = vunpack.c.h.b16 %v215
      %v278 = vunpack.c.l.b16 %v216
      %v279 = vunpack.c.h.b16 %v216
      %v280 = vunpack.c.l.b16 %v217
      %v281 = vunpack.c.h.b16 %v217
      %v282 = vunpack.c.l.b16 %v218
      %v283 = vunpack.c.h.b16 %v218
      %v284 = vunpack.c.l.b16 %v219
      %v285 = vunpack.c.h.b16 %v219
      %v286 = vunpack.c.l.b16 %v220
      %v287 = vunpack.c.h.b16 %v220
      %v288 = vpack.c.b16 %v258, %v256
      %v289 = vpack.c.b16 %v259, %v257
      %v290 = vpack.c.b16 %v262, %v260
      %v291 = vpack.c.b16 %v263, %v261
      %v292 = vpack.c.b16 %v266, %v264
      %v293 = vpack.c.b16 %v267, %v265
      %v294 = vpack.c.b16 %v270, %v268
      %v295 = vpack.c.b16 %v271, %v269
      %v296 = vpack.c.b16 %v274, %v272
      %v297 = vpack.c.b16 %v275, %v273
      %v298 = vpack.c.b16 %v278, %v276
      %v299 = vpack.c.b16 %v279, %v277
      %v300 = vpack.c.b16 %v282, %v280
      %v301 = vpack.c.b16 %v283, %v281
      %v302 = vpack.c.b16 %v286, %v284
      %v303 = vpack.c.b16 %v287, %v285
      %v331 = vunpack.c.l.b16 %v221
      %v332 = vunpack.c.l.b16 %v222
      %v333 = vunpack.c.l.b16 %v223
      %v334 = vunpack.c.l.b16 %v224
      %v335 = vunpack.c.l.b16 %v225
      %v336 = vunpack.c.l.b16 %v226
      %v337 = vunpack.c.l.b16 %v227
      %v338 = vunpack.c.l.b16 %v228
      %v339 = vunpack.c.l.b16 %v229
      %v340 = vunpack.c.l.b16 %v230
      %v341 = vunpack.c.l.b16 %v231
      %v342 = vunpack.c.l.b16 %v232
      %v343 = vunpack.c.l.b16 %v233
      %v344 = vunpack.c.l.b16 %v234
      %v345 = vunpack.c.l.b16 %v235
      %v346 = vunpack.c.l.b16 %v236
      %v347 = vunpack.c.l.b16 %v237
      %v348 = vunpack.c.l.b16 %v238
      %v349 = vunpack.c.l.b16 %v239
      %v350 = vpack.c.b16 %v332, %v331
      %v351 = vpack.c.b16 %v334, %v333
      %v352 = vpack.c.b16 %v336, %v335
      %v353 = vpack.c.b16 %v338, %v337
      %v354 = vpack.c.b16 %v340, %v339
      %v355 = vpack.c.b16 %v342, %v341
      %v356 = vpack.c.b16 %v344, %v343
      %v357 = vpack.c.b16 %v346, %v345
      %v358 = vpack.c.b16 %v348, %v347
      %v359 = vpack.c.b16 %v349, %v349
      %vm369 = vcmask 154624
      %v371 = vsel %vm369, %v289, 0
      %v374 = vsel %vm369, %v291, 0
      %v377 = vsel %vm369, %v293, 0
      %v380 = vsel %vm369, %v295, 0
      %v383 = vsel %vm369, %v297, 0
      %v386 = vsel %vm369, %v299, 0
      %v389 = vsel %vm369, %v301, 0
      %v392 = vsel %vm369, %v303, 0
      %vm394 = vcmask 1040384
      %vm395 = vcmask 1041408
      %v396 = vsel %vm394, 4294967295, 65535
      %v397 = vsel %vm395, %v396, 0
      %v399 = vand.u32 %v359, %v397
      %401 = vmatprep.subr.bf16.mxu0 0
      %402 = vmatpush1.bf16.msra.mxu0 %v350
      %403 = vmatprep.subr.bf16.mxu0 0
      %404 = vmatpush1.bf16.msra.mxu0 %v351
      %405 = vmatprep.subr.bf16.mxu0 0
      %406 = vmatpush1.bf16.msra.mxu0 %v352
      %407 = vmatprep.subr.bf16.mxu0 0
      %408 = vmatpush1.bf16.msra.mxu0 %v353
      %409 = vmatprep.subr.bf16.mxu0 0
      %410 = vmatpush1.bf16.msra.mxu0 %v354
      %411 = vmatprep.subr.bf16.mxu0 0
      %412 = vmatpush1.bf16.msra.mxu0 %v355
      %413 = vmatprep.subr.bf16.mxu0 0
      %414 = vmatpush1.bf16.msra.mxu0 %v356
      %415 = vmatprep.subr.bf16.mxu0 0
      %416 = vmatpush1.bf16.msra.mxu0 %v357
      %417 = vmatprep.subr.bf16.mxu0 0
      %418 = vmatpush1.bf16.msra.mxu0 %v358
      %419 = vmatprep.subr.bf16.mxu0 0
      %420 = vmatpush1.bf16.msra.mxu0 %v399
      %421 = vmatprep.subr.bf16.mxu0 0
      %422 = vmatpush1.bf16.msra.mxu0 0
      %423 = vmatprep.subr.bf16.mxu0 0
      %424 = vmatpush1.bf16.msra.mxu0 0
      %425 = vmatprep.subr.bf16.mxu0 0
      %426 = vmatpush1.bf16.msra.mxu0 0
      %427 = vmatprep.subr.bf16.mxu0 0
      %428 = vmatpush1.bf16.msra.mxu0 0
      %429 = vmatprep.subr.bf16.mxu0 0
      %430 = vmatpush1.bf16.msra.mxu0 0
      %431 = vmatprep.subr.bf16.mxu0 0
      %432 = vmatpush1.bf16.msra.mxu0 0
      %433 = vmatprep.mubr.bf16.mxu0 %v371
      %434 = vmatmul.mubr.bf16.gmra.mrb[0].mxu0 %v288
      %v435 = vpop.f32.mrb[0].mxu0
      %v436 = vadd.f32 0.0, %v435
      %v437 = vpop.f32.mrb[0].mxu0
      %v438 = vpop.f32.mrb[0].mxu0
      %v439 = vadd.f32 0.0, %v438
      %v440 = vpop.f32.mrb[0].mxu0
      %441 = vmatprep.mubr.bf16.mxu0 %v374
      %442 = vmatmul.mubr.bf16.gmra.mrb[0].mxu0 %v290
      %v443 = vpop.f32.mrb[0].mxu0
      %v444 = vadd.f32 0.0, %v443
      %v445 = vpop.f32.mrb[0].mxu0
      %v446 = vpop.f32.mrb[0].mxu0
      %v447 = vadd.f32 0.0, %v446
      %v448 = vpop.f32.mrb[0].mxu0
      %449 = vmatprep.mubr.bf16.mxu0 %v377
      %450 = vmatmul.mubr.bf16.gmra.mrb[0].mxu0 %v292
      %v451 = vpop.f32.mrb[0].mxu0
      %v452 = vadd.f32 0.0, %v451
      %v453 = vpop.f32.mrb[0].mxu0
      %v454 = vpop.f32.mrb[0].mxu0
      %v455 = vadd.f32 0.0, %v454
      %v456 = vpop.f32.mrb[0].mxu0
      %457 = vmatprep.mubr.bf16.mxu0 %v380
      %458 = vmatmul.mubr.bf16.gmra.mrb[0].mxu0 %v294
      %v459 = vpop.f32.mrb[0].mxu0
      %v460 = vadd.f32 0.0, %v459
      %v461 = vpop.f32.mrb[0].mxu0
      %v462 = vpop.f32.mrb[0].mxu0
      %v463 = vadd.f32 0.0, %v462
      %v464 = vpop.f32.mrb[0].mxu0
      %465 = vmatprep.mubr.bf16.mxu0 %v383
      %466 = vmatmul.mubr.bf16.gmra.mrb[0].mxu0 %v296
      %v467 = vpop.f32.mrb[0].mxu0
      %v468 = vadd.f32 0.0, %v467
      %v469 = vpop.f32.mrb[0].mxu0
      %v470 = vpop.f32.mrb[0].mxu0
      %v471 = vadd.f32 0.0, %v470
      %v472 = vpop.f32.mrb[0].mxu0
      %473 = vmatprep.mubr.bf16.mxu0 %v386
      %474 = vmatmul.mubr.bf16.gmra.mrb[0].mxu0 %v298
      %v475 = vpop.f32.mrb[0].mxu0
      %v476 = vadd.f32 0.0, %v475
      %v477 = vpop.f32.mrb[0].mxu0
      %v478 = vpop.f32.mrb[0].mxu0
      %v479 = vadd.f32 0.0, %v478
      %v480 = vpop.f32.mrb[0].mxu0
      %481 = vmatprep.mubr.bf16.mxu0 %v389
      %482 = vmatmul.mubr.bf16.gmra.mrb[0].mxu0 %v300
      %v483 = vpop.f32.mrb[0].mxu0
      %v484 = vadd.f32 0.0, %v483
      %v485 = vpop.f32.mrb[0].mxu0
      %v486 = vpop.f32.mrb[0].mxu0
      %v487 = vadd.f32 0.0, %v486
      %v488 = vpop.f32.mrb[0].mxu0
      %489 = vmatprep.mubr.bf16.mxu0 %v392
      %490 = vmatmul.mubr.bf16.gmra.mrb[0].mxu0 %v302
      %v491 = vpop.f32.mrb[0].mxu0
      %v492 = vadd.f32 0.0, %v491
      %v493 = vpop.f32.mrb[0].mxu0
      %v494 = vpop.f32.mrb[0].mxu0
      %v495 = vadd.f32 0.0, %v494
      %v496 = vpop.f32.mrb[0].mxu0
      %497 = vdwg.mxu0
      %v498 = vld [vmem:[%s2] sm:$0x1]
      %v500 = vlaneseq
      %v501 = vshrl.u32 %v500, 7
      %v502 = vsub.s32 0, %v501
      %v503 = vrot.slane %v498, %v502
      %v505 = vmul.f32 %v436, %v503
      %v506 = vmul.f32 %v439, %v503
      %v507 = vmul.f32 %v444, %v503
      %v508 = vmul.f32 %v447, %v503
      %v509 = vmul.f32 %v452, %v503
      %v510 = vmul.f32 %v455, %v503
      %v511 = vmul.f32 %v460, %v503
      %v512 = vmul.f32 %v463, %v503
      %v513 = vmul.f32 %v468, %v503
      %v514 = vmul.f32 %v471, %v503
      %v515 = vmul.f32 %v476, %v503
      %v516 = vmul.f32 %v479, %v503
      %v517 = vmul.f32 %v484, %v503
      %v518 = vmul.f32 %v487, %v503
      %v519 = vmul.f32 %v492, %v503
      %v520 = vmul.f32 %v495, %v503
      %v521 = vld [vmem:[%s3] sm:$0x1]
      %v523 = vlaneseq
      %v524 = vshrl.u32 %v523, 7
      %v525 = vsub.s32 0, %v524
      %v526 = vrot.slane %v521, %v525
      %v528 = vadd.f32 %v505, %v526
      %v529 = vadd.f32 %v506, %v526
      %v530 = vadd.f32 %v507, %v526
      %v531 = vadd.f32 %v508, %v526
      %v532 = vadd.f32 %v509, %v526
      %v533 = vadd.f32 %v510, %v526
      %v534 = vadd.f32 %v511, %v526
      %v535 = vadd.f32 %v512, %v526
      %v536 = vadd.f32 %v513, %v526
      %v537 = vadd.f32 %v514, %v526
      %v538 = vadd.f32 %v515, %v526
      %v539 = vadd.f32 %v516, %v526
      %v540 = vadd.f32 %v517, %v526
      %v541 = vadd.f32 %v518, %v526
      %v542 = vadd.f32 %v519, %v526
      %v543 = vadd.f32 %v520, %v526
      %v544 = vmax.f32 %v528, 0.0
      %v545 = vmax.f32 %v529, 0.0
      %v546 = vmax.f32 %v530, 0.0
      %v547 = vmax.f32 %v531, 0.0
      %v548 = vmax.f32 %v532, 0.0
      %v549 = vmax.f32 %v533, 0.0
      %v550 = vmax.f32 %v534, 0.0
      %v551 = vmax.f32 %v535, 0.0
      %v552 = vmax.f32 %v536, 0.0
      %v553 = vmax.f32 %v537, 0.0
      %v554 = vmax.f32 %v538, 0.0
      %v555 = vmax.f32 %v539, 0.0
      %v556 = vmax.f32 %v540, 0.0
      %v557 = vmax.f32 %v541, 0.0
      %v558 = vmax.f32 %v542, 0.0
      %v559 = vmax.f32 %v543, 0.0
      %v560 = vpack.c.bf16 %v545, %v544
      %v561 = vpack.c.bf16 %v547, %v546
      %v562 = vpack.c.bf16 %v549, %v548
      %v563 = vpack.c.bf16 %v551, %v550
      %v564 = vpack.c.bf16 %v553, %v552
      %v565 = vpack.c.bf16 %v555, %v554
      %v566 = vpack.c.bf16 %v557, %v556
      %v567 = vpack.c.bf16 %v559, %v558
      %v576 = vunpack.c.l.b16 %v560
      %v577 = vunpack.c.h.b16 %v560
      %v578 = vunpack.c.l.b16 %v561
      %v579 = vunpack.c.h.b16 %v561
      %v580 = vunpack.c.l.b16 %v562
      %v581 = vunpack.c.h.b16 %v562
      %v582 = vunpack.c.l.b16 %v563
      %v583 = vunpack.c.h.b16 %v563
      %v584 = vunpack.c.l.b16 %v564
      %v585 = vunpack.c.h.b16 %v564
      %v586 = vunpack.c.l.b16 %v565
      %v587 = vunpack.c.h.b16 %v565
      %v588 = vunpack.c.l.b16 %v566
      %v589 = vunpack.c.h.b16 %v566
      %v590 = vunpack.c.l.b16 %v567
      %v591 = vunpack.c.h.b16 %v567
      %v592 = vpack.c.b16 %v576, %v576
      %v593 = vpack.c.b16 %v577, %v577
      %v594 = vpack.c.b16 %v578, %v578
      %v595 = vpack.c.b16 %v579, %v579
      %v596 = vpack.c.b16 %v580, %v580
      %v597 = vpack.c.b16 %v581, %v581
      %v598 = vpack.c.b16 %v582, %v582
      %v599 = vpack.c.b16 %v583, %v583
      %v600 = vpack.c.b16 %v584, %v584
      %v601 = vpack.c.b16 %v585, %v585
      %v602 = vpack.c.b16 %v586, %v586
      %v603 = vpack.c.b16 %v587, %v587
      %v604 = vpack.c.b16 %v588, %v588
      %v605 = vpack.c.b16 %v589, %v589
      %v606 = vpack.c.b16 %v590, %v590
      %v607 = vpack.c.b16 %v591, %v591
      %vm624 = vcmask 27648
      %625 = vst.msk [vmem:[%s202] sm:$0xf] %vm624, %v592
      %626 = vst.msk [vmem:[%s202 + $0x4] sm:$0xf] %vm624, %v593
      %627 = vst.msk [vmem:[%s202 + $0x8] sm:$0xf] %vm624, %v594
      %628 = vst.msk [vmem:[%s202 + $0xc] sm:$0xf] %vm624, %v595
      %629 = vst.msk [vmem:[%s202 + $0x10] sm:$0xf] %vm624, %v596
      %630 = vst.msk [vmem:[%s202 + $0x14] sm:$0xf] %vm624, %v597
      %631 = vst.msk [vmem:[%s202 + $0x18] sm:$0xf] %vm624, %v598
      %632 = vst.msk [vmem:[%s202 + $0x1c] sm:$0xf] %vm624, %v599
      %633 = vst.msk [vmem:[%s202 + $0x20] sm:$0xf] %vm624, %v600
      %634 = vst.msk [vmem:[%s202 + $0x24] sm:$0xf] %vm624, %v601
      %635 = vst.msk [vmem:[%s202 + $0x28] sm:$0xf] %vm624, %v602
      %636 = vst.msk [vmem:[%s202 + $0x2c] sm:$0xf] %vm624, %v603
      %637 = vst.msk [vmem:[%s202 + $0x30] sm:$0xf] %vm624, %v604
      %638 = vst.msk [vmem:[%s202 + $0x34] sm:$0xf] %vm624, %v605
      %639 = vst.msk [vmem:[%s202 + $0x38] sm:$0xf] %vm624, %v606
      %640 = vst.msk [vmem:[%s202 + $0x3c] sm:$0xf] %vm624, %v607
      %s641 = smul.u32 16, %s15
      %p642 = scmp.lt.s32.totalorder %s641, 63
      %s643 = scalar_select %p642, %s641, 63
      %s644 = smul.addr %s643, 4
      %s645 = scalar_lea.vmem %s4, %s644
      // Predicated region
      $region37: #{forward.20} parent=35 // pred_check
        %p646 = pneg %p122
      $region38: #{forward.20} parent=35 // pred_check_branch
        %648 = sbr.rel (%p646) target = $region40
      $region39: #{forward.20} parent=35 // pred_region
        %s649 = smul.u32 16, %s15
      $region40: #{forward.20} parent=35 // pred_fallthru
        _
    $region36: #{forward.20} parent=5 // pred_fallthru
      _
    %p650 = scmp.le.s32.totalorder 2, %s10
    // Predicated region
    $region41: #{forward.20} parent=5 // pred_check
      %p651 = pneg %p650
    $region42: #{forward.20} parent=5 // pred_check_branch
      %653 = sbr.rel (%p651) target = $region44
    $region43: #{forward.20} parent=5 // pred_region
      %s654 = ssub.s32 %s10, 2
      // Predicated region
      $region45: #{forward.20} parent=43 // pred_check
        %p655 = pneg %p128
      $region46: #{forward.20} parent=43 // pred_check_branch
        %657 = sbr.rel (%p655) target = $region48
      $region47: #{forward.20} parent=43 // pred_region
        %s658 = smul.u32 16, %s16
        %p659 = scmp.lt.s32.totalorder %s658, 63
        %s660 = scalar_select %p659, %s658, 63
        %s661 = smul.addr %s660, 4
        %s662 = scalar_lea.vmem %s4, %s661
      $region48: #{forward.20} parent=43 // pred_fallthru
        _
    $region44: #{forward.20} parent=5 // pred_fallthru
      _
  $region6: #{forward.20} parent=0 // loop_footer
    %s14 = sadd.s32 1, %s10
  $region7: #{forward.20} parent=0 // loop_footer_branch
    %9 = sbr.rel target = $region3
  $region8: #{forward.20} parent=0 // loop_exit
    _

// kernel: forward.21
$region0: #{forward.21}
  #allocation0 [shape = 'u32[]', space=smem, size = 0x4, offset = 0x4, fixed_abs, tag = 'smem constant byte address 0x4 - core index']
  #allocation1 [shape = 'u32[144,128]{1,0:T(1,128)}', space=vmem, size = 0x12000, scoped, tag = 'internal scratch']
  %s0 = inlined_call_operand.vmem [shape: bf16[4,128], index: 0, kind: input, shape index: {}]
  %s1 = inlined_call_operand.vmem [shape: bf16[4,128], index: 1, kind: input, shape index: {}]
  %s2 = inlined_call_operand.vmem [shape: bf16[4,128], index: 2, kind: input, shape index: {}]
  %s3 = inlined_call_operand.vmem [shape: bf16[4,128], index: 3, kind: input, shape index: {}]
  %s4 = inlined_call_operand.vmem [shape: bf16[4,128], index: 4, kind: input, shape index: {}]
  %s5 = inlined_call_operand.vmem [shape: bf16[4,128], index: 5, kind: input, shape index: {}]
  %s6 = inlined_call_operand.vmem [shape: bf16[4,128], index: 6, kind: input, shape index: {}]
  %s7 = inlined_call_operand.vmem [shape: bf16[4,128], index: 7, kind: input, shape index: {}]
  %s8 = inlined_call_operand.vmem [shape: bf16[4,128], index: 8, kind: input, shape index: {}]
  %s9 = inlined_call_operand.vmem [shape: bf16[4,128], index: 9, kind: output, shape index: {}]
  %s10 = sld [smem:[#allocation0]]
  $region46: #{forward.21} parent=0
    _
  %s12 = ssub.s32 1, %s10
  %s13 = scalar_select 0, %s12, %s10
  // Predicated region
  $region2: #{forward.21} parent=0 // pred_check
    _
  $region3: #{forward.21} parent=0 // pred_check_branch
    %15 = sbr.rel (0) target = $region5
  $region4: #{forward.21} parent=0 // pred_region
    _
  $region5: #{forward.21} parent=0 // pred_fallthru
    _
  // Predicated region
  $region6: #{forward.21} parent=0 // pred_check
    _
  $region7: #{forward.21} parent=0 // pred_check_branch
    %17 = sbr.rel (0) target = $region9
  $region8: #{forward.21} parent=0 // pred_region
    _
  $region9: #{forward.21} parent=0 // pred_fallthru
    _
  // Predicated region
  $region10: #{forward.21} parent=0 // pred_check
    _
  $region11: #{forward.21} parent=0 // pred_check_branch
    %19 = sbr.rel (0) target = $region13
  $region12: #{forward.21} parent=0 // pred_region
    _
  $region13: #{forward.21} parent=0 // pred_fallthru
    _
  // Predicated region
  $region14: #{forward.21} parent=0 // pred_check
    _
  $region15: #{forward.21} parent=0 // pred_check_branch
    %21 = sbr.rel (0) target = $region17
  $region16: #{forward.21} parent=0 // pred_region
    _
  $region17: #{forward.21} parent=0 // pred_fallthru
    _
  // Predicated region
  $region18: #{forward.21} parent=0 // pred_check
    _
  $region19: #{forward.21} parent=0 // pred_check_branch
    %23 = sbr.rel (0) target = $region21
  $region20: #{forward.21} parent=0 // pred_region
    _
  $region21: #{forward.21} parent=0 // pred_fallthru
    _
  // Predicated region
  $region22: #{forward.21} parent=0 // pred_check
    _
  $region23: #{forward.21} parent=0 // pred_check_branch
    %25 = sbr.rel (0) target = $region25
  $region24: #{forward.21} parent=0 // pred_region
    _
  $region25: #{forward.21} parent=0 // pred_fallthru
    _
  // Predicated region
  $region26: #{forward.21} parent=0 // pred_check
    _
  $region27: #{forward.21} parent=0 // pred_check_branch
    %27 = sbr.rel (0) target = $region29
  $region28: #{forward.21} parent=0 // pred_region
    _
  $region29: #{forward.21} parent=0 // pred_fallthru
    _
  // Predicated region
  $region30: #{forward.21} parent=0 // pred_check
    _
  $region31: #{forward.21} parent=0 // pred_check_branch
    %29 = sbr.rel (0) target = $region33
  $region32: #{forward.21} parent=0 // pred_region
    _
  $region33: #{forward.21} parent=0 // pred_fallthru
    _
  // Predicated region
  $region34: #{forward.21} parent=0 // pred_check
    _
  $region35: #{forward.21} parent=0 // pred_check_branch
    %31 = sbr.rel (0) target = $region37
  $region36: #{forward.21} parent=0 // pred_region
    _
  $region37: #{forward.21} parent=0 // pred_fallthru
    _
  %v32 = vld [vmem:[%s0] sm:$0x3]
  %v33 = vld [vmem:[%s1] sm:$0x3]
  %v34 = vmax.bf16 %v32, %v33
  %v35 = vld [vmem:[%s2] sm:$0x3]
  %v36 = vmax.bf16 %v34, %v35
  %v37 = vld [vmem:[%s3] sm:$0x3]
  %v38 = vmax.bf16 %v36, %v37
  %v39 = vld [vmem:[%s4] sm:$0x3]
  %v40 = vmax.bf16 %v38, %v39
  %v41 = vld [vmem:[%s5] sm:$0x3]
  %v42 = vmax.bf16 %v40, %v41
  %v43 = vld [vmem:[%s6] sm:$0x3]
  %v44 = vmax.bf16 %v42, %v43
  %v45 = vld [vmem:[%s7] sm:$0x3]
  %v46 = vmax.bf16 %v44, %v45
  %v47 = vld [vmem:[%s8] sm:$0x3]
  %v48 = vmax.bf16 %v46, %v47
  %49 = vst [vmem:[%s9] sm:$0x3] %v48
  // Predicated region
  $region38: #{forward.21} parent=0 // pred_check
    _
  $region39: #{forward.21} parent=0 // pred_check_branch
    %51 = sbr.rel (0) target = $region41
  $region40: #{forward.21} parent=0 // pred_region
    _
  $region41: #{forward.21} parent=0 // pred_fallthru
    _
  // Predicated region
  $region42: #{forward.21} parent=0 // pred_check
    _
  $region43: #{forward.21} parent=0 // pred_check_branch
    %53 = sbr.rel (0) target = $region45
  $region44: #{forward.21} parent=0 // pred_region
    _
  $region45: #{forward.21} parent=0 // pred_fallthru
    _

// kernel: forward.22
$region0: #{forward.22}
  #allocation0 [shape = 'u32[]', space=smem, size = 0x4, offset = 0x4, fixed_abs, tag = 'smem constant byte address 0x4 - core index']
  #allocation1 [shape = 'u32[144,128]{1,0:T(1,128)}', space=vmem, size = 0x12000, scoped, tag = 'internal scratch']
  %s0 = inlined_call_operand.vmem [shape: bf16[128,4], index: 0, kind: input, shape index: {}]
  %s1 = inlined_call_operand.vmem [shape: bf16[4,20], index: 1, kind: input, shape index: {}]
  %s2 = inlined_call_operand.vmem [shape: f32[1,20], index: 2, kind: input, shape index: {}]
  %s3 = inlined_call_operand.vmem [shape: f32[1,20], index: 3, kind: input, shape index: {}]
  %s4 = inlined_call_operand.vmem [shape: f32[1,20], index: 4, kind: input, shape index: {}]
  %s5 = inlined_call_operand.vmem [shape: bf16[128,20], index: 5, kind: output, shape index: {}]
  %s6 = sld [smem:[#allocation0]]
  $region30: #{forward.22} parent=0
    _
  %s8 = ssub.s32 1, %s6
  %s9 = scalar_select 0, %s8, %s6
  // Predicated region
  $region2: #{forward.22} parent=0 // pred_check
    _
  $region3: #{forward.22} parent=0 // pred_check_branch
    %11 = sbr.rel (0) target = $region5
  $region4: #{forward.22} parent=0 // pred_region
    _
  $region5: #{forward.22} parent=0 // pred_fallthru
    _
  // Predicated region
  $region6: #{forward.22} parent=0 // pred_check
    _
  $region7: #{forward.22} parent=0 // pred_check_branch
    %13 = sbr.rel (0) target = $region9
  $region8: #{forward.22} parent=0 // pred_region
    _
  $region9: #{forward.22} parent=0 // pred_fallthru
    _
  // Predicated region
  $region10: #{forward.22} parent=0 // pred_check
    _
  $region11: #{forward.22} parent=0 // pred_check_branch
    %15 = sbr.rel (0) target = $region13
  $region12: #{forward.22} parent=0 // pred_region
    _
  $region13: #{forward.22} parent=0 // pred_fallthru
    _
  // Predicated region
  $region14: #{forward.22} parent=0 // pred_check
    _
  $region15: #{forward.22} parent=0 // pred_check_branch
    %17 = sbr.rel (0) target = $region17
  $region16: #{forward.22} parent=0 // pred_region
    _
  $region17: #{forward.22} parent=0 // pred_fallthru
    _
  // Predicated region
  $region18: #{forward.22} parent=0 // pred_check
    _
  $region19: #{forward.22} parent=0 // pred_check_branch
    %19 = sbr.rel (0) target = $region21
  $region20: #{forward.22} parent=0 // pred_region
    _
  $region21: #{forward.22} parent=0 // pred_fallthru
    _
  %v21 = vld [vmem:[%s0] sm:$0xf]
  %v22 = vld [vmem:[%s0 + $0x4] sm:$0xf]
  %v23 = vld [vmem:[%s0 + $0x8] sm:$0xf]
  %v24 = vld [vmem:[%s0 + $0xc] sm:$0xf]
  %v25 = vld [vmem:[%s0 + $0x10] sm:$0xf]
  %v26 = vld [vmem:[%s0 + $0x14] sm:$0xf]
  %v27 = vld [vmem:[%s0 + $0x18] sm:$0xf]
  %v28 = vld [vmem:[%s0 + $0x1c] sm:$0xf]
  %v29 = vld [vmem:[%s0 + $0x20] sm:$0xf]
  %v30 = vld [vmem:[%s0 + $0x24] sm:$0xf]
  %v31 = vld [vmem:[%s0 + $0x28] sm:$0xf]
  %v32 = vld [vmem:[%s0 + $0x2c] sm:$0xf]
  %v33 = vld [vmem:[%s0 + $0x30] sm:$0xf]
  %v34 = vld [vmem:[%s0 + $0x34] sm:$0xf]
  %v35 = vld [vmem:[%s0 + $0x38] sm:$0xf]
  %v36 = vld [vmem:[%s0 + $0x3c] sm:$0xf]
  %v37 = vld [vmem:[%s1] sm:$0x3]
  %v54 = vunpack.c.l.b16 %v21
  %v55 = vunpack.c.l.b16 %v22
  %v56 = vunpack.c.l.b16 %v23
  %v57 = vunpack.c.l.b16 %v24
  %v58 = vunpack.c.l.b16 %v25
  %v59 = vunpack.c.l.b16 %v26
  %v60 = vunpack.c.l.b16 %v27
  %v61 = vunpack.c.l.b16 %v28
  %v62 = vunpack.c.l.b16 %v29
  %v63 = vunpack.c.l.b16 %v30
  %v64 = vunpack.c.l.b16 %v31
  %v65 = vunpack.c.l.b16 %v32
  %v66 = vunpack.c.l.b16 %v33
  %v67 = vunpack.c.l.b16 %v34
  %v68 = vunpack.c.l.b16 %v35
  %v69 = vunpack.c.l.b16 %v36
  %v70 = vpack.c.b16 %v55, %v54
  %v71 = vpack.c.b16 %v57, %v56
  %v72 = vpack.c.b16 %v59, %v58
  %v73 = vpack.c.b16 %v61, %v60
  %v74 = vpack.c.b16 %v63, %v62
  %v75 = vpack.c.b16 %v65, %v64
  %v76 = vpack.c.b16 %v67, %v66
  %v77 = vpack.c.b16 %v69, %v68
  %vm78 = vcmask 31744
  %v80 = vsel %vm78, %v70, 0
  %v83 = vsel %vm78, %v71, 0
  %v86 = vsel %vm78, %v72, 0
  %v89 = vsel %vm78, %v73, 0
  %v92 = vsel %vm78, %v74, 0
  %v95 = vsel %vm78, %v75, 0
  %v98 = vsel %vm78, %v76, 0
  %v101 = vsel %vm78, %v77, 0
  %vm103 = vcmask 1041408
  %v105 = vsel %vm103, %v37, 0
  %107 = vmatprep.subr.bf16.mxu0 0
  %108 = vmatpush1.bf16.msra.mxu0 %v105
  %109 = vmatprep.subr.bf16.mxu0 0
  %110 = vmatpush1.bf16.msra.mxu0 0
  %111 = vmatprep.subr.bf16.mxu0 0
  %112 = vmatpush1.bf16.msra.mxu0 0
  %113 = vmatprep.subr.bf16.mxu0 0
  %114 = vmatpush1.bf16.msra.mxu0 0
  %115 = vmatprep.subr.bf16.mxu0 0
  %116 = vmatpush1.bf16.msra.mxu0 0
  %117 = vmatprep.subr.bf16.mxu0 0
  %118 = vmatpush1.bf16.msra.mxu0 0
  %119 = vmatprep.subr.bf16.mxu0 0
  %120 = vmatpush1.bf16.msra.mxu0 0
  %121 = vmatprep.subr.bf16.mxu0 0
  %122 = vmatpush1.bf16.msra.mxu0 0
  %123 = vmatprep.subr.bf16.mxu0 0
  %124 = vmatpush1.bf16.msra.mxu0 0
  %125 = vmatprep.subr.bf16.mxu0 0
  %126 = vmatpush1.bf16.msra.mxu0 0
  %127 = vmatprep.subr.bf16.mxu0 0
  %128 = vmatpush1.bf16.msra.mxu0 0
  %129 = vmatprep.subr.bf16.mxu0 0
  %130 = vmatpush1.bf16.msra.mxu0 0
  %131 = vmatprep.subr.bf16.mxu0 0
  %132 = vmatpush1.bf16.msra.mxu0 0
  %133 = vmatprep.subr.bf16.mxu0 0
  %134 = vmatpush1.bf16.msra.mxu0 0
  %135 = vmatprep.subr.bf16.mxu0 0
  %136 = vmatpush1.bf16.msra.mxu0 0
  %137 = vmatprep.subr.bf16.mxu0 0
  %138 = vmatpush1.bf16.msra.mxu0 0
  %139 = vmatprep.mubr.bf16.mxu0 0
  %140 = vmatmul.mubr.bf16.gmra.mrb[0].mxu0 %v80
  %v141 = vpop.f32.mrb[0].mxu0
  %v142 = vadd.f32 0.0, %v141
  %v143 = vpop.f32.mrb[0].mxu0
  %v144 = vpop.f32.mrb[0].mxu0
  %v145 = vadd.f32 0.0, %v144
  %v146 = vpop.f32.mrb[0].mxu0
  %147 = vmatprep.mubr.bf16.mxu0 0
  %148 = vmatmul.mubr.bf16.gmra.mrb[0].mxu0 %v83
  %v149 = vpop.f32.mrb[0].mxu0
  %v150 = vadd.f32 0.0, %v149
  %v151 = vpop.f32.mrb[0].mxu0
  %v152 = vpop.f32.mrb[0].mxu0
  %v153 = vadd.f32 0.0, %v152
  %v154 = vpop.f32.mrb[0].mxu0
  %155 = vmatprep.mubr.bf16.mxu0 0
  %156 = vmatmul.mubr.bf16.gmra.mrb[0].mxu0 %v86
  %v157 = vpop.f32.mrb[0].mxu0
  %v158 = vadd.f32 0.0, %v157
  %v159 = vpop.f32.mrb[0].mxu0
  %v160 = vpop.f32.mrb[0].mxu0
  %v161 = vadd.f32 0.0, %v160
  %v162 = vpop.f32.mrb[0].mxu0
  %163 = vmatprep.mubr.bf16.mxu0 0
  %164 = vmatmul.mubr.bf16.gmra.mrb[0].mxu0 %v89
  %v165 = vpop.f32.mrb[0].mxu0
  %v166 = vadd.f32 0.0, %v165
  %v167 = vpop.f32.mrb[0].mxu0
  %v168 = vpop.f32.mrb[0].mxu0
  %v169 = vadd.f32 0.0, %v168
  %v170 = vpop.f32.mrb[0].mxu0
  %171 = vmatprep.mubr.bf16.mxu0 0
  %172 = vmatmul.mubr.bf16.gmra.mrb[0].mxu0 %v92
  %v173 = vpop.f32.mrb[0].mxu0
  %v174 = vadd.f32 0.0, %v173
  %v175 = vpop.f32.mrb[0].mxu0
  %v176 = vpop.f32.mrb[0].mxu0
  %v177 = vadd.f32 0.0, %v176
  %v178 = vpop.f32.mrb[0].mxu0
  %179 = vmatprep.mubr.bf16.mxu0 0
  %180 = vmatmul.mubr.bf16.gmra.mrb[0].mxu0 %v95
  %v181 = vpop.f32.mrb[0].mxu0
  %v182 = vadd.f32 0.0, %v181
  %v183 = vpop.f32.mrb[0].mxu0
  %v184 = vpop.f32.mrb[0].mxu0
  %v185 = vadd.f32 0.0, %v184
  %v186 = vpop.f32.mrb[0].mxu0
  %187 = vmatprep.mubr.bf16.mxu0 0
  %188 = vmatmul.mubr.bf16.gmra.mrb[0].mxu0 %v98
  %v189 = vpop.f32.mrb[0].mxu0
  %v190 = vadd.f32 0.0, %v189
  %v191 = vpop.f32.mrb[0].mxu0
  %v192 = vpop.f32.mrb[0].mxu0
  %v193 = vadd.f32 0.0, %v192
  %v194 = vpop.f32.mrb[0].mxu0
  %195 = vmatprep.mubr.bf16.mxu0 0
  %196 = vmatmul.mubr.bf16.gmra.mrb[0].mxu0 %v101
  %v197 = vpop.f32.mrb[0].mxu0
  %v198 = vadd.f32 0.0, %v197
  %v199 = vpop.f32.mrb[0].mxu0
  %v200 = vpop.f32.mrb[0].mxu0
  %v201 = vadd.f32 0.0, %v200
  %v202 = vpop.f32.mrb[0].mxu0
  %203 = vdwg.mxu0
  %v204 = vld [vmem:[%s2] sm:$0x1]
  %v206 = vlaneseq
  %v207 = vshrl.u32 %v206, 7
  %v208 = vsub.s32 0, %v207
  %v209 = vrot.slane %v204, %v208
  %v211 = vmul.f32 %v142, %v209
  %v212 = vmul.f32 %v145, %v209
  %v213 = vmul.f32 %v150, %v209
  %v214 = vmul.f32 %v153, %v209
  %v215 = vmul.f32 %v158, %v209
  %v216 = vmul.f32 %v161, %v209
  %v217 = vmul.f32 %v166, %v209
  %v218 = vmul.f32 %v169, %v209
  %v219 = vmul.f32 %v174, %v209
  %v220 = vmul.f32 %v177, %v209
  %v221 = vmul.f32 %v182, %v209
  %v222 = vmul.f32 %v185, %v209
  %v223 = vmul.f32 %v190, %v209
  %v224 = vmul.f32 %v193, %v209
  %v225 = vmul.f32 %v198, %v209
  %v226 = vmul.f32 %v201, %v209
  %v227 = vld [vmem:[%s3] sm:$0x1]
  %v229 = vlaneseq
  %v230 = vshrl.u32 %v229, 7
  %v231 = vsub.s32 0, %v230
  %v232 = vrot.slane %v227, %v231
  %v234 = vadd.f32 %v211, %v232
  %v235 = vadd.f32 %v212, %v232
  %v236 = vadd.f32 %v213, %v232
  %v237 = vadd.f32 %v214, %v232
  %v238 = vadd.f32 %v215, %v232
  %v239 = vadd.f32 %v216, %v232
  %v240 = vadd.f32 %v217, %v232
  %v241 = vadd.f32 %v218, %v232
  %v242 = vadd.f32 %v219, %v232
  %v243 = vadd.f32 %v220, %v232
  %v244 = vadd.f32 %v221, %v232
  %v245 = vadd.f32 %v222, %v232
  %v246 = vadd.f32 %v223, %v232
  %v247 = vadd.f32 %v224, %v232
  %v248 = vadd.f32 %v225, %v232
  %v249 = vadd.f32 %v226, %v232
  %v250 = vld [vmem:[%s4] sm:$0x1]
  %v252 = vlaneseq
  %v253 = vshrl.u32 %v252, 7
  %v254 = vsub.s32 0, %v253
  %v255 = vrot.slane %v250, %v254
  %v257 = vmax.f32 %v234, %v255
  %v258 = vmax.f32 %v235, %v255
  %v259 = vmax.f32 %v236, %v255
  %v260 = vmax.f32 %v237, %v255
  %v261 = vmax.f32 %v238, %v255
  %v262 = vmax.f32 %v239, %v255
  %v263 = vmax.f32 %v240, %v255
  %v264 = vmax.f32 %v241, %v255
  %v265 = vmax.f32 %v242, %v255
  %v266 = vmax.f32 %v243, %v255
  %v267 = vmax.f32 %v244, %v255
  %v268 = vmax.f32 %v245, %v255
  %v269 = vmax.f32 %v246, %v255
  %v270 = vmax.f32 %v247, %v255
  %v271 = vmax.f32 %v248, %v255
  %v272 = vmax.f32 %v249, %v255
  %v273 = vpack.c.bf16 %v258, %v257
  %v274 = vpack.c.bf16 %v260, %v259
  %v275 = vpack.c.bf16 %v262, %v261
  %v276 = vpack.c.bf16 %v264, %v263
  %v277 = vpack.c.bf16 %v266, %v265
  %v278 = vpack.c.bf16 %v268, %v267
  %v279 = vpack.c.bf16 %v270, %v269
  %v280 = vpack.c.bf16 %v272, %v271
  %v289 = vunpack.c.l.b16 %v273
  %v290 = vunpack.c.h.b16 %v273
  %v291 = vunpack.c.l.b16 %v274
  %v292 = vunpack.c.h.b16 %v274
  %v293 = vunpack.c.l.b16 %v275
  %v294 = vunpack.c.h.b16 %v275
  %v295 = vunpack.c.l.b16 %v276
  %v296 = vunpack.c.h.b16 %v276
  %v297 = vunpack.c.l.b16 %v277
  %v298 = vunpack.c.h.b16 %v277
  %v299 = vunpack.c.l.b16 %v278
  %v300 = vunpack.c.h.b16 %v278
  %v301 = vunpack.c.l.b16 %v279
  %v302 = vunpack.c.h.b16 %v279
  %v303 = vunpack.c.l.b16 %v280
  %v304 = vunpack.c.h.b16 %v280
  %v305 = vpack.c.b16 %v289, %v289
  %v306 = vpack.c.b16 %v290, %v290
  %v307 = vpack.c.b16 %v291, %v291
  %v308 = vpack.c.b16 %v292, %v292
  %v309 = vpack.c.b16 %v293, %v293
  %v310 = vpack.c.b16 %v294, %v294
  %v311 = vpack.c.b16 %v295, %v295
  %v312 = vpack.c.b16 %v296, %v296
  %v313 = vpack.c.b16 %v297, %v297
  %v314 = vpack.c.b16 %v298, %v298
  %v315 = vpack.c.b16 %v299, %v299
  %v316 = vpack.c.b16 %v300, %v300
  %v317 = vpack.c.b16 %v301, %v301
  %v318 = vpack.c.b16 %v302, %v302
  %v319 = vpack.c.b16 %v303, %v303
  %v320 = vpack.c.b16 %v304, %v304
  %vm337 = vcmask 158720
  %338 = vst.msk [vmem:[%s5] sm:$0xf] %vm337, %v305
  %339 = vst.msk [vmem:[%s5 + $0x4] sm:$0xf] %vm337, %v306
  %340 = vst.msk [vmem:[%s5 + $0x8] sm:$0xf] %vm337, %v307
  %341 = vst.msk [vmem:[%s5 + $0xc] sm:$0xf] %vm337, %v308
  %342 = vst.msk [vmem:[%s5 + $0x10] sm:$0xf] %vm337, %v309
  %343 = vst.msk [vmem:[%s5 + $0x14] sm:$0xf] %vm337, %v310
  %344 = vst.msk [vmem:[%s5 + $0x18] sm:$0xf] %vm337, %v311
  %345 = vst.msk [vmem:[%s5 + $0x1c] sm:$0xf] %vm337, %v312
  %346 = vst.msk [vmem:[%s5 + $0x20] sm:$0xf] %vm337, %v313
  %347 = vst.msk [vmem:[%s5 + $0x24] sm:$0xf] %vm337, %v314
  %348 = vst.msk [vmem:[%s5 + $0x28] sm:$0xf] %vm337, %v315
  %349 = vst.msk [vmem:[%s5 + $0x2c] sm:$0xf] %vm337, %v316
  %350 = vst.msk [vmem:[%s5 + $0x30] sm:$0xf] %vm337, %v317
  %351 = vst.msk [vmem:[%s5 + $0x34] sm:$0xf] %vm337, %v318
  %352 = vst.msk [vmem:[%s5 + $0x38] sm:$0xf] %vm337, %v319
  %353 = vst.msk [vmem:[%s5 + $0x3c] sm:$0xf] %vm337, %v320
  // Predicated region
  $region22: #{forward.22} parent=0 // pred_check
    _
  $region23: #{forward.22} parent=0 // pred_check_branch
    %355 = sbr.rel (0) target = $region25
  $region24: #{forward.22} parent=0 // pred_region
    _
  $region25: #{forward.22} parent=0 // pred_fallthru
    _
  // Predicated region
  $region26: #{forward.22} parent=0 // pred_check
    _
  $region27: #{forward.22} parent=0 // pred_check_branch
    %357 = sbr.rel (0) target = $region29
  $region28: #{forward.22} parent=0 // pred_region
    _
  $region29: #{forward.22} parent=0 // pred_fallthru
    _

// kernel: forward.23
$region0: #{forward.23}
  #allocation0 [shape = 'u32[]', space=smem, size = 0x4, offset = 0x4, fixed_abs, tag = 'smem constant byte address 0x4 - core index']
  #allocation1 [shape = 'u32[144,128]{1,0:T(1,128)}', space=vmem, size = 0x12000, scoped, tag = 'internal scratch']
  %s0 = inlined_call_operand.vmem [shape: bf16[128,36], index: 0, kind: input, shape index: {}]
  %s1 = inlined_call_operand.vmem [shape: bf16[36,4], index: 1, kind: input, shape index: {}]
  %s2 = inlined_call_operand.vmem [shape: f32[1,4], index: 2, kind: input, shape index: {}]
  %s3 = inlined_call_operand.vmem [shape: f32[1,4], index: 3, kind: input, shape index: {}]
  %s4 = inlined_call_operand.vmem [shape: bf16[128,4], index: 4, kind: output, shape index: {}]
  %s5 = sld [smem:[#allocation0]]
  $region26: #{forward.23} parent=0
    _
  %s7 = ssub.s32 1, %s5
  %s8 = scalar_select 0, %s7, %s5
  // Predicated region
  $region2: #{forward.23} parent=0 // pred_check
    _
  $region3: #{forward.23} parent=0 // pred_check_branch
    %10 = sbr.rel (0) target = $region5
  $region4: #{forward.23} parent=0 // pred_region
    _
  $region5: #{forward.23} parent=0 // pred_fallthru
    _
  // Predicated region
  $region6: #{forward.23} parent=0 // pred_check
    _
  $region7: #{forward.23} parent=0 // pred_check_branch
    %12 = sbr.rel (0) target = $region9
  $region8: #{forward.23} parent=0 // pred_region
    _
  $region9: #{forward.23} parent=0 // pred_fallthru
    _
  // Predicated region
  $region10: #{forward.23} parent=0 // pred_check
    _
  $region11: #{forward.23} parent=0 // pred_check_branch
    %14 = sbr.rel (0) target = $region13
  $region12: #{forward.23} parent=0 // pred_region
    _
  $region13: #{forward.23} parent=0 // pred_fallthru
    _
  // Predicated region
  $region14: #{forward.23} parent=0 // pred_check
    _
  $region15: #{forward.23} parent=0 // pred_check_branch
    %16 = sbr.rel (0) target = $region17
  $region16: #{forward.23} parent=0 // pred_region
    _
  $region17: #{forward.23} parent=0 // pred_fallthru
    _
  %v18 = vld [vmem:[%s0] sm:$0xf]
  %v19 = vld [vmem:[%s0 + $0x4] sm:$0xf]
  %v20 = vld [vmem:[%s0 + $0x8] sm:$0xf]
  %v21 = vld [vmem:[%s0 + $0xc] sm:$0xf]
  %v22 = vld [vmem:[%s0 + $0x10] sm:$0xf]
  %v23 = vld [vmem:[%s0 + $0x14] sm:$0xf]
  %v24 = vld [vmem:[%s0 + $0x18] sm:$0xf]
  %v25 = vld [vmem:[%s0 + $0x1c] sm:$0xf]
  %v26 = vld [vmem:[%s0 + $0x20] sm:$0xf]
  %v27 = vld [vmem:[%s0 + $0x24] sm:$0xf]
  %v28 = vld [vmem:[%s0 + $0x28] sm:$0xf]
  %v29 = vld [vmem:[%s0 + $0x2c] sm:$0xf]
  %v30 = vld [vmem:[%s0 + $0x30] sm:$0xf]
  %v31 = vld [vmem:[%s0 + $0x34] sm:$0xf]
  %v32 = vld [vmem:[%s0 + $0x38] sm:$0xf]
  %v33 = vld [vmem:[%s0 + $0x3c] sm:$0xf]
  %v34 = vld [vmem:[%s1] sm:$0xf]
  %v35 = vld [vmem:[%s1 + $0x4] sm:$0xf]
  %v36 = vld [vmem:[%s1 + $0x8] sm:$0xf]
  %v37 = vld [vmem:[%s1 + $0xc] sm:$0xf]
  %v38 = vld [vmem:[%s1 + $0x10] sm:$0x3]
  %v55 = vunpack.c.l.b16 %v18
  %v56 = vunpack.c.l.b16 %v19
  %v57 = vunpack.c.l.b16 %v20
  %v58 = vunpack.c.l.b16 %v21
  %v59 = vunpack.c.l.b16 %v22
  %v60 = vunpack.c.l.b16 %v23
  %v61 = vunpack.c.l.b16 %v24
  %v62 = vunpack.c.l.b16 %v25
  %v63 = vunpack.c.l.b16 %v26
  %v64 = vunpack.c.l.b16 %v27
  %v65 = vunpack.c.l.b16 %v28
  %v66 = vunpack.c.l.b16 %v29
  %v67 = vunpack.c.l.b16 %v30
  %v68 = vunpack.c.l.b16 %v31
  %v69 = vunpack.c.l.b16 %v32
  %v70 = vunpack.c.l.b16 %v33
  %v71 = vpack.c.b16 %v56, %v55
  %v72 = vpack.c.b16 %v58, %v57
  %v73 = vpack.c.b16 %v60, %v59
  %v74 = vpack.c.b16 %v62, %v61
  %v75 = vpack.c.b16 %v64, %v63
  %v76 = vpack.c.b16 %v66, %v65
  %v77 = vpack.c.b16 %v68, %v67
  %v78 = vpack.c.b16 %v70, %v69
  %v84 = vunpack.c.l.b16 %v34
  %v85 = vunpack.c.l.b16 %v35
  %v86 = vunpack.c.l.b16 %v36
  %v87 = vunpack.c.l.b16 %v37
  %v88 = vunpack.c.l.b16 %v38
  %v89 = vpack.c.b16 %v85, %v84
  %v90 = vpack.c.b16 %v87, %v86
  %v91 = vpack.c.b16 %v88, %v88
  %vm94 = vcmask 293888
  %v96 = vsel %vm94, %v71, 0
  %v99 = vsel %vm94, %v72, 0
  %v102 = vsel %vm94, %v73, 0
  %v105 = vsel %vm94, %v74, 0
  %v108 = vsel %vm94, %v75, 0
  %v111 = vsel %vm94, %v76, 0
  %v114 = vsel %vm94, %v77, 0
  %v117 = vsel %vm94, %v78, 0
  %vm119 = vcmask 1041408
  %v121 = vsel %vm119, %v91, 0
  %123 = vmatprep.subr.bf16.mxu0 0
  %124 = vmatpush1.bf16.msra.mxu0 %v89
  %125 = vmatprep.subr.bf16.mxu0 0
  %126 = vmatpush1.bf16.msra.mxu0 %v90
  %127 = vmatprep.subr.bf16.mxu0 0
  %128 = vmatpush1.bf16.msra.mxu0 %v121
  %129 = vmatprep.subr.bf16.mxu0 0
  %130 = vmatpush1.bf16.msra.mxu0 0
  %131 = vmatprep.subr.bf16.mxu0 0
  %132 = vmatpush1.bf16.msra.mxu0 0
  %133 = vmatprep.subr.bf16.mxu0 0
  %134 = vmatpush1.bf16.msra.mxu0 0
  %135 = vmatprep.subr.bf16.mxu0 0
  %136 = vmatpush1.bf16.msra.mxu0 0
  %137 = vmatprep.subr.bf16.mxu0 0
  %138 = vmatpush1.bf16.msra.mxu0 0
  %139 = vmatprep.subr.bf16.mxu0 0
  %140 = vmatpush1.bf16.msra.mxu0 0
  %141 = vmatprep.subr.bf16.mxu0 0
  %142 = vmatpush1.bf16.msra.mxu0 0
  %143 = vmatprep.subr.bf16.mxu0 0
  %144 = vmatpush1.bf16.msra.mxu0 0
  %145 = vmatprep.subr.bf16.mxu0 0
  %146 = vmatpush1.bf16.msra.mxu0 0
  %147 = vmatprep.subr.bf16.mxu0 0
  %148 = vmatpush1.bf16.msra.mxu0 0
  %149 = vmatprep.subr.bf16.mxu0 0
  %150 = vmatpush1.bf16.msra.mxu0 0
  %151 = vmatprep.subr.bf16.mxu0 0
  %152 = vmatpush1.bf16.msra.mxu0 0
  %153 = vmatprep.subr.bf16.mxu0 0
  %154 = vmatpush1.bf16.msra.mxu0 0
  %155 = vmatprep.mubr.bf16.mxu0 0
  %156 = vmatmul.mubr.bf16.gmra.mrb[0].mxu0 %v96
  %v157 = vpop.f32.mrb[0].mxu0
  %v158 = vadd.f32 0.0, %v157
  %v159 = vpop.f32.mrb[0].mxu0
  %v160 = vpop.f32.mrb[0].mxu0
  %v161 = vadd.f32 0.0, %v160
  %v162 = vpop.f32.mrb[0].mxu0
  %163 = vmatprep.mubr.bf16.mxu0 0
  %164 = vmatmul.mubr.bf16.gmra.mrb[0].mxu0 %v99
  %v165 = vpop.f32.mrb[0].mxu0
  %v166 = vadd.f32 0.0, %v165
  %v167 = vpop.f32.mrb[0].mxu0
  %v168 = vpop.f32.mrb[0].mxu0
  %v169 = vadd.f32 0.0, %v168
  %v170 = vpop.f32.mrb[0].mxu0
  %171 = vmatprep.mubr.bf16.mxu0 0
  %172 = vmatmul.mubr.bf16.gmra.mrb[0].mxu0 %v102
  %v173 = vpop.f32.mrb[0].mxu0
  %v174 = vadd.f32 0.0, %v173
  %v175 = vpop.f32.mrb[0].mxu0
  %v176 = vpop.f32.mrb[0].mxu0
  %v177 = vadd.f32 0.0, %v176
  %v178 = vpop.f32.mrb[0].mxu0
  %179 = vmatprep.mubr.bf16.mxu0 0
  %180 = vmatmul.mubr.bf16.gmra.mrb[0].mxu0 %v105
  %v181 = vpop.f32.mrb[0].mxu0
  %v182 = vadd.f32 0.0, %v181
  %v183 = vpop.f32.mrb[0].mxu0
  %v184 = vpop.f32.mrb[0].mxu0
  %v185 = vadd.f32 0.0, %v184
  %v186 = vpop.f32.mrb[0].mxu0
  %187 = vmatprep.mubr.bf16.mxu0 0
  %188 = vmatmul.mubr.bf16.gmra.mrb[0].mxu0 %v108
  %v189 = vpop.f32.mrb[0].mxu0
  %v190 = vadd.f32 0.0, %v189
  %v191 = vpop.f32.mrb[0].mxu0
  %v192 = vpop.f32.mrb[0].mxu0
  %v193 = vadd.f32 0.0, %v192
  %v194 = vpop.f32.mrb[0].mxu0
  %195 = vmatprep.mubr.bf16.mxu0 0
  %196 = vmatmul.mubr.bf16.gmra.mrb[0].mxu0 %v111
  %v197 = vpop.f32.mrb[0].mxu0
  %v198 = vadd.f32 0.0, %v197
  %v199 = vpop.f32.mrb[0].mxu0
  %v200 = vpop.f32.mrb[0].mxu0
  %v201 = vadd.f32 0.0, %v200
  %v202 = vpop.f32.mrb[0].mxu0
  %203 = vmatprep.mubr.bf16.mxu0 0
  %204 = vmatmul.mubr.bf16.gmra.mrb[0].mxu0 %v114
  %v205 = vpop.f32.mrb[0].mxu0
  %v206 = vadd.f32 0.0, %v205
  %v207 = vpop.f32.mrb[0].mxu0
  %v208 = vpop.f32.mrb[0].mxu0
  %v209 = vadd.f32 0.0, %v208
  %v210 = vpop.f32.mrb[0].mxu0
  %211 = vmatprep.mubr.bf16.mxu0 0
  %212 = vmatmul.mubr.bf16.gmra.mrb[0].mxu0 %v117
  %v213 = vpop.f32.mrb[0].mxu0
  %v214 = vadd.f32 0.0, %v213
  %v215 = vpop.f32.mrb[0].mxu0
  %v216 = vpop.f32.mrb[0].mxu0
  %v217 = vadd.f32 0.0, %v216
  %v218 = vpop.f32.mrb[0].mxu0
  %219 = vdwg.mxu0
  %v220 = vld [vmem:[%s2] sm:$0x1]
  %v222 = vlaneseq
  %v223 = vshrl.u32 %v222, 7
  %v224 = vsub.s32 0, %v223
  %v225 = vrot.slane %v220, %v224
  %v227 = vmul.f32 %v158, %v225
  %v228 = vmul.f32 %v161, %v225
  %v229 = vmul.f32 %v166, %v225
  %v230 = vmul.f32 %v169, %v225
  %v231 = vmul.f32 %v174, %v225
  %v232 = vmul.f32 %v177, %v225
  %v233 = vmul.f32 %v182, %v225
  %v234 = vmul.f32 %v185, %v225
  %v235 = vmul.f32 %v190, %v225
  %v236 = vmul.f32 %v193, %v225
  %v237 = vmul.f32 %v198, %v225
  %v238 = vmul.f32 %v201, %v225
  %v239 = vmul.f32 %v206, %v225
  %v240 = vmul.f32 %v209, %v225
  %v241 = vmul.f32 %v214, %v225
  %v242 = vmul.f32 %v217, %v225
  %v243 = vld [vmem:[%s3] sm:$0x1]
  %v245 = vlaneseq
  %v246 = vshrl.u32 %v245, 7
  %v247 = vsub.s32 0, %v246
  %v248 = vrot.slane %v243, %v247
  %v250 = vadd.f32 %v227, %v248
  %v251 = vadd.f32 %v228, %v248
  %v252 = vadd.f32 %v229, %v248
  %v253 = vadd.f32 %v230, %v248
  %v254 = vadd.f32 %v231, %v248
  %v255 = vadd.f32 %v232, %v248
  %v256 = vadd.f32 %v233, %v248
  %v257 = vadd.f32 %v234, %v248
  %v258 = vadd.f32 %v235, %v248
  %v259 = vadd.f32 %v236, %v248
  %v260 = vadd.f32 %v237, %v248
  %v261 = vadd.f32 %v238, %v248
  %v262 = vadd.f32 %v239, %v248
  %v263 = vadd.f32 %v240, %v248
  %v264 = vadd.f32 %v241, %v248
  %v265 = vadd.f32 %v242, %v248
  %v266 = vmax.f32 %v250, 0.0
  %v267 = vmax.f32 %v251, 0.0
  %v268 = vmax.f32 %v252, 0.0
  %v269 = vmax.f32 %v253, 0.0
  %v270 = vmax.f32 %v254, 0.0
  %v271 = vmax.f32 %v255, 0.0
  %v272 = vmax.f32 %v256, 0.0
  %v273 = vmax.f32 %v257, 0.0
  %v274 = vmax.f32 %v258, 0.0
  %v275 = vmax.f32 %v259, 0.0
  %v276 = vmax.f32 %v260, 0.0
  %v277 = vmax.f32 %v261, 0.0
  %v278 = vmax.f32 %v262, 0.0
  %v279 = vmax.f32 %v263, 0.0
  %v280 = vmax.f32 %v264, 0.0
  %v281 = vmax.f32 %v265, 0.0
  %v282 = vpack.c.bf16 %v267, %v266
  %v283 = vpack.c.bf16 %v269, %v268
  %v284 = vpack.c.bf16 %v271, %v270
  %v285 = vpack.c.bf16 %v273, %v272
  %v286 = vpack.c.bf16 %v275, %v274
  %v287 = vpack.c.bf16 %v277, %v276
  %v288 = vpack.c.bf16 %v279, %v278
  %v289 = vpack.c.bf16 %v281, %v280
  %v298 = vunpack.c.l.b16 %v282
  %v299 = vunpack.c.h.b16 %v282
  %v300 = vunpack.c.l.b16 %v283
  %v301 = vunpack.c.h.b16 %v283
  %v302 = vunpack.c.l.b16 %v284
  %v303 = vunpack.c.h.b16 %v284
  %v304 = vunpack.c.l.b16 %v285
  %v305 = vunpack.c.h.b16 %v285
  %v306 = vunpack.c.l.b16 %v286
  %v307 = vunpack.c.h.b16 %v286
  %v308 = vunpack.c.l.b16 %v287
  %v309 = vunpack.c.h.b16 %v287
  %v310 = vunpack.c.l.b16 %v288
  %v311 = vunpack.c.h.b16 %v288
  %v312 = vunpack.c.l.b16 %v289
  %v313 = vunpack.c.h.b16 %v289
  %v314 = vpack.c.b16 %v298, %v298
  %v315 = vpack.c.b16 %v299, %v299
  %v316 = vpack.c.b16 %v300, %v300
  %v317 = vpack.c.b16 %v301, %v301
  %v318 = vpack.c.b16 %v302, %v302
  %v319 = vpack.c.b16 %v303, %v303
  %v320 = vpack.c.b16 %v304, %v304
  %v321 = vpack.c.b16 %v305, %v305
  %v322 = vpack.c.b16 %v306, %v306
  %v323 = vpack.c.b16 %v307, %v307
  %v324 = vpack.c.b16 %v308, %v308
  %v325 = vpack.c.b16 %v309, %v309
  %v326 = vpack.c.b16 %v310, %v310
  %v327 = vpack.c.b16 %v311, %v311
  %v328 = vpack.c.b16 %v312, %v312
  %v329 = vpack.c.b16 %v313, %v313
  %vm346 = vcmask 27648
  %347 = vst.msk [vmem:[%s4] sm:$0xf] %vm346, %v314
  %348 = vst.msk [vmem:[%s4 + $0x4] sm:$0xf] %vm346, %v315
  %349 = vst.msk [vmem:[%s4 + $0x8] sm:$0xf] %vm346, %v316
  %350 = vst.msk [vmem:[%s4 + $0xc] sm:$0xf] %vm346, %v317
  %351 = vst.msk [vmem:[%s4 + $0x10] sm:$0xf] %vm346, %v318
  %352 = vst.msk [vmem:[%s4 + $0x14] sm:$0xf] %vm346, %v319
  %353 = vst.msk [vmem:[%s4 + $0x18] sm:$0xf] %vm346, %v320
  %354 = vst.msk [vmem:[%s4 + $0x1c] sm:$0xf] %vm346, %v321
  %355 = vst.msk [vmem:[%s4 + $0x20] sm:$0xf] %vm346, %v322
  %356 = vst.msk [vmem:[%s4 + $0x24] sm:$0xf] %vm346, %v323
  %357 = vst.msk [vmem:[%s4 + $0x28] sm:$0xf] %vm346, %v324
  %358 = vst.msk [vmem:[%s4 + $0x2c] sm:$0xf] %vm346, %v325
  %359 = vst.msk [vmem:[%s4 + $0x30] sm:$0xf] %vm346, %v326
  %360 = vst.msk [vmem:[%s4 + $0x34] sm:$0xf] %vm346, %v327
  %361 = vst.msk [vmem:[%s4 + $0x38] sm:$0xf] %vm346, %v328
  %362 = vst.msk [vmem:[%s4 + $0x3c] sm:$0xf] %vm346, %v329
  // Predicated region
  $region18: #{forward.23} parent=0 // pred_check
    _
  $region19: #{forward.23} parent=0 // pred_check_branch
    %364 = sbr.rel (0) target = $region21
  $region20: #{forward.23} parent=0 // pred_region
    _
  $region21: #{forward.23} parent=0 // pred_fallthru
    _
  // Predicated region
  $region22: #{forward.23} parent=0 // pred_check
    _
  $region23: #{forward.23} parent=0 // pred_check_branch
    %366 = sbr.rel (0) target = $region25
  $region24: #{forward.23} parent=0 // pred_region
    _
  $region25: #{forward.23} parent=0 // pred_fallthru
    _

// kernel: forward.24
$region0: #{forward.24}
  #allocation0 [shape = 'u32[]', space=smem, size = 0x4, offset = 0x4, fixed_abs, tag = 'smem constant byte address 0x4 - core index']
  #allocation1 [shape = 'u32[144,128]{1,0:T(1,128)}', space=vmem, size = 0x12000, scoped, tag = 'internal scratch']
  %s0 = inlined_call_operand.vmem [shape: bf16[128,4], index: 0, kind: input, shape index: {}]
  %s1 = inlined_call_operand.vmem [shape: bf16[4,16], index: 1, kind: input, shape index: {}]
  %s2 = inlined_call_operand.vmem [shape: f32[1,16], index: 2, kind: input, shape index: {}]
  %s3 = inlined_call_operand.vmem [shape: f32[1,16], index: 3, kind: input, shape index: {}]
  %s4 = inlined_call_operand.vmem [shape: bf16[128,16], index: 4, kind: input, shape index: {}]
  %s5 = inlined_call_operand.vmem [shape: bf16[128,16], index: 5, kind: output, shape index: {}]
  %s6 = sld [smem:[#allocation0]]
  $region30: #{forward.24} parent=0
    _
  %s8 = ssub.s32 1, %s6
  %s9 = scalar_select 0, %s8, %s6
  // Predicated region
  $region2: #{forward.24} parent=0 // pred_check
    _
  $region3: #{forward.24} parent=0 // pred_check_branch
    %11 = sbr.rel (0) target = $region5
  $region4: #{forward.24} parent=0 // pred_region
    _
  $region5: #{forward.24} parent=0 // pred_fallthru
    _
  // Predicated region
  $region6: #{forward.24} parent=0 // pred_check
    _
  $region7: #{forward.24} parent=0 // pred_check_branch
    %13 = sbr.rel (0) target = $region9
  $region8: #{forward.24} parent=0 // pred_region
    _
  $region9: #{forward.24} parent=0 // pred_fallthru
    _
  // Predicated region
  $region10: #{forward.24} parent=0 // pred_check
    _
  $region11: #{forward.24} parent=0 // pred_check_branch
    %15 = sbr.rel (0) target = $region13
  $region12: #{forward.24} parent=0 // pred_region
    _
  $region13: #{forward.24} parent=0 // pred_fallthru
    _
  // Predicated region
  $region14: #{forward.24} parent=0 // pred_check
    _
  $region15: #{forward.24} parent=0 // pred_check_branch
    %17 = sbr.rel (0) target = $region17
  $region16: #{forward.24} parent=0 // pred_region
    _
  $region17: #{forward.24} parent=0 // pred_fallthru
    _
  // Predicated region
  $region18: #{forward.24} parent=0 // pred_check
    _
  $region19: #{forward.24} parent=0 // pred_check_branch
    %19 = sbr.rel (0) target = $region21
  $region20: #{forward.24} parent=0 // pred_region
    _
  $region21: #{forward.24} parent=0 // pred_fallthru
    _
  %v21 = vld [vmem:[%s0] sm:$0xf]
  %v22 = vld [vmem:[%s0 + $0x4] sm:$0xf]
  %v23 = vld [vmem:[%s0 + $0x8] sm:$0xf]
  %v24 = vld [vmem:[%s0 + $0xc] sm:$0xf]
  %v25 = vld [vmem:[%s0 + $0x10] sm:$0xf]
  %v26 = vld [vmem:[%s0 + $0x14] sm:$0xf]
  %v27 = vld [vmem:[%s0 + $0x18] sm:$0xf]
  %v28 = vld [vmem:[%s0 + $0x1c] sm:$0xf]
  %v29 = vld [vmem:[%s0 + $0x20] sm:$0xf]
  %v30 = vld [vmem:[%s0 + $0x24] sm:$0xf]
  %v31 = vld [vmem:[%s0 + $0x28] sm:$0xf]
  %v32 = vld [vmem:[%s0 + $0x2c] sm:$0xf]
  %v33 = vld [vmem:[%s0 + $0x30] sm:$0xf]
  %v34 = vld [vmem:[%s0 + $0x34] sm:$0xf]
  %v35 = vld [vmem:[%s0 + $0x38] sm:$0xf]
  %v36 = vld [vmem:[%s0 + $0x3c] sm:$0xf]
  %v37 = vld [vmem:[%s1] sm:$0x3]
  %v54 = vunpack.c.l.b16 %v21
  %v55 = vunpack.c.l.b16 %v22
  %v56 = vunpack.c.l.b16 %v23
  %v57 = vunpack.c.l.b16 %v24
  %v58 = vunpack.c.l.b16 %v25
  %v59 = vunpack.c.l.b16 %v26
  %v60 = vunpack.c.l.b16 %v27
  %v61 = vunpack.c.l.b16 %v28
  %v62 = vunpack.c.l.b16 %v29
  %v63 = vunpack.c.l.b16 %v30
  %v64 = vunpack.c.l.b16 %v31
  %v65 = vunpack.c.l.b16 %v32
  %v66 = vunpack.c.l.b16 %v33
  %v67 = vunpack.c.l.b16 %v34
  %v68 = vunpack.c.l.b16 %v35
  %v69 = vunpack.c.l.b16 %v36
  %v70 = vpack.c.b16 %v55, %v54
  %v71 = vpack.c.b16 %v57, %v56
  %v72 = vpack.c.b16 %v59, %v58
  %v73 = vpack.c.b16 %v61, %v60
  %v74 = vpack.c.b16 %v63, %v62
  %v75 = vpack.c.b16 %v65, %v64
  %v76 = vpack.c.b16 %v67, %v66
  %v77 = vpack.c.b16 %v69, %v68
  %vm78 = vcmask 31744
  %v80 = vsel %vm78, %v70, 0
  %v83 = vsel %vm78, %v71, 0
  %v86 = vsel %vm78, %v72, 0
  %v89 = vsel %vm78, %v73, 0
  %v92 = vsel %vm78, %v74, 0
  %v95 = vsel %vm78, %v75, 0
  %v98 = vsel %vm78, %v76, 0
  %v101 = vsel %vm78, %v77, 0
  %vm103 = vcmask 1041408
  %v105 = vsel %vm103, %v37, 0
  %107 = vmatprep.subr.bf16.mxu0 0
  %108 = vmatpush1.bf16.msra.mxu0 %v105
  %109 = vmatprep.subr.bf16.mxu0 0
  %110 = vmatpush1.bf16.msra.mxu0 0
  %111 = vmatprep.subr.bf16.mxu0 0
  %112 = vmatpush1.bf16.msra.mxu0 0
  %113 = vmatprep.subr.bf16.mxu0 0
  %114 = vmatpush1.bf16.msra.mxu0 0
  %115 = vmatprep.subr.bf16.mxu0 0
  %116 = vmatpush1.bf16.msra.mxu0 0
  %117 = vmatprep.subr.bf16.mxu0 0
  %118 = vmatpush1.bf16.msra.mxu0 0
  %119 = vmatprep.subr.bf16.mxu0 0
  %120 = vmatpush1.bf16.msra.mxu0 0
  %121 = vmatprep.subr.bf16.mxu0 0
  %122 = vmatpush1.bf16.msra.mxu0 0
  %123 = vmatprep.subr.bf16.mxu0 0
  %124 = vmatpush1.bf16.msra.mxu0 0
  %125 = vmatprep.subr.bf16.mxu0 0
  %126 = vmatpush1.bf16.msra.mxu0 0
  %127 = vmatprep.subr.bf16.mxu0 0
  %128 = vmatpush1.bf16.msra.mxu0 0
  %129 = vmatprep.subr.bf16.mxu0 0
  %130 = vmatpush1.bf16.msra.mxu0 0
  %131 = vmatprep.subr.bf16.mxu0 0
  %132 = vmatpush1.bf16.msra.mxu0 0
  %133 = vmatprep.subr.bf16.mxu0 0
  %134 = vmatpush1.bf16.msra.mxu0 0
  %135 = vmatprep.subr.bf16.mxu0 0
  %136 = vmatpush1.bf16.msra.mxu0 0
  %137 = vmatprep.subr.bf16.mxu0 0
  %138 = vmatpush1.bf16.msra.mxu0 0
  %139 = vmatprep.mubr.bf16.mxu0 0
  %140 = vmatmul.mubr.bf16.gmra.mrb[0].mxu0 %v80
  %v141 = vpop.f32.mrb[0].mxu0
  %v142 = vadd.f32 0.0, %v141
  %v143 = vpop.f32.mrb[0].mxu0
  %v144 = vpop.f32.mrb[0].mxu0
  %v145 = vadd.f32 0.0, %v144
  %v146 = vpop.f32.mrb[0].mxu0
  %147 = vmatprep.mubr.bf16.mxu0 0
  %148 = vmatmul.mubr.bf16.gmra.mrb[0].mxu0 %v83
  %v149 = vpop.f32.mrb[0].mxu0
  %v150 = vadd.f32 0.0, %v149
  %v151 = vpop.f32.mrb[0].mxu0
  %v152 = vpop.f32.mrb[0].mxu0
  %v153 = vadd.f32 0.0, %v152
  %v154 = vpop.f32.mrb[0].mxu0
  %155 = vmatprep.mubr.bf16.mxu0 0
  %156 = vmatmul.mubr.bf16.gmra.mrb[0].mxu0 %v86
  %v157 = vpop.f32.mrb[0].mxu0
  %v158 = vadd.f32 0.0, %v157
  %v159 = vpop.f32.mrb[0].mxu0
  %v160 = vpop.f32.mrb[0].mxu0
  %v161 = vadd.f32 0.0, %v160
  %v162 = vpop.f32.mrb[0].mxu0
  %163 = vmatprep.mubr.bf16.mxu0 0
  %164 = vmatmul.mubr.bf16.gmra.mrb[0].mxu0 %v89
  %v165 = vpop.f32.mrb[0].mxu0
  %v166 = vadd.f32 0.0, %v165
  %v167 = vpop.f32.mrb[0].mxu0
  %v168 = vpop.f32.mrb[0].mxu0
  %v169 = vadd.f32 0.0, %v168
  %v170 = vpop.f32.mrb[0].mxu0
  %171 = vmatprep.mubr.bf16.mxu0 0
  %172 = vmatmul.mubr.bf16.gmra.mrb[0].mxu0 %v92
  %v173 = vpop.f32.mrb[0].mxu0
  %v174 = vadd.f32 0.0, %v173
  %v175 = vpop.f32.mrb[0].mxu0
  %v176 = vpop.f32.mrb[0].mxu0
  %v177 = vadd.f32 0.0, %v176
  %v178 = vpop.f32.mrb[0].mxu0
  %179 = vmatprep.mubr.bf16.mxu0 0
  %180 = vmatmul.mubr.bf16.gmra.mrb[0].mxu0 %v95
  %v181 = vpop.f32.mrb[0].mxu0
  %v182 = vadd.f32 0.0, %v181
  %v183 = vpop.f32.mrb[0].mxu0
  %v184 = vpop.f32.mrb[0].mxu0
  %v185 = vadd.f32 0.0, %v184
  %v186 = vpop.f32.mrb[0].mxu0
  %187 = vmatprep.mubr.bf16.mxu0 0
  %188 = vmatmul.mubr.bf16.gmra.mrb[0].mxu0 %v98
  %v189 = vpop.f32.mrb[0].mxu0
  %v190 = vadd.f32 0.0, %v189
  %v191 = vpop.f32.mrb[0].mxu0
  %v192 = vpop.f32.mrb[0].mxu0
  %v193 = vadd.f32 0.0, %v192
  %v194 = vpop.f32.mrb[0].mxu0
  %195 = vmatprep.mubr.bf16.mxu0 0
  %196 = vmatmul.mubr.bf16.gmra.mrb[0].mxu0 %v101
  %v197 = vpop.f32.mrb[0].mxu0
  %v198 = vadd.f32 0.0, %v197
  %v199 = vpop.f32.mrb[0].mxu0
  %v200 = vpop.f32.mrb[0].mxu0
  %v201 = vadd.f32 0.0, %v200
  %v202 = vpop.f32.mrb[0].mxu0
  %203 = vdwg.mxu0
  %v204 = vld [vmem:[%s2] sm:$0x1]
  %v206 = vlaneseq
  %v207 = vshrl.u32 %v206, 7
  %v208 = vsub.s32 0, %v207
  %v209 = vrot.slane %v204, %v208
  %v211 = vmul.f32 %v142, %v209
  %v212 = vmul.f32 %v145, %v209
  %v213 = vmul.f32 %v150, %v209
  %v214 = vmul.f32 %v153, %v209
  %v215 = vmul.f32 %v158, %v209
  %v216 = vmul.f32 %v161, %v209
  %v217 = vmul.f32 %v166, %v209
  %v218 = vmul.f32 %v169, %v209
  %v219 = vmul.f32 %v174, %v209
  %v220 = vmul.f32 %v177, %v209
  %v221 = vmul.f32 %v182, %v209
  %v222 = vmul.f32 %v185, %v209
  %v223 = vmul.f32 %v190, %v209
  %v224 = vmul.f32 %v193, %v209
  %v225 = vmul.f32 %v198, %v209
  %v226 = vmul.f32 %v201, %v209
  %v227 = vld [vmem:[%s3] sm:$0x1]
  %v229 = vlaneseq
  %v230 = vshrl.u32 %v229, 7
  %v231 = vsub.s32 0, %v230
  %v232 = vrot.slane %v227, %v231
  %v234 = vadd.f32 %v211, %v232
  %v235 = vadd.f32 %v212, %v232
  %v236 = vadd.f32 %v213, %v232
  %v237 = vadd.f32 %v214, %v232
  %v238 = vadd.f32 %v215, %v232
  %v239 = vadd.f32 %v216, %v232
  %v240 = vadd.f32 %v217, %v232
  %v241 = vadd.f32 %v218, %v232
  %v242 = vadd.f32 %v219, %v232
  %v243 = vadd.f32 %v220, %v232
  %v244 = vadd.f32 %v221, %v232
  %v245 = vadd.f32 %v222, %v232
  %v246 = vadd.f32 %v223, %v232
  %v247 = vadd.f32 %v224, %v232
  %v248 = vadd.f32 %v225, %v232
  %v249 = vadd.f32 %v226, %v232
  %v250 = vld [vmem:[%s4] sm:$0xf]
  %v251 = vld [vmem:[%s4 + $0x4] sm:$0xf]
  %v252 = vld [vmem:[%s4 + $0x8] sm:$0xf]
  %v253 = vld [vmem:[%s4 + $0xc] sm:$0xf]
  %v254 = vld [vmem:[%s4 + $0x10] sm:$0xf]
  %v255 = vld [vmem:[%s4 + $0x14] sm:$0xf]
  %v256 = vld [vmem:[%s4 + $0x18] sm:$0xf]
  %v257 = vld [vmem:[%s4 + $0x1c] sm:$0xf]
  %v258 = vld [vmem:[%s4 + $0x20] sm:$0xf]
  %v259 = vld [vmem:[%s4 + $0x24] sm:$0xf]
  %v260 = vld [vmem:[%s4 + $0x28] sm:$0xf]
  %v261 = vld [vmem:[%s4 + $0x2c] sm:$0xf]
  %v262 = vld [vmem:[%s4 + $0x30] sm:$0xf]
  %v263 = vld [vmem:[%s4 + $0x34] sm:$0xf]
  %v264 = vld [vmem:[%s4 + $0x38] sm:$0xf]
  %v265 = vld [vmem:[%s4 + $0x3c] sm:$0xf]
  %v266 = vunpack.c.l.bf16 %v250
  %v267 = vunpack.c.l.bf16 %v251
  %v268 = vunpack.c.l.bf16 %v252
  %v269 = vunpack.c.l.bf16 %v253
  %v270 = vunpack.c.l.bf16 %v254
  %v271 = vunpack.c.l.bf16 %v255
  %v272 = vunpack.c.l.bf16 %v256
  %v273 = vunpack.c.l.bf16 %v257
  %v274 = vunpack.c.l.bf16 %v258
  %v275 = vunpack.c.l.bf16 %v259
  %v276 = vunpack.c.l.bf16 %v260
  %v277 = vunpack.c.l.bf16 %v261
  %v278 = vunpack.c.l.bf16 %v262
  %v279 = vunpack.c.l.bf16 %v263
  %v280 = vunpack.c.l.bf16 %v264
  %v281 = vunpack.c.l.bf16 %v265
  %v282 = vadd.f32 %v234, %v266
  %v283 = vadd.f32 %v235, %v267
  %v284 = vadd.f32 %v236, %v268
  %v285 = vadd.f32 %v237, %v269
  %v286 = vadd.f32 %v238, %v270
  %v287 = vadd.f32 %v239, %v271
  %v288 = vadd.f32 %v240, %v272
  %v289 = vadd.f32 %v241, %v273
  %v290 = vadd.f32 %v242, %v274
  %v291 = vadd.f32 %v243, %v275
  %v292 = vadd.f32 %v244, %v276
  %v293 = vadd.f32 %v245, %v277
  %v294 = vadd.f32 %v246, %v278
  %v295 = vadd.f32 %v247, %v279
  %v296 = vadd.f32 %v248, %v280
  %v297 = vadd.f32 %v249, %v281
  %v298 = vmax.f32 %v282, 0.0
  %v299 = vmax.f32 %v283, 0.0
  %v300 = vmax.f32 %v284, 0.0
  %v301 = vmax.f32 %v285, 0.0
  %v302 = vmax.f32 %v286, 0.0
  %v303 = vmax.f32 %v287, 0.0
  %v304 = vmax.f32 %v288, 0.0
  %v305 = vmax.f32 %v289, 0.0
  %v306 = vmax.f32 %v290, 0.0
  %v307 = vmax.f32 %v291, 0.0
  %v308 = vmax.f32 %v292, 0.0
  %v309 = vmax.f32 %v293, 0.0
  %v310 = vmax.f32 %v294, 0.0
  %v311 = vmax.f32 %v295, 0.0
  %v312 = vmax.f32 %v296, 0.0
  %v313 = vmax.f32 %v297, 0.0
  %v314 = vpack.c.bf16 %v299, %v298
  %v315 = vpack.c.bf16 %v301, %v300
  %v316 = vpack.c.bf16 %v303, %v302
  %v317 = vpack.c.bf16 %v305, %v304
  %v318 = vpack.c.bf16 %v307, %v306
  %v319 = vpack.c.bf16 %v309, %v308
  %v320 = vpack.c.bf16 %v311, %v310
  %v321 = vpack.c.bf16 %v313, %v312
  %v330 = vunpack.c.l.b16 %v314
  %v331 = vunpack.c.h.b16 %v314
  %v332 = vunpack.c.l.b16 %v315
  %v333 = vunpack.c.h.b16 %v315
  %v334 = vunpack.c.l.b16 %v316
  %v335 = vunpack.c.h.b16 %v316
  %v336 = vunpack.c.l.b16 %v317
  %v337 = vunpack.c.h.b16 %v317
  %v338 = vunpack.c.l.b16 %v318
  %v339 = vunpack.c.h.b16 %v318
  %v340 = vunpack.c.l.b16 %v319
  %v341 = vunpack.c.h.b16 %v319
  %v342 = vunpack.c.l.b16 %v320
  %v343 = vunpack.c.h.b16 %v320
  %v344 = vunpack.c.l.b16 %v321
  %v345 = vunpack.c.h.b16 %v321
  %v346 = vpack.c.b16 %v330, %v330
  %v347 = vpack.c.b16 %v331, %v331
  %v348 = vpack.c.b16 %v332, %v332
  %v349 = vpack.c.b16 %v333, %v333
  %v350 = vpack.c.b16 %v334, %v334
  %v351 = vpack.c.b16 %v335, %v335
  %v352 = vpack.c.b16 %v336, %v336
  %v353 = vpack.c.b16 %v337, %v337
  %v354 = vpack.c.b16 %v338, %v338
  %v355 = vpack.c.b16 %v339, %v339
  %v356 = vpack.c.b16 %v340, %v340
  %v357 = vpack.c.b16 %v341, %v341
  %v358 = vpack.c.b16 %v342, %v342
  %v359 = vpack.c.b16 %v343, %v343
  %v360 = vpack.c.b16 %v344, %v344
  %v361 = vpack.c.b16 %v345, %v345
  %vm378 = vcmask 125952
  %379 = vst.msk [vmem:[%s5] sm:$0xf] %vm378, %v346
  %380 = vst.msk [vmem:[%s5 + $0x4] sm:$0xf] %vm378, %v347
  %381 = vst.msk [vmem:[%s5 + $0x8] sm:$0xf] %vm378, %v348
  %382 = vst.msk [vmem:[%s5 + $0xc] sm:$0xf] %vm378, %v349
  %383 = vst.msk [vmem:[%s5 + $0x10] sm:$0xf] %vm378, %v350
  %384 = vst.msk [vmem:[%s5 + $0x14] sm:$0xf] %vm378, %v351
  %385 = vst.msk [vmem:[%s5 + $0x18] sm:$0xf] %vm378, %v352
  %386 = vst.msk [vmem:[%s5 + $0x1c] sm:$0xf] %vm378, %v353
  %387 = vst.msk [vmem:[%s5 + $0x20] sm:$0xf] %vm378, %v354
  %388 = vst.msk [vmem:[%s5 + $0x24] sm:$0xf] %vm378, %v355
  %389 = vst.msk [vmem:[%s5 + $0x28] sm:$0xf] %vm378, %v356
  %390 = vst.msk [vmem:[%s5 + $0x2c] sm:$0xf] %vm378, %v357
  %391 = vst.msk [vmem:[%s5 + $0x30] sm:$0xf] %vm378, %v358
  %392 = vst.msk [vmem:[%s5 + $0x34] sm:$0xf] %vm378, %v359
  %393 = vst.msk [vmem:[%s5 + $0x38] sm:$0xf] %vm378, %v360
  %394 = vst.msk [vmem:[%s5 + $0x3c] sm:$0xf] %vm378, %v361
  // Predicated region
  $region22: #{forward.24} parent=0 // pred_check
    _
  $region23: #{forward.24} parent=0 // pred_check_branch
    %396 = sbr.rel (0) target = $region25
  $region24: #{forward.24} parent=0 // pred_region
    _
  $region25: #{forward.24} parent=0 // pred_fallthru
    _
  // Predicated region
  $region26: #{forward.24} parent=0 // pred_check
    _
  $region27: #{forward.24} parent=0 // pred_check_branch
    %398 = sbr.rel (0) target = $region29
  $region28: #{forward.24} parent=0 // pred_region
    _
  $region29: #{forward.24} parent=0 // pred_fallthru
    _

// kernel: forward.26
$region0: #{forward.26}
  #allocation0 [shape = 'u32[]', space=smem, size = 0x4, offset = 0x4, fixed_abs, tag = 'smem constant byte address 0x4 - core index']
  #allocation1 [shape = 'u32[144,128]{1,0:T(1,128)}', space=vmem, size = 0x12000, scoped, tag = 'internal scratch']
  %s0 = inlined_call_operand.vmem [shape: bf16[128,16], index: 0, kind: input, shape index: {}]
  %s1 = inlined_call_operand.vmem [shape: bf16[16,8], index: 1, kind: input, shape index: {}]
  %s2 = inlined_call_operand.vmem [shape: f32[1,8], index: 2, kind: input, shape index: {}]
  %s3 = inlined_call_operand.vmem [shape: f32[1,8], index: 3, kind: input, shape index: {}]
  %s4 = inlined_call_operand.vmem [shape: bf16[128,8], index: 4, kind: output, shape index: {}]
  %s5 = sld [smem:[#allocation0]]
  $region26: #{forward.26} parent=0
    _
  %s7 = ssub.s32 1, %s5
  %s8 = scalar_select 0, %s7, %s5
  // Predicated region
  $region2: #{forward.26} parent=0 // pred_check
    _
  $region3: #{forward.26} parent=0 // pred_check_branch
    %10 = sbr.rel (0) target = $region5
  $region4: #{forward.26} parent=0 // pred_region
    _
  $region5: #{forward.26} parent=0 // pred_fallthru
    _
  // Predicated region
  $region6: #{forward.26} parent=0 // pred_check
    _
  $region7: #{forward.26} parent=0 // pred_check_branch
    %12 = sbr.rel (0) target = $region9
  $region8: #{forward.26} parent=0 // pred_region
    _
  $region9: #{forward.26} parent=0 // pred_fallthru
    _
  // Predicated region
  $region10: #{forward.26} parent=0 // pred_check
    _
  $region11: #{forward.26} parent=0 // pred_check_branch
    %14 = sbr.rel (0) target = $region13
  $region12: #{forward.26} parent=0 // pred_region
    _
  $region13: #{forward.26} parent=0 // pred_fallthru
    _
  // Predicated region
  $region14: #{forward.26} parent=0 // pred_check
    _
  $region15: #{forward.26} parent=0 // pred_check_branch
    %16 = sbr.rel (0) target = $region17
  $region16: #{forward.26} parent=0 // pred_region
    _
  $region17: #{forward.26} parent=0 // pred_fallthru
    _
  %v18 = vld [vmem:[%s0] sm:$0xf]
  %v19 = vld [vmem:[%s0 + $0x4] sm:$0xf]
  %v20 = vld [vmem:[%s0 + $0x8] sm:$0xf]
  %v21 = vld [vmem:[%s0 + $0xc] sm:$0xf]
  %v22 = vld [vmem:[%s0 + $0x10] sm:$0xf]
  %v23 = vld [vmem:[%s0 + $0x14] sm:$0xf]
  %v24 = vld [vmem:[%s0 + $0x18] sm:$0xf]
  %v25 = vld [vmem:[%s0 + $0x1c] sm:$0xf]
  %v26 = vld [vmem:[%s0 + $0x20] sm:$0xf]
  %v27 = vld [vmem:[%s0 + $0x24] sm:$0xf]
  %v28 = vld [vmem:[%s0 + $0x28] sm:$0xf]
  %v29 = vld [vmem:[%s0 + $0x2c] sm:$0xf]
  %v30 = vld [vmem:[%s0 + $0x30] sm:$0xf]
  %v31 = vld [vmem:[%s0 + $0x34] sm:$0xf]
  %v32 = vld [vmem:[%s0 + $0x38] sm:$0xf]
  %v33 = vld [vmem:[%s0 + $0x3c] sm:$0xf]
  %v34 = vld [vmem:[%s1] sm:$0xf]
  %v35 = vld [vmem:[%s1 + $0x4] sm:$0xf]
  %v52 = vunpack.c.l.b16 %v18
  %v53 = vunpack.c.l.b16 %v19
  %v54 = vunpack.c.l.b16 %v20
  %v55 = vunpack.c.l.b16 %v21
  %v56 = vunpack.c.l.b16 %v22
  %v57 = vunpack.c.l.b16 %v23
  %v58 = vunpack.c.l.b16 %v24
  %v59 = vunpack.c.l.b16 %v25
  %v60 = vunpack.c.l.b16 %v26
  %v61 = vunpack.c.l.b16 %v27
  %v62 = vunpack.c.l.b16 %v28
  %v63 = vunpack.c.l.b16 %v29
  %v64 = vunpack.c.l.b16 %v30
  %v65 = vunpack.c.l.b16 %v31
  %v66 = vunpack.c.l.b16 %v32
  %v67 = vunpack.c.l.b16 %v33
  %v68 = vpack.c.b16 %v53, %v52
  %v69 = vpack.c.b16 %v55, %v54
  %v70 = vpack.c.b16 %v57, %v56
  %v71 = vpack.c.b16 %v59, %v58
  %v72 = vpack.c.b16 %v61, %v60
  %v73 = vpack.c.b16 %v63, %v62
  %v74 = vpack.c.b16 %v65, %v64
  %v75 = vpack.c.b16 %v67, %v66
  %v78 = vunpack.c.l.b16 %v34
  %v79 = vunpack.c.l.b16 %v35
  %v80 = vpack.c.b16 %v79, %v78
  %vm82 = vcmask 130048
  %v84 = vsel %vm82, %v68, 0
  %v87 = vsel %vm82, %v69, 0
  %v90 = vsel %vm82, %v70, 0
  %v93 = vsel %vm82, %v71, 0
  %v96 = vsel %vm82, %v72, 0
  %v99 = vsel %vm82, %v73, 0
  %v102 = vsel %vm82, %v74, 0
  %v105 = vsel %vm82, %v75, 0
  %107 = vmatprep.subr.bf16.mxu0 0
  %108 = vmatpush1.bf16.msra.mxu0 %v80
  %109 = vmatprep.subr.bf16.mxu0 0
  %110 = vmatpush1.bf16.msra.mxu0 0
  %111 = vmatprep.subr.bf16.mxu0 0
  %112 = vmatpush1.bf16.msra.mxu0 0
  %113 = vmatprep.subr.bf16.mxu0 0
  %114 = vmatpush1.bf16.msra.mxu0 0
  %115 = vmatprep.subr.bf16.mxu0 0
  %116 = vmatpush1.bf16.msra.mxu0 0
  %117 = vmatprep.subr.bf16.mxu0 0
  %118 = vmatpush1.bf16.msra.mxu0 0
  %119 = vmatprep.subr.bf16.mxu0 0
  %120 = vmatpush1.bf16.msra.mxu0 0
  %121 = vmatprep.subr.bf16.mxu0 0
  %122 = vmatpush1.bf16.msra.mxu0 0
  %123 = vmatprep.subr.bf16.mxu0 0
  %124 = vmatpush1.bf16.msra.mxu0 0
  %125 = vmatprep.subr.bf16.mxu0 0
  %126 = vmatpush1.bf16.msra.mxu0 0
  %127 = vmatprep.subr.bf16.mxu0 0
  %128 = vmatpush1.bf16.msra.mxu0 0
  %129 = vmatprep.subr.bf16.mxu0 0
  %130 = vmatpush1.bf16.msra.mxu0 0
  %131 = vmatprep.subr.bf16.mxu0 0
  %132 = vmatpush1.bf16.msra.mxu0 0
  %133 = vmatprep.subr.bf16.mxu0 0
  %134 = vmatpush1.bf16.msra.mxu0 0
  %135 = vmatprep.subr.bf16.mxu0 0
  %136 = vmatpush1.bf16.msra.mxu0 0
  %137 = vmatprep.subr.bf16.mxu0 0
  %138 = vmatpush1.bf16.msra.mxu0 0
  %139 = vmatprep.mubr.bf16.mxu0 0
  %140 = vmatmul.mubr.bf16.gmra.mrb[0].mxu0 %v84
  %v141 = vpop.f32.mrb[0].mxu0
  %v142 = vadd.f32 0.0, %v141
  %v143 = vpop.f32.mrb[0].mxu0
  %v144 = vpop.f32.mrb[0].mxu0
  %v145 = vadd.f32 0.0, %v144
  %v146 = vpop.f32.mrb[0].mxu0
  %147 = vmatprep.mubr.bf16.mxu0 0
  %148 = vmatmul.mubr.bf16.gmra.mrb[0].mxu0 %v87
  %v149 = vpop.f32.mrb[0].mxu0
  %v150 = vadd.f32 0.0, %v149
  %v151 = vpop.f32.mrb[0].mxu0
  %v152 = vpop.f32.mrb[0].mxu0
  %v153 = vadd.f32 0.0, %v152
  %v154 = vpop.f32.mrb[0].mxu0
  %155 = vmatprep.mubr.bf16.mxu0 0
  %156 = vmatmul.mubr.bf16.gmra.mrb[0].mxu0 %v90
  %v157 = vpop.f32.mrb[0].mxu0
  %v158 = vadd.f32 0.0, %v157
  %v159 = vpop.f32.mrb[0].mxu0
  %v160 = vpop.f32.mrb[0].mxu0
  %v161 = vadd.f32 0.0, %v160
  %v162 = vpop.f32.mrb[0].mxu0
  %163 = vmatprep.mubr.bf16.mxu0 0
  %164 = vmatmul.mubr.bf16.gmra.mrb[0].mxu0 %v93
  %v165 = vpop.f32.mrb[0].mxu0
  %v166 = vadd.f32 0.0, %v165
  %v167 = vpop.f32.mrb[0].mxu0
  %v168 = vpop.f32.mrb[0].mxu0
  %v169 = vadd.f32 0.0, %v168
  %v170 = vpop.f32.mrb[0].mxu0
  %171 = vmatprep.mubr.bf16.mxu0 0
  %172 = vmatmul.mubr.bf16.gmra.mrb[0].mxu0 %v96
  %v173 = vpop.f32.mrb[0].mxu0
  %v174 = vadd.f32 0.0, %v173
  %v175 = vpop.f32.mrb[0].mxu0
  %v176 = vpop.f32.mrb[0].mxu0
  %v177 = vadd.f32 0.0, %v176
  %v178 = vpop.f32.mrb[0].mxu0
  %179 = vmatprep.mubr.bf16.mxu0 0
  %180 = vmatmul.mubr.bf16.gmra.mrb[0].mxu0 %v99
  %v181 = vpop.f32.mrb[0].mxu0
  %v182 = vadd.f32 0.0, %v181
  %v183 = vpop.f32.mrb[0].mxu0
  %v184 = vpop.f32.mrb[0].mxu0
  %v185 = vadd.f32 0.0, %v184
  %v186 = vpop.f32.mrb[0].mxu0
  %187 = vmatprep.mubr.bf16.mxu0 0
  %188 = vmatmul.mubr.bf16.gmra.mrb[0].mxu0 %v102
  %v189 = vpop.f32.mrb[0].mxu0
  %v190 = vadd.f32 0.0, %v189
  %v191 = vpop.f32.mrb[0].mxu0
  %v192 = vpop.f32.mrb[0].mxu0
  %v193 = vadd.f32 0.0, %v192
  %v194 = vpop.f32.mrb[0].mxu0
  %195 = vmatprep.mubr.bf16.mxu0 0
  %196 = vmatmul.mubr.bf16.gmra.mrb[0].mxu0 %v105
  %v197 = vpop.f32.mrb[0].mxu0
  %v198 = vadd.f32 0.0, %v197
  %v199 = vpop.f32.mrb[0].mxu0
  %v200 = vpop.f32.mrb[0].mxu0
  %v201 = vadd.f32 0.0, %v200
  %v202 = vpop.f32.mrb[0].mxu0
  %203 = vdwg.mxu0
  %v204 = vld [vmem:[%s2] sm:$0x1]
  %v206 = vlaneseq
  %v207 = vshrl.u32 %v206, 7
  %v208 = vsub.s32 0, %v207
  %v209 = vrot.slane %v204, %v208
  %v211 = vmul.f32 %v142, %v209
  %v212 = vmul.f32 %v145, %v209
  %v213 = vmul.f32 %v150, %v209
  %v214 = vmul.f32 %v153, %v209
  %v215 = vmul.f32 %v158, %v209
  %v216 = vmul.f32 %v161, %v209
  %v217 = vmul.f32 %v166, %v209
  %v218 = vmul.f32 %v169, %v209
  %v219 = vmul.f32 %v174, %v209
  %v220 = vmul.f32 %v177, %v209
  %v221 = vmul.f32 %v182, %v209
  %v222 = vmul.f32 %v185, %v209
  %v223 = vmul.f32 %v190, %v209
  %v224 = vmul.f32 %v193, %v209
  %v225 = vmul.f32 %v198, %v209
  %v226 = vmul.f32 %v201, %v209
  %v227 = vld [vmem:[%s3] sm:$0x1]
  %v229 = vlaneseq
  %v230 = vshrl.u32 %v229, 7
  %v231 = vsub.s32 0, %v230
  %v232 = vrot.slane %v227, %v231
  %v234 = vadd.f32 %v211, %v232
  %v235 = vadd.f32 %v212, %v232
  %v236 = vadd.f32 %v213, %v232
  %v237 = vadd.f32 %v214, %v232
  %v238 = vadd.f32 %v215, %v232
  %v239 = vadd.f32 %v216, %v232
  %v240 = vadd.f32 %v217, %v232
  %v241 = vadd.f32 %v218, %v232
  %v242 = vadd.f32 %v219, %v232
  %v243 = vadd.f32 %v220, %v232
  %v244 = vadd.f32 %v221, %v232
  %v245 = vadd.f32 %v222, %v232
  %v246 = vadd.f32 %v223, %v232
  %v247 = vadd.f32 %v224, %v232
  %v248 = vadd.f32 %v225, %v232
  %v249 = vadd.f32 %v226, %v232
  %v250 = vmax.f32 %v234, 0.0
  %v251 = vmax.f32 %v235, 0.0
  %v252 = vmax.f32 %v236, 0.0
  %v253 = vmax.f32 %v237, 0.0
  %v254 = vmax.f32 %v238, 0.0
  %v255 = vmax.f32 %v239, 0.0
  %v256 = vmax.f32 %v240, 0.0
  %v257 = vmax.f32 %v241, 0.0
  %v258 = vmax.f32 %v242, 0.0
  %v259 = vmax.f32 %v243, 0.0
  %v260 = vmax.f32 %v244, 0.0
  %v261 = vmax.f32 %v245, 0.0
  %v262 = vmax.f32 %v246, 0.0
  %v263 = vmax.f32 %v247, 0.0
  %v264 = vmax.f32 %v248, 0.0
  %v265 = vmax.f32 %v249, 0.0
  %v266 = vpack.c.bf16 %v251, %v250
  %v267 = vpack.c.bf16 %v253, %v252
  %v268 = vpack.c.bf16 %v255, %v254
  %v269 = vpack.c.bf16 %v257, %v256
  %v270 = vpack.c.bf16 %v259, %v258
  %v271 = vpack.c.bf16 %v261, %v260
  %v272 = vpack.c.bf16 %v263, %v262
  %v273 = vpack.c.bf16 %v265, %v264
  %v282 = vunpack.c.l.b16 %v266
  %v283 = vunpack.c.h.b16 %v266
  %v284 = vunpack.c.l.b16 %v267
  %v285 = vunpack.c.h.b16 %v267
  %v286 = vunpack.c.l.b16 %v268
  %v287 = vunpack.c.h.b16 %v268
  %v288 = vunpack.c.l.b16 %v269
  %v289 = vunpack.c.h.b16 %v269
  %v290 = vunpack.c.l.b16 %v270
  %v291 = vunpack.c.h.b16 %v270
  %v292 = vunpack.c.l.b16 %v271
  %v293 = vunpack.c.h.b16 %v271
  %v294 = vunpack.c.l.b16 %v272
  %v295 = vunpack.c.h.b16 %v272
  %v296 = vunpack.c.l.b16 %v273
  %v297 = vunpack.c.h.b16 %v273
  %v298 = vpack.c.b16 %v282, %v282
  %v299 = vpack.c.b16 %v283, %v283
  %v300 = vpack.c.b16 %v284, %v284
  %v301 = vpack.c.b16 %v285, %v285
  %v302 = vpack.c.b16 %v286, %v286
  %v303 = vpack.c.b16 %v287, %v287
  %v304 = vpack.c.b16 %v288, %v288
  %v305 = vpack.c.b16 %v289, %v289
  %v306 = vpack.c.b16 %v290, %v290
  %v307 = vpack.c.b16 %v291, %v291
  %v308 = vpack.c.b16 %v292, %v292
  %v309 = vpack.c.b16 %v293, %v293
  %v310 = vpack.c.b16 %v294, %v294
  %v311 = vpack.c.b16 %v295, %v295
  %v312 = vpack.c.b16 %v296, %v296
  %v313 = vpack.c.b16 %v297, %v297
  %vm330 = vcmask 60416
  %331 = vst.msk [vmem:[%s4] sm:$0xf] %vm330, %v298
  %332 = vst.msk [vmem:[%s4 + $0x4] sm:$0xf] %vm330, %v299
  %333 = vst.msk [vmem:[%s4 + $0x8] sm:$0xf] %vm330, %v300
  %334 = vst.msk [vmem:[%s4 + $0xc] sm:$0xf] %vm330, %v301
  %335 = vst.msk [vmem:[%s4 + $0x10] sm:$0xf] %vm330, %v302
  %336 = vst.msk [vmem:[%s4 + $0x14] sm:$0xf] %vm330, %v303
  %337 = vst.msk [vmem:[%s4 + $0x18] sm:$0xf] %vm330, %v304
  %338 = vst.msk [vmem:[%s4 + $0x1c] sm:$0xf] %vm330, %v305
  %339 = vst.msk [vmem:[%s4 + $0x20] sm:$0xf] %vm330, %v306
  %340 = vst.msk [vmem:[%s4 + $0x24] sm:$0xf] %vm330, %v307
  %341 = vst.msk [vmem:[%s4 + $0x28] sm:$0xf] %vm330, %v308
  %342 = vst.msk [vmem:[%s4 + $0x2c] sm:$0xf] %vm330, %v309
  %343 = vst.msk [vmem:[%s4 + $0x30] sm:$0xf] %vm330, %v310
  %344 = vst.msk [vmem:[%s4 + $0x34] sm:$0xf] %vm330, %v311
  %345 = vst.msk [vmem:[%s4 + $0x38] sm:$0xf] %vm330, %v312
  %346 = vst.msk [vmem:[%s4 + $0x3c] sm:$0xf] %vm330, %v313
  // Predicated region
  $region18: #{forward.26} parent=0 // pred_check
    _
  $region19: #{forward.26} parent=0 // pred_check_branch
    %348 = sbr.rel (0) target = $region21
  $region20: #{forward.26} parent=0 // pred_region
    _
  $region21: #{forward.26} parent=0 // pred_fallthru
    _
  // Predicated region
  $region22: #{forward.26} parent=0 // pred_check
    _
  $region23: #{forward.26} parent=0 // pred_check_branch
    %350 = sbr.rel (0) target = $region25
  $region24: #{forward.26} parent=0 // pred_region
    _
  $region25: #{forward.26} parent=0 // pred_fallthru
    _

// kernel: forward.27
$region0: #{forward.27}
  #allocation0 [shape = 'u32[]', space=smem, size = 0x4, offset = 0x4, fixed_abs, tag = 'smem constant byte address 0x4 - core index']
  #allocation1 [shape = 'u32[144,128]{1,0:T(1,128)}', space=vmem, size = 0x12000, scoped, tag = 'internal scratch']
  %s0 = inlined_call_operand.vmem [shape: bf16[32,72], index: 0, kind: input, shape index: {}]
  %s1 = inlined_call_operand.vmem [shape: bf16[72,8], index: 1, kind: input, shape index: {}]
  %s2 = inlined_call_operand.vmem [shape: f32[1,8], index: 2, kind: input, shape index: {}]
  %s3 = inlined_call_operand.vmem [shape: f32[1,8], index: 3, kind: input, shape index: {}]
  %s4 = inlined_call_operand.vmem [shape: bf16[32,8], index: 4, kind: output, shape index: {}]
  %s5 = sld [smem:[#allocation0]]
  $region26: #{forward.27} parent=0
    _
  %s7 = ssub.s32 1, %s5
  %s8 = scalar_select 0, %s7, %s5
  // Predicated region
  $region2: #{forward.27} parent=0 // pred_check
    _
  $region3: #{forward.27} parent=0 // pred_check_branch
    %10 = sbr.rel (0) target = $region5
  $region4: #{forward.27} parent=0 // pred_region
    _
  $region5: #{forward.27} parent=0 // pred_fallthru
    _
  // Predicated region
  $region6: #{forward.27} parent=0 // pred_check
    _
  $region7: #{forward.27} parent=0 // pred_check_branch
    %12 = sbr.rel (0) target = $region9
  $region8: #{forward.27} parent=0 // pred_region
    _
  $region9: #{forward.27} parent=0 // pred_fallthru
    _
  // Predicated region
  $region10: #{forward.27} parent=0 // pred_check
    _
  $region11: #{forward.27} parent=0 // pred_check_branch
    %14 = sbr.rel (0) target = $region13
  $region12: #{forward.27} parent=0 // pred_region
    _
  $region13: #{forward.27} parent=0 // pred_fallthru
    _
  // Predicated region
  $region14: #{forward.27} parent=0 // pred_check
    _
  $region15: #{forward.27} parent=0 // pred_check_branch
    %16 = sbr.rel (0) target = $region17
  $region16: #{forward.27} parent=0 // pred_region
    _
  $region17: #{forward.27} parent=0 // pred_fallthru
    _
  %v18 = vld [vmem:[%s0] sm:$0xf]
  %v19 = vld [vmem:[%s0 + $0x4] sm:$0xf]
  %v20 = vld [vmem:[%s0 + $0x8] sm:$0xf]
  %v21 = vld [vmem:[%s0 + $0xc] sm:$0xf]
  %v22 = vld [vmem:[%s1] sm:$0xf]
  %v23 = vld [vmem:[%s1 + $0x4] sm:$0xf]
  %v24 = vld [vmem:[%s1 + $0x8] sm:$0xf]
  %v25 = vld [vmem:[%s1 + $0xc] sm:$0xf]
  %v26 = vld [vmem:[%s1 + $0x10] sm:$0xf]
  %v27 = vld [vmem:[%s1 + $0x14] sm:$0xf]
  %v28 = vld [vmem:[%s1 + $0x18] sm:$0xf]
  %v29 = vld [vmem:[%s1 + $0x1c] sm:$0xf]
  %v30 = vld [vmem:[%s1 + $0x20] sm:$0xf]
  %v35 = vunpack.c.l.b16 %v18
  %v36 = vunpack.c.l.b16 %v19
  %v37 = vunpack.c.l.b16 %v20
  %v38 = vunpack.c.l.b16 %v21
  %v39 = vpack.c.b16 %v36, %v35
  %v40 = vpack.c.b16 %v38, %v37
  %v50 = vunpack.c.l.b16 %v22
  %v51 = vunpack.c.l.b16 %v23
  %v52 = vunpack.c.l.b16 %v24
  %v53 = vunpack.c.l.b16 %v25
  %v54 = vunpack.c.l.b16 %v26
  %v55 = vunpack.c.l.b16 %v27
  %v56 = vunpack.c.l.b16 %v28
  %v57 = vunpack.c.l.b16 %v29
  %v58 = vunpack.c.l.b16 %v30
  %v59 = vpack.c.b16 %v51, %v50
  %v60 = vpack.c.b16 %v53, %v52
  %v61 = vpack.c.b16 %v55, %v54
  %v62 = vpack.c.b16 %v57, %v56
  %v63 = vpack.c.b16 %v58, %v58
  %vm68 = vcmask 588800
  %v70 = vsel %vm68, %v39, 0
  %v73 = vsel %vm68, %v40, 0
  %vm75 = vcmask 1043456
  %v77 = vsel %vm75, %v63, 0
  %79 = vmatprep.subr.bf16.mxu0 0
  %80 = vmatpush1.bf16.msra.mxu0 %v59
  %81 = vmatprep.subr.bf16.mxu0 0
  %82 = vmatpush1.bf16.msra.mxu0 %v60
  %83 = vmatprep.subr.bf16.mxu0 0
  %84 = vmatpush1.bf16.msra.mxu0 %v61
  %85 = vmatprep.subr.bf16.mxu0 0
  %86 = vmatpush1.bf16.msra.mxu0 %v62
  %87 = vmatprep.subr.bf16.mxu0 0
  %88 = vmatpush1.bf16.msra.mxu0 %v77
  %89 = vmatprep.subr.bf16.mxu0 0
  %90 = vmatpush1.bf16.msra.mxu0 0
  %91 = vmatprep.subr.bf16.mxu0 0
  %92 = vmatpush1.bf16.msra.mxu0 0
  %93 = vmatprep.subr.bf16.mxu0 0
  %94 = vmatpush1.bf16.msra.mxu0 0
  %95 = vmatprep.subr.bf16.mxu0 0
  %96 = vmatpush1.bf16.msra.mxu0 0
  %97 = vmatprep.subr.bf16.mxu0 0
  %98 = vmatpush1.bf16.msra.mxu0 0
  %99 = vmatprep.subr.bf16.mxu0 0
  %100 = vmatpush1.bf16.msra.mxu0 0
  %101 = vmatprep.subr.bf16.mxu0 0
  %102 = vmatpush1.bf16.msra.mxu0 0
  %103 = vmatprep.subr.bf16.mxu0 0
  %104 = vmatpush1.bf16.msra.mxu0 0
  %105 = vmatprep.subr.bf16.mxu0 0
  %106 = vmatpush1.bf16.msra.mxu0 0
  %107 = vmatprep.subr.bf16.mxu0 0
  %108 = vmatpush1.bf16.msra.mxu0 0
  %109 = vmatprep.subr.bf16.mxu0 0
  %110 = vmatpush1.bf16.msra.mxu0 0
  %111 = vmatprep.mubr.bf16.mxu0 0
  %112 = vmatmul.mubr.bf16.gmra.mrb[0].mxu0 %v70
  %v113 = vpop.f32.mrb[0].mxu0
  %v114 = vadd.f32 0.0, %v113
  %v115 = vpop.f32.mrb[0].mxu0
  %v116 = vpop.f32.mrb[0].mxu0
  %v117 = vadd.f32 0.0, %v116
  %v118 = vpop.f32.mrb[0].mxu0
  %119 = vmatprep.mubr.bf16.mxu0 0
  %120 = vmatmul.mubr.bf16.gmra.mrb[0].mxu0 %v73
  %v121 = vpop.f32.mrb[0].mxu0
  %v122 = vadd.f32 0.0, %v121
  %v123 = vpop.f32.mrb[0].mxu0
  %v124 = vpop.f32.mrb[0].mxu0
  %v125 = vadd.f32 0.0, %v124
  %v126 = vpop.f32.mrb[0].mxu0
  %127 = vdwg.mxu0
  %v128 = vld [vmem:[%s2] sm:$0x1]
  %v130 = vlaneseq
  %v131 = vshrl.u32 %v130, 7
  %v132 = vsub.s32 0, %v131
  %v133 = vrot.slane %v128, %v132
  %v135 = vmul.f32 %v114, %v133
  %v136 = vmul.f32 %v117, %v133
  %v137 = vmul.f32 %v122, %v133
  %v138 = vmul.f32 %v125, %v133
  %v139 = vld [vmem:[%s3] sm:$0x1]
  %v141 = vlaneseq
  %v142 = vshrl.u32 %v141, 7
  %v143 = vsub.s32 0, %v142
  %v144 = vrot.slane %v139, %v143
  %v146 = vadd.f32 %v135, %v144
  %v147 = vadd.f32 %v136, %v144
  %v148 = vadd.f32 %v137, %v144
  %v149 = vadd.f32 %v138, %v144
  %v150 = vmax.f32 %v146, 0.0
  %v151 = vmax.f32 %v147, 0.0
  %v152 = vmax.f32 %v148, 0.0
  %v153 = vmax.f32 %v149, 0.0
  %v154 = vpack.c.bf16 %v151, %v150
  %v155 = vpack.c.bf16 %v153, %v152
  %v158 = vunpack.c.l.b16 %v154
  %v159 = vunpack.c.h.b16 %v154
  %v160 = vunpack.c.l.b16 %v155
  %v161 = vunpack.c.h.b16 %v155
  %v162 = vpack.c.b16 %v158, %v158
  %v163 = vpack.c.b16 %v159, %v159
  %v164 = vpack.c.b16 %v160, %v160
  %v165 = vpack.c.b16 %v161, %v161
  %vm170 = vcmask 60416
  %171 = vst.msk [vmem:[%s4] sm:$0xf] %vm170, %v162
  %172 = vst.msk [vmem:[%s4 + $0x4] sm:$0xf] %vm170, %v163
  %173 = vst.msk [vmem:[%s4 + $0x8] sm:$0xf] %vm170, %v164
  %174 = vst.msk [vmem:[%s4 + $0xc] sm:$0xf] %vm170, %v165
  // Predicated region
  $region18: #{forward.27} parent=0 // pred_check
    _
  $region19: #{forward.27} parent=0 // pred_check_branch
    %176 = sbr.rel (0) target = $region21
  $region20: #{forward.27} parent=0 // pred_region
    _
  $region21: #{forward.27} parent=0 // pred_fallthru
    _
  // Predicated region
  $region22: #{forward.27} parent=0 // pred_check
    _
  $region23: #{forward.27} parent=0 // pred_check_branch
    %178 = sbr.rel (0) target = $region25
  $region24: #{forward.27} parent=0 // pred_region
    _
  $region25: #{forward.27} parent=0 // pred_fallthru
    _

// kernel: forward.25
$region0: #{forward.25}
  #allocation0 [shape = 'u32[]', space=smem, size = 0x4, offset = 0x4, fixed_abs, tag = 'smem constant byte address 0x4 - core index']
  #allocation1 [shape = 'u32[144,128]{1,0:T(1,128)}', space=vmem, size = 0x12000, scoped, tag = 'internal scratch']
  %s0 = inlined_call_operand.vmem [shape: bf16[32,16], index: 0, kind: input, shape index: {}]
  %s1 = inlined_call_operand.vmem [shape: bf16[16,32], index: 1, kind: input, shape index: {}]
  %s2 = inlined_call_operand.vmem [shape: f32[1,32], index: 2, kind: input, shape index: {}]
  %s3 = inlined_call_operand.vmem [shape: f32[1,32], index: 3, kind: input, shape index: {}]
  %s4 = inlined_call_operand.vmem [shape: bf16[32,32], index: 4, kind: output, shape index: {}]
  %s5 = sld [smem:[#allocation0]]
  $region26: #{forward.25} parent=0
    _
  %s7 = ssub.s32 1, %s5
  %s8 = scalar_select 0, %s7, %s5
  // Predicated region
  $region2: #{forward.25} parent=0 // pred_check
    _
  $region3: #{forward.25} parent=0 // pred_check_branch
    %10 = sbr.rel (0) target = $region5
  $region4: #{forward.25} parent=0 // pred_region
    _
  $region5: #{forward.25} parent=0 // pred_fallthru
    _
  // Predicated region
  $region6: #{forward.25} parent=0 // pred_check
    _
  $region7: #{forward.25} parent=0 // pred_check_branch
    %12 = sbr.rel (0) target = $region9
  $region8: #{forward.25} parent=0 // pred_region
    _
  $region9: #{forward.25} parent=0 // pred_fallthru
    _
  // Predicated region
  $region10: #{forward.25} parent=0 // pred_check
    _
  $region11: #{forward.25} parent=0 // pred_check_branch
    %14 = sbr.rel (0) target = $region13
  $region12: #{forward.25} parent=0 // pred_region
    _
  $region13: #{forward.25} parent=0 // pred_fallthru
    _
  // Predicated region
  $region14: #{forward.25} parent=0 // pred_check
    _
  $region15: #{forward.25} parent=0 // pred_check_branch
    %16 = sbr.rel (0) target = $region17
  $region16: #{forward.25} parent=0 // pred_region
    _
  $region17: #{forward.25} parent=0 // pred_fallthru
    _
  %v18 = vld [vmem:[%s0] sm:$0xf]
  %v19 = vld [vmem:[%s0 + $0x4] sm:$0xf]
  %v20 = vld [vmem:[%s0 + $0x8] sm:$0xf]
  %v21 = vld [vmem:[%s0 + $0xc] sm:$0xf]
  %v22 = vld [vmem:[%s1] sm:$0xf]
  %v23 = vld [vmem:[%s1 + $0x4] sm:$0xf]
  %v28 = vunpack.c.l.b16 %v18
  %v29 = vunpack.c.l.b16 %v19
  %v30 = vunpack.c.l.b16 %v20
  %v31 = vunpack.c.l.b16 %v21
  %v32 = vpack.c.b16 %v29, %v28
  %v33 = vpack.c.b16 %v31, %v30
  %v36 = vunpack.c.l.b16 %v22
  %v37 = vunpack.c.l.b16 %v23
  %v38 = vpack.c.b16 %v37, %v36
  %vm40 = vcmask 130048
  %v42 = vsel %vm40, %v32, 0
  %v45 = vsel %vm40, %v33, 0
  %47 = vmatprep.subr.bf16.mxu0 0
  %48 = vmatpush1.bf16.msra.mxu0 %v38
  %49 = vmatprep.subr.bf16.mxu0 0
  %50 = vmatpush1.bf16.msra.mxu0 0
  %51 = vmatprep.subr.bf16.mxu0 0
  %52 = vmatpush1.bf16.msra.mxu0 0
  %53 = vmatprep.subr.bf16.mxu0 0
  %54 = vmatpush1.bf16.msra.mxu0 0
  %55 = vmatprep.subr.bf16.mxu0 0
  %56 = vmatpush1.bf16.msra.mxu0 0
  %57 = vmatprep.subr.bf16.mxu0 0
  %58 = vmatpush1.bf16.msra.mxu0 0
  %59 = vmatprep.subr.bf16.mxu0 0
  %60 = vmatpush1.bf16.msra.mxu0 0
  %61 = vmatprep.subr.bf16.mxu0 0
  %62 = vmatpush1.bf16.msra.mxu0 0
  %63 = vmatprep.subr.bf16.mxu0 0
  %64 = vmatpush1.bf16.msra.mxu0 0
  %65 = vmatprep.subr.bf16.mxu0 0
  %66 = vmatpush1.bf16.msra.mxu0 0
  %67 = vmatprep.subr.bf16.mxu0 0
  %68 = vmatpush1.bf16.msra.mxu0 0
  %69 = vmatprep.subr.bf16.mxu0 0
  %70 = vmatpush1.bf16.msra.mxu0 0
  %71 = vmatprep.subr.bf16.mxu0 0
  %72 = vmatpush1.bf16.msra.mxu0 0
  %73 = vmatprep.subr.bf16.mxu0 0
  %74 = vmatpush1.bf16.msra.mxu0 0
  %75 = vmatprep.subr.bf16.mxu0 0
  %76 = vmatpush1.bf16.msra.mxu0 0
  %77 = vmatprep.subr.bf16.mxu0 0
  %78 = vmatpush1.bf16.msra.mxu0 0
  %79 = vmatprep.mubr.bf16.mxu0 0
  %80 = vmatmul.mubr.bf16.gmra.mrb[0].mxu0 %v42
  %v81 = vpop.f32.mrb[0].mxu0
  %v82 = vadd.f32 0.0, %v81
  %v83 = vpop.f32.mrb[0].mxu0
  %v84 = vpop.f32.mrb[0].mxu0
  %v85 = vadd.f32 0.0, %v84
  %v86 = vpop.f32.mrb[0].mxu0
  %87 = vmatprep.mubr.bf16.mxu0 0
  %88 = vmatmul.mubr.bf16.gmra.mrb[0].mxu0 %v45
  %v89 = vpop.f32.mrb[0].mxu0
  %v90 = vadd.f32 0.0, %v89
  %v91 = vpop.f32.mrb[0].mxu0
  %v92 = vpop.f32.mrb[0].mxu0
  %v93 = vadd.f32 0.0, %v92
  %v94 = vpop.f32.mrb[0].mxu0
  %95 = vdwg.mxu0
  %v96 = vld [vmem:[%s2] sm:$0x1]
  %v98 = vlaneseq
  %v99 = vshrl.u32 %v98, 7
  %v100 = vsub.s32 0, %v99
  %v101 = vrot.slane %v96, %v100
  %v103 = vmul.f32 %v82, %v101
  %v104 = vmul.f32 %v85, %v101
  %v105 = vmul.f32 %v90, %v101
  %v106 = vmul.f32 %v93, %v101
  %v107 = vld [vmem:[%s3] sm:$0x1]
  %v109 = vlaneseq
  %v110 = vshrl.u32 %v109, 7
  %v111 = vsub.s32 0, %v110
  %v112 = vrot.slane %v107, %v111
  %v114 = vadd.f32 %v103, %v112
  %v115 = vadd.f32 %v104, %v112
  %v116 = vadd.f32 %v105, %v112
  %v117 = vadd.f32 %v106, %v112
  %v118 = vpack.c.bf16 %v115, %v114
  %v119 = vpack.c.bf16 %v117, %v116
  %v122 = vunpack.c.l.b16 %v118
  %v123 = vunpack.c.h.b16 %v118
  %v124 = vunpack.c.l.b16 %v119
  %v125 = vunpack.c.h.b16 %v119
  %v126 = vpack.c.b16 %v122, %v122
  %v127 = vpack.c.b16 %v123, %v123
  %v128 = vpack.c.b16 %v124, %v124
  %v129 = vpack.c.b16 %v125, %v125
  %vm134 = vcmask 257024
  %135 = vst.msk [vmem:[%s4] sm:$0xf] %vm134, %v126
  %136 = vst.msk [vmem:[%s4 + $0x4] sm:$0xf] %vm134, %v127
  %137 = vst.msk [vmem:[%s4 + $0x8] sm:$0xf] %vm134, %v128
  %138 = vst.msk [vmem:[%s4 + $0xc] sm:$0xf] %vm134, %v129
  // Predicated region
  $region18: #{forward.25} parent=0 // pred_check
    _
  $region19: #{forward.25} parent=0 // pred_check_branch
    %140 = sbr.rel (0) target = $region21
  $region20: #{forward.25} parent=0 // pred_region
    _
  $region21: #{forward.25} parent=0 // pred_fallthru
    _
  // Predicated region
  $region22: #{forward.25} parent=0 // pred_check
    _
  $region23: #{forward.25} parent=0 // pred_check_branch
    %142 = sbr.rel (0) target = $region25
  $region24: #{forward.25} parent=0 // pred_region
    _
  $region25: #{forward.25} parent=0 // pred_fallthru
    _

// kernel: forward.28
$region0: #{forward.28}
  #allocation0 [shape = 'u32[]', space=smem, size = 0x4, offset = 0x4, fixed_abs, tag = 'smem constant byte address 0x4 - core index']
  #allocation1 [shape = 'u32[144,128]{1,0:T(1,128)}', space=vmem, size = 0x12000, scoped, tag = 'internal scratch']
  %s0 = inlined_call_operand.vmem [shape: bf16[32,8], index: 0, kind: input, shape index: {}]
  %s1 = inlined_call_operand.vmem [shape: bf16[8,32], index: 1, kind: input, shape index: {}]
  %s2 = inlined_call_operand.vmem [shape: f32[1,32], index: 2, kind: input, shape index: {}]
  %s3 = inlined_call_operand.vmem [shape: f32[1,32], index: 3, kind: input, shape index: {}]
  %s4 = inlined_call_operand.vmem [shape: bf16[32,32], index: 4, kind: input, shape index: {}]
  %s5 = inlined_call_operand.vmem [shape: bf16[32,32], index: 5, kind: output, shape index: {}]
  %s6 = sld [smem:[#allocation0]]
  $region30: #{forward.28} parent=0
    _
  %s8 = ssub.s32 1, %s6
  %s9 = scalar_select 0, %s8, %s6
  // Predicated region
  $region2: #{forward.28} parent=0 // pred_check
    _
  $region3: #{forward.28} parent=0 // pred_check_branch
    %11 = sbr.rel (0) target = $region5
  $region4: #{forward.28} parent=0 // pred_region
    _
  $region5: #{forward.28} parent=0 // pred_fallthru
    _
  // Predicated region
  $region6: #{forward.28} parent=0 // pred_check
    _
  $region7: #{forward.28} parent=0 // pred_check_branch
    %13 = sbr.rel (0) target = $region9
  $region8: #{forward.28} parent=0 // pred_region
    _
  $region9: #{forward.28} parent=0 // pred_fallthru
    _
  // Predicated region
  $region10: #{forward.28} parent=0 // pred_check
    _
  $region11: #{forward.28} parent=0 // pred_check_branch
    %15 = sbr.rel (0) target = $region13
  $region12: #{forward.28} parent=0 // pred_region
    _
  $region13: #{forward.28} parent=0 // pred_fallthru
    _
  // Predicated region
  $region14: #{forward.28} parent=0 // pred_check
    _
  $region15: #{forward.28} parent=0 // pred_check_branch
    %17 = sbr.rel (0) target = $region17
  $region16: #{forward.28} parent=0 // pred_region
    _
  $region17: #{forward.28} parent=0 // pred_fallthru
    _
  // Predicated region
  $region18: #{forward.28} parent=0 // pred_check
    _
  $region19: #{forward.28} parent=0 // pred_check_branch
    %19 = sbr.rel (0) target = $region21
  $region20: #{forward.28} parent=0 // pred_region
    _
  $region21: #{forward.28} parent=0 // pred_fallthru
    _
  %v21 = vld [vmem:[%s0] sm:$0xf]
  %v22 = vld [vmem:[%s0 + $0x4] sm:$0xf]
  %v23 = vld [vmem:[%s0 + $0x8] sm:$0xf]
  %v24 = vld [vmem:[%s0 + $0xc] sm:$0xf]
  %v25 = vld [vmem:[%s1] sm:$0xf]
  %v30 = vunpack.c.l.b16 %v21
  %v31 = vunpack.c.l.b16 %v22
  %v32 = vunpack.c.l.b16 %v23
  %v33 = vunpack.c.l.b16 %v24
  %v34 = vpack.c.b16 %v31, %v30
  %v35 = vpack.c.b16 %v33, %v32
  %vm36 = vcmask 64512
  %v38 = vsel %vm36, %v34, 0
  %v41 = vsel %vm36, %v35, 0
  %vm43 = vcmask 1043456
  %v45 = vsel %vm43, %v25, 0
  %47 = vmatprep.subr.bf16.mxu0 0
  %48 = vmatpush1.bf16.msra.mxu0 %v45
  %49 = vmatprep.subr.bf16.mxu0 0
  %50 = vmatpush1.bf16.msra.mxu0 0
  %51 = vmatprep.subr.bf16.mxu0 0
  %52 = vmatpush1.bf16.msra.mxu0 0
  %53 = vmatprep.subr.bf16.mxu0 0
  %54 = vmatpush1.bf16.msra.mxu0 0
  %55 = vmatprep.subr.bf16.mxu0 0
  %56 = vmatpush1.bf16.msra.mxu0 0
  %57 = vmatprep.subr.bf16.mxu0 0
  %58 = vmatpush1.bf16.msra.mxu0 0
  %59 = vmatprep.subr.bf16.mxu0 0
  %60 = vmatpush1.bf16.msra.mxu0 0
  %61 = vmatprep.subr.bf16.mxu0 0
  %62 = vmatpush1.bf16.msra.mxu0 0
  %63 = vmatprep.subr.bf16.mxu0 0
  %64 = vmatpush1.bf16.msra.mxu0 0
  %65 = vmatprep.subr.bf16.mxu0 0
  %66 = vmatpush1.bf16.msra.mxu0 0
  %67 = vmatprep.subr.bf16.mxu0 0
  %68 = vmatpush1.bf16.msra.mxu0 0
  %69 = vmatprep.subr.bf16.mxu0 0
  %70 = vmatpush1.bf16.msra.mxu0 0
  %71 = vmatprep.subr.bf16.mxu0 0
  %72 = vmatpush1.bf16.msra.mxu0 0
  %73 = vmatprep.subr.bf16.mxu0 0
  %74 = vmatpush1.bf16.msra.mxu0 0
  %75 = vmatprep.subr.bf16.mxu0 0
  %76 = vmatpush1.bf16.msra.mxu0 0
  %77 = vmatprep.subr.bf16.mxu0 0
  %78 = vmatpush1.bf16.msra.mxu0 0
  %79 = vmatprep.mubr.bf16.mxu0 0
  %80 = vmatmul.mubr.bf16.gmra.mrb[0].mxu0 %v38
  %v81 = vpop.f32.mrb[0].mxu0
  %v82 = vadd.f32 0.0, %v81
  %v83 = vpop.f32.mrb[0].mxu0
  %v84 = vpop.f32.mrb[0].mxu0
  %v85 = vadd.f32 0.0, %v84
  %v86 = vpop.f32.mrb[0].mxu0
  %87 = vmatprep.mubr.bf16.mxu0 0
  %88 = vmatmul.mubr.bf16.gmra.mrb[0].mxu0 %v41
  %v89 = vpop.f32.mrb[0].mxu0
  %v90 = vadd.f32 0.0, %v89
  %v91 = vpop.f32.mrb[0].mxu0
  %v92 = vpop.f32.mrb[0].mxu0
  %v93 = vadd.f32 0.0, %v92
  %v94 = vpop.f32.mrb[0].mxu0
  %95 = vdwg.mxu0
  %v96 = vld [vmem:[%s2] sm:$0x1]
  %v98 = vlaneseq
  %v99 = vshrl.u32 %v98, 7
  %v100 = vsub.s32 0, %v99
  %v101 = vrot.slane %v96, %v100
  %v103 = vmul.f32 %v82, %v101
  %v104 = vmul.f32 %v85, %v101
  %v105 = vmul.f32 %v90, %v101
  %v106 = vmul.f32 %v93, %v101
  %v107 = vld [vmem:[%s3] sm:$0x1]
  %v109 = vlaneseq
  %v110 = vshrl.u32 %v109, 7
  %v111 = vsub.s32 0, %v110
  %v112 = vrot.slane %v107, %v111
  %v114 = vadd.f32 %v103, %v112
  %v115 = vadd.f32 %v104, %v112
  %v116 = vadd.f32 %v105, %v112
  %v117 = vadd.f32 %v106, %v112
  %v118 = vld [vmem:[%s4] sm:$0xf]
  %v119 = vld [vmem:[%s4 + $0x4] sm:$0xf]
  %v120 = vld [vmem:[%s4 + $0x8] sm:$0xf]
  %v121 = vld [vmem:[%s4 + $0xc] sm:$0xf]
  %v122 = vunpack.c.l.bf16 %v118
  %v123 = vunpack.c.l.bf16 %v119
  %v124 = vunpack.c.l.bf16 %v120
  %v125 = vunpack.c.l.bf16 %v121
  %v126 = vadd.f32 %v114, %v122
  %v127 = vadd.f32 %v115, %v123
  %v128 = vadd.f32 %v116, %v124
  %v129 = vadd.f32 %v117, %v125
  %v130 = vmax.f32 %v126, 0.0
  %v131 = vmax.f32 %v127, 0.0
  %v132 = vmax.f32 %v128, 0.0
  %v133 = vmax.f32 %v129, 0.0
  %v134 = vpack.c.bf16 %v131, %v130
  %v135 = vpack.c.bf16 %v133, %v132
  %v138 = vunpack.c.l.b16 %v134
  %v139 = vunpack.c.h.b16 %v134
  %v140 = vunpack.c.l.b16 %v135
  %v141 = vunpack.c.h.b16 %v135
  %v142 = vpack.c.b16 %v138, %v138
  %v143 = vpack.c.b16 %v139, %v139
  %v144 = vpack.c.b16 %v140, %v140
  %v145 = vpack.c.b16 %v141, %v141
  %vm150 = vcmask 257024
  %151 = vst.msk [vmem:[%s5] sm:$0xf] %vm150, %v142
  %152 = vst.msk [vmem:[%s5 + $0x4] sm:$0xf] %vm150, %v143
  %153 = vst.msk [vmem:[%s5 + $0x8] sm:$0xf] %vm150, %v144
  %154 = vst.msk [vmem:[%s5 + $0xc] sm:$0xf] %vm150, %v145
  // Predicated region
  $region22: #{forward.28} parent=0 // pred_check
    _
  $region23: #{forward.28} parent=0 // pred_check_branch
    %156 = sbr.rel (0) target = $region25
  $region24: #{forward.28} parent=0 // pred_region
    _
  $region25: #{forward.28} parent=0 // pred_fallthru
    _
  // Predicated region
  $region26: #{forward.28} parent=0 // pred_check
    _
  $region27: #{forward.28} parent=0 // pred_check_branch
    %158 = sbr.rel (0) target = $region29
  $region28: #{forward.28} parent=0 // pred_region
    _
  $region29: #{forward.28} parent=0 // pred_fallthru
    _

// kernel: forward.30
$region0: #{forward.30}
  #allocation0 [shape = 'u32[]', space=smem, size = 0x4, offset = 0x4, fixed_abs, tag = 'smem constant byte address 0x4 - core index']
  #allocation1 [shape = 'u32[144,128]{1,0:T(1,128)}', space=vmem, size = 0x12000, scoped, tag = 'internal scratch']
  %s0 = inlined_call_operand.vmem [shape: bf16[32,32], index: 0, kind: input, shape index: {}]
  %s1 = inlined_call_operand.vmem [shape: bf16[32,16], index: 1, kind: input, shape index: {}]
  %s2 = inlined_call_operand.vmem [shape: f32[1,16], index: 2, kind: input, shape index: {}]
  %s3 = inlined_call_operand.vmem [shape: f32[1,16], index: 3, kind: input, shape index: {}]
  %s4 = inlined_call_operand.vmem [shape: bf16[32,16], index: 4, kind: output, shape index: {}]
  %s5 = sld [smem:[#allocation0]]
  $region26: #{forward.30} parent=0
    _
  %s7 = ssub.s32 1, %s5
  %s8 = scalar_select 0, %s7, %s5
  // Predicated region
  $region2: #{forward.30} parent=0 // pred_check
    _
  $region3: #{forward.30} parent=0 // pred_check_branch
    %10 = sbr.rel (0) target = $region5
  $region4: #{forward.30} parent=0 // pred_region
    _
  $region5: #{forward.30} parent=0 // pred_fallthru
    _
  // Predicated region
  $region6: #{forward.30} parent=0 // pred_check
    _
  $region7: #{forward.30} parent=0 // pred_check_branch
    %12 = sbr.rel (0) target = $region9
  $region8: #{forward.30} parent=0 // pred_region
    _
  $region9: #{forward.30} parent=0 // pred_fallthru
    _
  // Predicated region
  $region10: #{forward.30} parent=0 // pred_check
    _
  $region11: #{forward.30} parent=0 // pred_check_branch
    %14 = sbr.rel (0) target = $region13
  $region12: #{forward.30} parent=0 // pred_region
    _
  $region13: #{forward.30} parent=0 // pred_fallthru
    _
  // Predicated region
  $region14: #{forward.30} parent=0 // pred_check
    _
  $region15: #{forward.30} parent=0 // pred_check_branch
    %16 = sbr.rel (0) target = $region17
  $region16: #{forward.30} parent=0 // pred_region
    _
  $region17: #{forward.30} parent=0 // pred_fallthru
    _
  %v18 = vld [vmem:[%s0] sm:$0xf]
  %v19 = vld [vmem:[%s0 + $0x4] sm:$0xf]
  %v20 = vld [vmem:[%s0 + $0x8] sm:$0xf]
  %v21 = vld [vmem:[%s0 + $0xc] sm:$0xf]
  %v22 = vld [vmem:[%s1] sm:$0xf]
  %v23 = vld [vmem:[%s1 + $0x4] sm:$0xf]
  %v24 = vld [vmem:[%s1 + $0x8] sm:$0xf]
  %v25 = vld [vmem:[%s1 + $0xc] sm:$0xf]
  %v30 = vunpack.c.l.b16 %v18
  %v31 = vunpack.c.l.b16 %v19
  %v32 = vunpack.c.l.b16 %v20
  %v33 = vunpack.c.l.b16 %v21
  %v34 = vpack.c.b16 %v31, %v30
  %v35 = vpack.c.b16 %v33, %v32
  %v40 = vunpack.c.l.b16 %v22
  %v41 = vunpack.c.l.b16 %v23
  %v42 = vunpack.c.l.b16 %v24
  %v43 = vunpack.c.l.b16 %v25
  %v44 = vpack.c.b16 %v41, %v40
  %v45 = vpack.c.b16 %v43, %v42
  %vm48 = vcmask 261120
  %v50 = vsel %vm48, %v34, 0
  %v53 = vsel %vm48, %v35, 0
  %55 = vmatprep.subr.bf16.mxu0 0
  %56 = vmatpush1.bf16.msra.mxu0 %v44
  %57 = vmatprep.subr.bf16.mxu0 0
  %58 = vmatpush1.bf16.msra.mxu0 %v45
  %59 = vmatprep.subr.bf16.mxu0 0
  %60 = vmatpush1.bf16.msra.mxu0 0
  %61 = vmatprep.subr.bf16.mxu0 0
  %62 = vmatpush1.bf16.msra.mxu0 0
  %63 = vmatprep.subr.bf16.mxu0 0
  %64 = vmatpush1.bf16.msra.mxu0 0
  %65 = vmatprep.subr.bf16.mxu0 0
  %66 = vmatpush1.bf16.msra.mxu0 0
  %67 = vmatprep.subr.bf16.mxu0 0
  %68 = vmatpush1.bf16.msra.mxu0 0
  %69 = vmatprep.subr.bf16.mxu0 0
  %70 = vmatpush1.bf16.msra.mxu0 0
  %71 = vmatprep.subr.bf16.mxu0 0
  %72 = vmatpush1.bf16.msra.mxu0 0
  %73 = vmatprep.subr.bf16.mxu0 0
  %74 = vmatpush1.bf16.msra.mxu0 0
  %75 = vmatprep.subr.bf16.mxu0 0
  %76 = vmatpush1.bf16.msra.mxu0 0
  %77 = vmatprep.subr.bf16.mxu0 0
  %78 = vmatpush1.bf16.msra.mxu0 0
  %79 = vmatprep.subr.bf16.mxu0 0
  %80 = vmatpush1.bf16.msra.mxu0 0
  %81 = vmatprep.subr.bf16.mxu0 0
  %82 = vmatpush1.bf16.msra.mxu0 0
  %83 = vmatprep.subr.bf16.mxu0 0
  %84 = vmatpush1.bf16.msra.mxu0 0
  %85 = vmatprep.subr.bf16.mxu0 0
  %86 = vmatpush1.bf16.msra.mxu0 0
  %87 = vmatprep.mubr.bf16.mxu0 0
  %88 = vmatmul.mubr.bf16.gmra.mrb[0].mxu0 %v50
  %v89 = vpop.f32.mrb[0].mxu0
  %v90 = vadd.f32 0.0, %v89
  %v91 = vpop.f32.mrb[0].mxu0
  %v92 = vpop.f32.mrb[0].mxu0
  %v93 = vadd.f32 0.0, %v92
  %v94 = vpop.f32.mrb[0].mxu0
  %95 = vmatprep.mubr.bf16.mxu0 0
  %96 = vmatmul.mubr.bf16.gmra.mrb[0].mxu0 %v53
  %v97 = vpop.f32.mrb[0].mxu0
  %v98 = vadd.f32 0.0, %v97
  %v99 = vpop.f32.mrb[0].mxu0
  %v100 = vpop.f32.mrb[0].mxu0
  %v101 = vadd.f32 0.0, %v100
  %v102 = vpop.f32.mrb[0].mxu0
  %103 = vdwg.mxu0
  %v104 = vld [vmem:[%s2] sm:$0x1]
  %v106 = vlaneseq
  %v107 = vshrl.u32 %v106, 7
  %v108 = vsub.s32 0, %v107
  %v109 = vrot.slane %v104, %v108
  %v111 = vmul.f32 %v90, %v109
  %v112 = vmul.f32 %v93, %v109
  %v113 = vmul.f32 %v98, %v109
  %v114 = vmul.f32 %v101, %v109
  %v115 = vld [vmem:[%s3] sm:$0x1]
  %v117 = vlaneseq
  %v118 = vshrl.u32 %v117, 7
  %v119 = vsub.s32 0, %v118
  %v120 = vrot.slane %v115, %v119
  %v122 = vadd.f32 %v111, %v120
  %v123 = vadd.f32 %v112, %v120
  %v124 = vadd.f32 %v113, %v120
  %v125 = vadd.f32 %v114, %v120
  %v126 = vmax.f32 %v122, 0.0
  %v127 = vmax.f32 %v123, 0.0
  %v128 = vmax.f32 %v124, 0.0
  %v129 = vmax.f32 %v125, 0.0
  %v130 = vpack.c.bf16 %v127, %v126
  %v131 = vpack.c.bf16 %v129, %v128
  %v134 = vunpack.c.l.b16 %v130
  %v135 = vunpack.c.h.b16 %v130
  %v136 = vunpack.c.l.b16 %v131
  %v137 = vunpack.c.h.b16 %v131
  %v138 = vpack.c.b16 %v134, %v134
  %v139 = vpack.c.b16 %v135, %v135
  %v140 = vpack.c.b16 %v136, %v136
  %v141 = vpack.c.b16 %v137, %v137
  %vm146 = vcmask 125952
  %147 = vst.msk [vmem:[%s4] sm:$0xf] %vm146, %v138
  %148 = vst.msk [vmem:[%s4 + $0x4] sm:$0xf] %vm146, %v139
  %149 = vst.msk [vmem:[%s4 + $0x8] sm:$0xf] %vm146, %v140
  %150 = vst.msk [vmem:[%s4 + $0xc] sm:$0xf] %vm146, %v141
  // Predicated region
  $region18: #{forward.30} parent=0 // pred_check
    _
  $region19: #{forward.30} parent=0 // pred_check_branch
    %152 = sbr.rel (0) target = $region21
  $region20: #{forward.30} parent=0 // pred_region
    _
  $region21: #{forward.30} parent=0 // pred_fallthru
    _
  // Predicated region
  $region22: #{forward.30} parent=0 // pred_check
    _
  $region23: #{forward.30} parent=0 // pred_check_branch
    %154 = sbr.rel (0) target = $region25
  $region24: #{forward.30} parent=0 // pred_region
    _
  $region25: #{forward.30} parent=0 // pred_fallthru
    _

// kernel: forward.31
$region0: #{forward.31}
  #allocation0 [shape = 'u32[]', space=smem, size = 0x4, offset = 0x4, fixed_abs, tag = 'smem constant byte address 0x4 - core index']
  #allocation1 [shape = 'u32[144,128]{1,0:T(1,128)}', space=vmem, size = 0x12000, scoped, tag = 'internal scratch']
  %s0 = inlined_call_operand.vmem [shape: bf16[16,144], index: 0, kind: input, shape index: {}]
  %s1 = inlined_call_operand.vmem [shape: bf16[144,16], index: 1, kind: input, shape index: {}]
  %s2 = inlined_call_operand.vmem [shape: f32[1,16], index: 2, kind: input, shape index: {}]
  %s3 = inlined_call_operand.vmem [shape: f32[1,16], index: 3, kind: input, shape index: {}]
  %s4 = inlined_call_operand.vmem [shape: bf16[16,16], index: 4, kind: output, shape index: {}]
  %s5 = sld [smem:[#allocation0]]
  $region26: #{forward.31} parent=0
    _
  %s7 = ssub.s32 1, %s5
  %s8 = scalar_select 0, %s7, %s5
  // Predicated region
  $region2: #{forward.31} parent=0 // pred_check
    _
  $region3: #{forward.31} parent=0 // pred_check_branch
    %10 = sbr.rel (0) target = $region5
  $region4: #{forward.31} parent=0 // pred_region
    _
  $region5: #{forward.31} parent=0 // pred_fallthru
    _
  // Predicated region
  $region6: #{forward.31} parent=0 // pred_check
    _
  $region7: #{forward.31} parent=0 // pred_check_branch
    %12 = sbr.rel (0) target = $region9
  $region8: #{forward.31} parent=0 // pred_region
    _
  $region9: #{forward.31} parent=0 // pred_fallthru
    _
  // Predicated region
  $region10: #{forward.31} parent=0 // pred_check
    _
  $region11: #{forward.31} parent=0 // pred_check_branch
    %14 = sbr.rel (0) target = $region13
  $region12: #{forward.31} parent=0 // pred_region
    _
  $region13: #{forward.31} parent=0 // pred_fallthru
    _
  // Predicated region
  $region14: #{forward.31} parent=0 // pred_check
    _
  $region15: #{forward.31} parent=0 // pred_check_branch
    %16 = sbr.rel (0) target = $region17
  $region16: #{forward.31} parent=0 // pred_region
    _
  $region17: #{forward.31} parent=0 // pred_fallthru
    _
  %v18 = vld [vmem:[%s0] sm:$0xff]
  %v19 = vld [vmem:[%s0 + $0x8] sm:$0xff]
  %v20 = vld [vmem:[%s1] sm:$0xf]
  %v21 = vld [vmem:[%s1 + $0x4] sm:$0xf]
  %v22 = vld [vmem:[%s1 + $0x8] sm:$0xf]
  %v23 = vld [vmem:[%s1 + $0xc] sm:$0xf]
  %v24 = vld [vmem:[%s1 + $0x10] sm:$0xf]
  %v25 = vld [vmem:[%s1 + $0x14] sm:$0xf]
  %v26 = vld [vmem:[%s1 + $0x18] sm:$0xf]
  %v27 = vld [vmem:[%s1 + $0x1c] sm:$0xf]
  %v28 = vld [vmem:[%s1 + $0x20] sm:$0xf]
  %v29 = vld [vmem:[%s1 + $0x24] sm:$0xf]
  %v30 = vld [vmem:[%s1 + $0x28] sm:$0xf]
  %v31 = vld [vmem:[%s1 + $0x2c] sm:$0xf]
  %v32 = vld [vmem:[%s1 + $0x30] sm:$0xf]
  %v33 = vld [vmem:[%s1 + $0x34] sm:$0xf]
  %v34 = vld [vmem:[%s1 + $0x38] sm:$0xf]
  %v35 = vld [vmem:[%s1 + $0x3c] sm:$0xf]
  %v36 = vld [vmem:[%s1 + $0x40] sm:$0xf]
  %v37 = vld [vmem:[%s1 + $0x44] sm:$0xf]
  %v40 = vunpack.c.l.b16 %v18
  %v41 = vunpack.c.h.b16 %v18
  %v42 = vunpack.c.l.b16 %v19
  %v43 = vunpack.c.h.b16 %v19
  %v44 = vpack.c.b16 %v42, %v40
  %v45 = vpack.c.b16 %v43, %v41
  %v65 = vunpack.c.l.b16 %v20
  %v66 = vunpack.c.l.b16 %v21
  %v67 = vunpack.c.l.b16 %v22
  %v68 = vunpack.c.l.b16 %v23
  %v69 = vunpack.c.l.b16 %v24
  %v70 = vunpack.c.l.b16 %v25
  %v71 = vunpack.c.l.b16 %v26
  %v72 = vunpack.c.l.b16 %v27
  %v73 = vunpack.c.l.b16 %v28
  %v74 = vunpack.c.l.b16 %v29
  %v75 = vunpack.c.l.b16 %v30
  %v76 = vunpack.c.l.b16 %v31
  %v77 = vunpack.c.l.b16 %v32
  %v78 = vunpack.c.l.b16 %v33
  %v79 = vunpack.c.l.b16 %v34
  %v80 = vunpack.c.l.b16 %v35
  %v81 = vunpack.c.l.b16 %v36
  %v82 = vunpack.c.l.b16 %v37
  %v83 = vpack.c.b16 %v66, %v65
  %v84 = vpack.c.b16 %v68, %v67
  %v85 = vpack.c.b16 %v70, %v69
  %v86 = vpack.c.b16 %v72, %v71
  %v87 = vpack.c.b16 %v74, %v73
  %v88 = vpack.c.b16 %v76, %v75
  %v89 = vpack.c.b16 %v78, %v77
  %v90 = vpack.c.b16 %v80, %v79
  %v91 = vpack.c.b16 %v82, %v81
  %vm101 = vcmask 130048
  %v103 = vsel %vm101, %v45, 0
  %105 = vmatprep.subr.bf16.mxu0 0
  %106 = vmatpush1.bf16.msra.mxu0 %v83
  %107 = vmatprep.subr.bf16.mxu0 0
  %108 = vmatpush1.bf16.msra.mxu0 %v84
  %109 = vmatprep.subr.bf16.mxu0 0
  %110 = vmatpush1.bf16.msra.mxu0 %v85
  %111 = vmatprep.subr.bf16.mxu0 0
  %112 = vmatpush1.bf16.msra.mxu0 %v86
  %113 = vmatprep.subr.bf16.mxu0 0
  %114 = vmatpush1.bf16.msra.mxu0 %v87
  %115 = vmatprep.subr.bf16.mxu0 0
  %116 = vmatpush1.bf16.msra.mxu0 %v88
  %117 = vmatprep.subr.bf16.mxu0 0
  %118 = vmatpush1.bf16.msra.mxu0 %v89
  %119 = vmatprep.subr.bf16.mxu0 0
  %120 = vmatpush1.bf16.msra.mxu0 %v90
  %121 = vmatprep.subr.bf16.mxu0 0
  %122 = vmatpush1.bf16.msra.mxu0 %v91
  %123 = vmatprep.subr.bf16.mxu0 0
  %124 = vmatpush1.bf16.msra.mxu0 0
  %125 = vmatprep.subr.bf16.mxu0 0
  %126 = vmatpush1.bf16.msra.mxu0 0
  %127 = vmatprep.subr.bf16.mxu0 0
  %128 = vmatpush1.bf16.msra.mxu0 0
  %129 = vmatprep.subr.bf16.mxu0 0
  %130 = vmatpush1.bf16.msra.mxu0 0
  %131 = vmatprep.subr.bf16.mxu0 0
  %132 = vmatpush1.bf16.msra.mxu0 0
  %133 = vmatprep.subr.bf16.mxu0 0
  %134 = vmatpush1.bf16.msra.mxu0 0
  %135 = vmatprep.subr.bf16.mxu0 0
  %136 = vmatpush1.bf16.msra.mxu0 0
  %137 = vmatprep.mubr.bf16.mxu0 %v103
  %138 = vmatmul.mubr.bf16.gmra.mrb[0].mxu0 %v44
  %v139 = vpop.f32.mrb[0].mxu0
  %v140 = vadd.f32 0.0, %v139
  %v141 = vpop.f32.mrb[0].mxu0
  %v142 = vpop.f32.mrb[0].mxu0
  %v143 = vadd.f32 0.0, %v142
  %v144 = vpop.f32.mrb[0].mxu0
  %145 = vdwg.mxu0
  %v146 = vld [vmem:[%s2] sm:$0x1]
  %v148 = vlaneseq
  %v149 = vshrl.u32 %v148, 7
  %v150 = vsub.s32 0, %v149
  %v151 = vrot.slane %v146, %v150
  %v153 = vmul.f32 %v140, %v151
  %v154 = vmul.f32 %v143, %v151
  %v155 = vld [vmem:[%s3] sm:$0x1]
  %v157 = vlaneseq
  %v158 = vshrl.u32 %v157, 7
  %v159 = vsub.s32 0, %v158
  %v160 = vrot.slane %v155, %v159
  %v162 = vadd.f32 %v153, %v160
  %v163 = vadd.f32 %v154, %v160
  %v164 = vmax.f32 %v162, 0.0
  %v165 = vmax.f32 %v163, 0.0
  %v166 = vpack.c.bf16 %v165, %v164
  %v168 = vunpack.c.l.b16 %v166
  %v169 = vunpack.c.h.b16 %v166
  %v170 = vpack.c.b16 %v168, %v168
  %v171 = vpack.c.b16 %v169, %v169
  %vm174 = vcmask 125952
  %175 = vst.msk [vmem:[%s4] sm:$0xf] %vm174, %v170
  %176 = vst.msk [vmem:[%s4 + $0x4] sm:$0xf] %vm174, %v171
  // Predicated region
  $region18: #{forward.31} parent=0 // pred_check
    _
  $region19: #{forward.31} parent=0 // pred_check_branch
    %178 = sbr.rel (0) target = $region21
  $region20: #{forward.31} parent=0 // pred_region
    _
  $region21: #{forward.31} parent=0 // pred_fallthru
    _
  // Predicated region
  $region22: #{forward.31} parent=0 // pred_check
    _
  $region23: #{forward.31} parent=0 // pred_check_branch
    %180 = sbr.rel (0) target = $region25
  $region24: #{forward.31} parent=0 // pred_region
    _
  $region25: #{forward.31} parent=0 // pred_fallthru
    _

// kernel: forward.29
$region0: #{forward.29}
  #allocation0 [shape = 'u32[]', space=smem, size = 0x4, offset = 0x4, fixed_abs, tag = 'smem constant byte address 0x4 - core index']
  #allocation1 [shape = 'u32[144,128]{1,0:T(1,128)}', space=vmem, size = 0x12000, scoped, tag = 'internal scratch']
  %s0 = inlined_call_operand.vmem [shape: bf16[16,32], index: 0, kind: input, shape index: {}]
  %s1 = inlined_call_operand.vmem [shape: bf16[32,64], index: 1, kind: input, shape index: {}]
  %s2 = inlined_call_operand.vmem [shape: f32[1,64], index: 2, kind: input, shape index: {}]
  %s3 = inlined_call_operand.vmem [shape: f32[1,64], index: 3, kind: input, shape index: {}]
  %s4 = inlined_call_operand.vmem [shape: bf16[16,64], index: 4, kind: output, shape index: {}]
  %s5 = sld [smem:[#allocation0]]
  $region26: #{forward.29} parent=0
    _
  %s7 = ssub.s32 1, %s5
  %s8 = scalar_select 0, %s7, %s5
  // Predicated region
  $region2: #{forward.29} parent=0 // pred_check
    _
  $region3: #{forward.29} parent=0 // pred_check_branch
    %10 = sbr.rel (0) target = $region5
  $region4: #{forward.29} parent=0 // pred_region
    _
  $region5: #{forward.29} parent=0 // pred_fallthru
    _
  // Predicated region
  $region6: #{forward.29} parent=0 // pred_check
    _
  $region7: #{forward.29} parent=0 // pred_check_branch
    %12 = sbr.rel (0) target = $region9
  $region8: #{forward.29} parent=0 // pred_region
    _
  $region9: #{forward.29} parent=0 // pred_fallthru
    _
  // Predicated region
  $region10: #{forward.29} parent=0 // pred_check
    _
  $region11: #{forward.29} parent=0 // pred_check_branch
    %14 = sbr.rel (0) target = $region13
  $region12: #{forward.29} parent=0 // pred_region
    _
  $region13: #{forward.29} parent=0 // pred_fallthru
    _
  // Predicated region
  $region14: #{forward.29} parent=0 // pred_check
    _
  $region15: #{forward.29} parent=0 // pred_check_branch
    %16 = sbr.rel (0) target = $region17
  $region16: #{forward.29} parent=0 // pred_region
    _
  $region17: #{forward.29} parent=0 // pred_fallthru
    _
  %v18 = vld [vmem:[%s0] sm:$0xf]
  %v19 = vld [vmem:[%s0 + $0x4] sm:$0xf]
  %v20 = vld [vmem:[%s1] sm:$0xf]
  %v21 = vld [vmem:[%s1 + $0x4] sm:$0xf]
  %v22 = vld [vmem:[%s1 + $0x8] sm:$0xf]
  %v23 = vld [vmem:[%s1 + $0xc] sm:$0xf]
  %v26 = vunpack.c.l.b16 %v18
  %v27 = vunpack.c.l.b16 %v19
  %v28 = vpack.c.b16 %v27, %v26
  %v33 = vunpack.c.l.b16 %v20
  %v34 = vunpack.c.l.b16 %v21
  %v35 = vunpack.c.l.b16 %v22
  %v36 = vunpack.c.l.b16 %v23
  %v37 = vpack.c.b16 %v34, %v33
  %v38 = vpack.c.b16 %v36, %v35
  %vm41 = vcmask 261120
  %v43 = vsel %vm41, %v28, 0
  %45 = vmatprep.subr.bf16.mxu0 0
  %46 = vmatpush1.bf16.msra.mxu0 %v37
  %47 = vmatprep.subr.bf16.mxu0 0
  %48 = vmatpush1.bf16.msra.mxu0 %v38
  %49 = vmatprep.subr.bf16.mxu0 0
  %50 = vmatpush1.bf16.msra.mxu0 0
  %51 = vmatprep.subr.bf16.mxu0 0
  %52 = vmatpush1.bf16.msra.mxu0 0
  %53 = vmatprep.subr.bf16.mxu0 0
  %54 = vmatpush1.bf16.msra.mxu0 0
  %55 = vmatprep.subr.bf16.mxu0 0
  %56 = vmatpush1.bf16.msra.mxu0 0
  %57 = vmatprep.subr.bf16.mxu0 0
  %58 = vmatpush1.bf16.msra.mxu0 0
  %59 = vmatprep.subr.bf16.mxu0 0
  %60 = vmatpush1.bf16.msra.mxu0 0
  %61 = vmatprep.subr.bf16.mxu0 0
  %62 = vmatpush1.bf16.msra.mxu0 0
  %63 = vmatprep.subr.bf16.mxu0 0
  %64 = vmatpush1.bf16.msra.mxu0 0
  %65 = vmatprep.subr.bf16.mxu0 0
  %66 = vmatpush1.bf16.msra.mxu0 0
  %67 = vmatprep.subr.bf16.mxu0 0
  %68 = vmatpush1.bf16.msra.mxu0 0
  %69 = vmatprep.subr.bf16.mxu0 0
  %70 = vmatpush1.bf16.msra.mxu0 0
  %71 = vmatprep.subr.bf16.mxu0 0
  %72 = vmatpush1.bf16.msra.mxu0 0
  %73 = vmatprep.subr.bf16.mxu0 0
  %74 = vmatpush1.bf16.msra.mxu0 0
  %75 = vmatprep.subr.bf16.mxu0 0
  %76 = vmatpush1.bf16.msra.mxu0 0
  %77 = vmatprep.mubr.bf16.mxu0 0
  %78 = vmatmul.mubr.bf16.gmra.mrb[0].mxu0 %v43
  %v79 = vpop.f32.mrb[0].mxu0
  %v80 = vadd.f32 0.0, %v79
  %v81 = vpop.f32.mrb[0].mxu0
  %v82 = vpop.f32.mrb[0].mxu0
  %v83 = vadd.f32 0.0, %v82
  %v84 = vpop.f32.mrb[0].mxu0
  %85 = vdwg.mxu0
  %v86 = vld [vmem:[%s2] sm:$0x1]
  %v88 = vlaneseq
  %v89 = vshrl.u32 %v88, 7
  %v90 = vsub.s32 0, %v89
  %v91 = vrot.slane %v86, %v90
  %v93 = vmul.f32 %v80, %v91
  %v94 = vmul.f32 %v83, %v91
  %v95 = vld [vmem:[%s3] sm:$0x1]
  %v97 = vlaneseq
  %v98 = vshrl.u32 %v97, 7
  %v99 = vsub.s32 0, %v98
  %v100 = vrot.slane %v95, %v99
  %v102 = vadd.f32 %v93, %v100
  %v103 = vadd.f32 %v94, %v100
  %v104 = vpack.c.bf16 %v103, %v102
  %v106 = vunpack.c.l.b16 %v104
  %v107 = vunpack.c.h.b16 %v104
  %v108 = vpack.c.b16 %v106, %v106
  %v109 = vpack.c.b16 %v107, %v107
  %vm112 = vcmask 519168
  %113 = vst.msk [vmem:[%s4] sm:$0xf] %vm112, %v108
  %114 = vst.msk [vmem:[%s4 + $0x4] sm:$0xf] %vm112, %v109
  // Predicated region
  $region18: #{forward.29} parent=0 // pred_check
    _
  $region19: #{forward.29} parent=0 // pred_check_branch
    %116 = sbr.rel (0) target = $region21
  $region20: #{forward.29} parent=0 // pred_region
    _
  $region21: #{forward.29} parent=0 // pred_fallthru
    _
  // Predicated region
  $region22: #{forward.29} parent=0 // pred_check
    _
  $region23: #{forward.29} parent=0 // pred_check_branch
    %118 = sbr.rel (0) target = $region25
  $region24: #{forward.29} parent=0 // pred_region
    _
  $region25: #{forward.29} parent=0 // pred_fallthru
    _

// kernel: forward.32
$region0: #{forward.32}
  #allocation0 [shape = 'u32[]', space=smem, size = 0x4, offset = 0x4, fixed_abs, tag = 'smem constant byte address 0x4 - core index']
  #allocation1 [shape = 'u32[144,128]{1,0:T(1,128)}', space=vmem, size = 0x12000, scoped, tag = 'internal scratch']
  %s0 = inlined_call_operand.vmem [shape: bf16[16,16], index: 0, kind: input, shape index: {}]
  %s1 = inlined_call_operand.vmem [shape: bf16[16,64], index: 1, kind: input, shape index: {}]
  %s2 = inlined_call_operand.vmem [shape: f32[1,64], index: 2, kind: input, shape index: {}]
  %s3 = inlined_call_operand.vmem [shape: f32[1,64], index: 3, kind: input, shape index: {}]
  %s4 = inlined_call_operand.vmem [shape: bf16[16,64], index: 4, kind: input, shape index: {}]
  %s5 = inlined_call_operand.vmem [shape: bf16[16,64], index: 5, kind: output, shape index: {}]
  %s6 = sld [smem:[#allocation0]]
  $region30: #{forward.32} parent=0
    _
  %s8 = ssub.s32 1, %s6
  %s9 = scalar_select 0, %s8, %s6
  // Predicated region
  $region2: #{forward.32} parent=0 // pred_check
    _
  $region3: #{forward.32} parent=0 // pred_check_branch
    %11 = sbr.rel (0) target = $region5
  $region4: #{forward.32} parent=0 // pred_region
    _
  $region5: #{forward.32} parent=0 // pred_fallthru
    _
  // Predicated region
  $region6: #{forward.32} parent=0 // pred_check
    _
  $region7: #{forward.32} parent=0 // pred_check_branch
    %13 = sbr.rel (0) target = $region9
  $region8: #{forward.32} parent=0 // pred_region
    _
  $region9: #{forward.32} parent=0 // pred_fallthru
    _
  // Predicated region
  $region10: #{forward.32} parent=0 // pred_check
    _
  $region11: #{forward.32} parent=0 // pred_check_branch
    %15 = sbr.rel (0) target = $region13
  $region12: #{forward.32} parent=0 // pred_region
    _
  $region13: #{forward.32} parent=0 // pred_fallthru
    _
  // Predicated region
  $region14: #{forward.32} parent=0 // pred_check
    _
  $region15: #{forward.32} parent=0 // pred_check_branch
    %17 = sbr.rel (0) target = $region17
  $region16: #{forward.32} parent=0 // pred_region
    _
  $region17: #{forward.32} parent=0 // pred_fallthru
    _
  // Predicated region
  $region18: #{forward.32} parent=0 // pred_check
    _
  $region19: #{forward.32} parent=0 // pred_check_branch
    %19 = sbr.rel (0) target = $region21
  $region20: #{forward.32} parent=0 // pred_region
    _
  $region21: #{forward.32} parent=0 // pred_fallthru
    _
  %v21 = vld [vmem:[%s0] sm:$0xf]
  %v22 = vld [vmem:[%s0 + $0x4] sm:$0xf]
  %v23 = vld [vmem:[%s1] sm:$0xf]
  %v24 = vld [vmem:[%s1 + $0x4] sm:$0xf]
  %v27 = vunpack.c.l.b16 %v21
  %v28 = vunpack.c.l.b16 %v22
  %v29 = vpack.c.b16 %v28, %v27
  %v32 = vunpack.c.l.b16 %v23
  %v33 = vunpack.c.l.b16 %v24
  %v34 = vpack.c.b16 %v33, %v32
  %vm36 = vcmask 130048
  %v38 = vsel %vm36, %v29, 0
  %40 = vmatprep.subr.bf16.mxu0 0
  %41 = vmatpush1.bf16.msra.mxu0 %v34
  %42 = vmatprep.subr.bf16.mxu0 0
  %43 = vmatpush1.bf16.msra.mxu0 0
  %44 = vmatprep.subr.bf16.mxu0 0
  %45 = vmatpush1.bf16.msra.mxu0 0
  %46 = vmatprep.subr.bf16.mxu0 0
  %47 = vmatpush1.bf16.msra.mxu0 0
  %48 = vmatprep.subr.bf16.mxu0 0
  %49 = vmatpush1.bf16.msra.mxu0 0
  %50 = vmatprep.subr.bf16.mxu0 0
  %51 = vmatpush1.bf16.msra.mxu0 0
  %52 = vmatprep.subr.bf16.mxu0 0
  %53 = vmatpush1.bf16.msra.mxu0 0
  %54 = vmatprep.subr.bf16.mxu0 0
  %55 = vmatpush1.bf16.msra.mxu0 0
  %56 = vmatprep.subr.bf16.mxu0 0
  %57 = vmatpush1.bf16.msra.mxu0 0
  %58 = vmatprep.subr.bf16.mxu0 0
  %59 = vmatpush1.bf16.msra.mxu0 0
  %60 = vmatprep.subr.bf16.mxu0 0
  %61 = vmatpush1.bf16.msra.mxu0 0
  %62 = vmatprep.subr.bf16.mxu0 0
  %63 = vmatpush1.bf16.msra.mxu0 0
  %64 = vmatprep.subr.bf16.mxu0 0
  %65 = vmatpush1.bf16.msra.mxu0 0
  %66 = vmatprep.subr.bf16.mxu0 0
  %67 = vmatpush1.bf16.msra.mxu0 0
  %68 = vmatprep.subr.bf16.mxu0 0
  %69 = vmatpush1.bf16.msra.mxu0 0
  %70 = vmatprep.subr.bf16.mxu0 0
  %71 = vmatpush1.bf16.msra.mxu0 0
  %72 = vmatprep.mubr.bf16.mxu0 0
  %73 = vmatmul.mubr.bf16.gmra.mrb[0].mxu0 %v38
  %v74 = vpop.f32.mrb[0].mxu0
  %v75 = vadd.f32 0.0, %v74
  %v76 = vpop.f32.mrb[0].mxu0
  %v77 = vpop.f32.mrb[0].mxu0
  %v78 = vadd.f32 0.0, %v77
  %v79 = vpop.f32.mrb[0].mxu0
  %80 = vdwg.mxu0
  %v81 = vld [vmem:[%s2] sm:$0x1]
  %v83 = vlaneseq
  %v84 = vshrl.u32 %v83, 7
  %v85 = vsub.s32 0, %v84
  %v86 = vrot.slane %v81, %v85
  %v88 = vmul.f32 %v75, %v86
  %v89 = vmul.f32 %v78, %v86
  %v90 = vld [vmem:[%s3] sm:$0x1]
  %v92 = vlaneseq
  %v93 = vshrl.u32 %v92, 7
  %v94 = vsub.s32 0, %v93
  %v95 = vrot.slane %v90, %v94
  %v97 = vadd.f32 %v88, %v95
  %v98 = vadd.f32 %v89, %v95
  %v99 = vld [vmem:[%s4] sm:$0xf]
  %v100 = vld [vmem:[%s4 + $0x4] sm:$0xf]
  %v101 = vunpack.c.l.bf16 %v99
  %v102 = vunpack.c.l.bf16 %v100
  %v103 = vadd.f32 %v97, %v101
  %v104 = vadd.f32 %v98, %v102
  %v105 = vmax.f32 %v103, 0.0
  %v106 = vmax.f32 %v104, 0.0
  %v107 = vpack.c.bf16 %v106, %v105
  %v109 = vunpack.c.l.b16 %v107
  %v110 = vunpack.c.h.b16 %v107
  %v111 = vpack.c.b16 %v109, %v109
  %v112 = vpack.c.b16 %v110, %v110
  %vm115 = vcmask 519168
  %116 = vst.msk [vmem:[%s5] sm:$0xf] %vm115, %v111
  %117 = vst.msk [vmem:[%s5 + $0x4] sm:$0xf] %vm115, %v112
  // Predicated region
  $region22: #{forward.32} parent=0 // pred_check
    _
  $region23: #{forward.32} parent=0 // pred_check_branch
    %119 = sbr.rel (0) target = $region25
  $region24: #{forward.32} parent=0 // pred_region
    _
  $region25: #{forward.32} parent=0 // pred_fallthru
    _
  // Predicated region
  $region26: #{forward.32} parent=0 // pred_check
    _
  $region27: #{forward.32} parent=0 // pred_check_branch
    %121 = sbr.rel (0) target = $region29
  $region28: #{forward.32} parent=0 // pred_region
    _
  $region29: #{forward.32} parent=0 // pred_fallthru
    _

// kernel: forward.34
$region0: #{forward.34}
  #allocation0 [shape = 'u32[]', space=smem, size = 0x4, offset = 0x4, fixed_abs, tag = 'smem constant byte address 0x4 - core index']
  #allocation1 [shape = 'u32[144,128]{1,0:T(1,128)}', space=vmem, size = 0x12000, scoped, tag = 'internal scratch']
  %s0 = inlined_call_operand.vmem [shape: bf16[16,64], index: 0, kind: input, shape index: {}]
  %s1 = inlined_call_operand.vmem [shape: bf16[64,32], index: 1, kind: input, shape index: {}]
  %s2 = inlined_call_operand.vmem [shape: f32[1,32], index: 2, kind: input, shape index: {}]
  %s3 = inlined_call_operand.vmem [shape: f32[1,32], index: 3, kind: input, shape index: {}]
  %s4 = inlined_call_operand.vmem [shape: bf16[16,32], index: 4, kind: output, shape index: {}]
  %s5 = sld [smem:[#allocation0]]
  $region26: #{forward.34} parent=0
    _
  %s7 = ssub.s32 1, %s5
  %s8 = scalar_select 0, %s7, %s5
  // Predicated region
  $region2: #{forward.34} parent=0 // pred_check
    _
  $region3: #{forward.34} parent=0 // pred_check_branch
    %10 = sbr.rel (0) target = $region5
  $region4: #{forward.34} parent=0 // pred_region
    _
  $region5: #{forward.34} parent=0 // pred_fallthru
    _
  // Predicated region
  $region6: #{forward.34} parent=0 // pred_check
    _
  $region7: #{forward.34} parent=0 // pred_check_branch
    %12 = sbr.rel (0) target = $region9
  $region8: #{forward.34} parent=0 // pred_region
    _
  $region9: #{forward.34} parent=0 // pred_fallthru
    _
  // Predicated region
  $region10: #{forward.34} parent=0 // pred_check
    _
  $region11: #{forward.34} parent=0 // pred_check_branch
    %14 = sbr.rel (0) target = $region13
  $region12: #{forward.34} parent=0 // pred_region
    _
  $region13: #{forward.34} parent=0 // pred_fallthru
    _
  // Predicated region
  $region14: #{forward.34} parent=0 // pred_check
    _
  $region15: #{forward.34} parent=0 // pred_check_branch
    %16 = sbr.rel (0) target = $region17
  $region16: #{forward.34} parent=0 // pred_region
    _
  $region17: #{forward.34} parent=0 // pred_fallthru
    _
  %v18 = vld [vmem:[%s0] sm:$0xf]
  %v19 = vld [vmem:[%s0 + $0x4] sm:$0xf]
  %v20 = vld [vmem:[%s1] sm:$0xf]
  %v21 = vld [vmem:[%s1 + $0x4] sm:$0xf]
  %v22 = vld [vmem:[%s1 + $0x8] sm:$0xf]
  %v23 = vld [vmem:[%s1 + $0xc] sm:$0xf]
  %v24 = vld [vmem:[%s1 + $0x10] sm:$0xf]
  %v25 = vld [vmem:[%s1 + $0x14] sm:$0xf]
  %v26 = vld [vmem:[%s1 + $0x18] sm:$0xf]
  %v27 = vld [vmem:[%s1 + $0x1c] sm:$0xf]
  %v30 = vunpack.c.l.b16 %v18
  %v31 = vunpack.c.l.b16 %v19
  %v32 = vpack.c.b16 %v31, %v30
  %v41 = vunpack.c.l.b16 %v20
  %v42 = vunpack.c.l.b16 %v21
  %v43 = vunpack.c.l.b16 %v22
  %v44 = vunpack.c.l.b16 %v23
  %v45 = vunpack.c.l.b16 %v24
  %v46 = vunpack.c.l.b16 %v25
  %v47 = vunpack.c.l.b16 %v26
  %v48 = vunpack.c.l.b16 %v27
  %v49 = vpack.c.b16 %v42, %v41
  %v50 = vpack.c.b16 %v44, %v43
  %v51 = vpack.c.b16 %v46, %v45
  %v52 = vpack.c.b16 %v48, %v47
  %vm57 = vcmask 523264
  %v59 = vsel %vm57, %v32, 0
  %61 = vmatprep.subr.bf16.mxu0 0
  %62 = vmatpush1.bf16.msra.mxu0 %v49
  %63 = vmatprep.subr.bf16.mxu0 0
  %64 = vmatpush1.bf16.msra.mxu0 %v50
  %65 = vmatprep.subr.bf16.mxu0 0
  %66 = vmatpush1.bf16.msra.mxu0 %v51
  %67 = vmatprep.subr.bf16.mxu0 0
  %68 = vmatpush1.bf16.msra.mxu0 %v52
  %69 = vmatprep.subr.bf16.mxu0 0
  %70 = vmatpush1.bf16.msra.mxu0 0
  %71 = vmatprep.subr.bf16.mxu0 0
  %72 = vmatpush1.bf16.msra.mxu0 0
  %73 = vmatprep.subr.bf16.mxu0 0
  %74 = vmatpush1.bf16.msra.mxu0 0
  %75 = vmatprep.subr.bf16.mxu0 0
  %76 = vmatpush1.bf16.msra.mxu0 0
  %77 = vmatprep.subr.bf16.mxu0 0
  %78 = vmatpush1.bf16.msra.mxu0 0
  %79 = vmatprep.subr.bf16.mxu0 0
  %80 = vmatpush1.bf16.msra.mxu0 0
  %81 = vmatprep.subr.bf16.mxu0 0
  %82 = vmatpush1.bf16.msra.mxu0 0
  %83 = vmatprep.subr.bf16.mxu0 0
  %84 = vmatpush1.bf16.msra.mxu0 0
  %85 = vmatprep.subr.bf16.mxu0 0
  %86 = vmatpush1.bf16.msra.mxu0 0
  %87 = vmatprep.subr.bf16.mxu0 0
  %88 = vmatpush1.bf16.msra.mxu0 0
  %89 = vmatprep.subr.bf16.mxu0 0
  %90 = vmatpush1.bf16.msra.mxu0 0
  %91 = vmatprep.subr.bf16.mxu0 0
  %92 = vmatpush1.bf16.msra.mxu0 0
  %93 = vmatprep.mubr.bf16.mxu0 0
  %94 = vmatmul.mubr.bf16.gmra.mrb[0].mxu0 %v59
  %v95 = vpop.f32.mrb[0].mxu0
  %v96 = vadd.f32 0.0, %v95
  %v97 = vpop.f32.mrb[0].mxu0
  %v98 = vpop.f32.mrb[0].mxu0
  %v99 = vadd.f32 0.0, %v98
  %v100 = vpop.f32.mrb[0].mxu0
  %101 = vdwg.mxu0
  %v102 = vld [vmem:[%s2] sm:$0x1]
  %v104 = vlaneseq
  %v105 = vshrl.u32 %v104, 7
  %v106 = vsub.s32 0, %v105
  %v107 = vrot.slane %v102, %v106
  %v109 = vmul.f32 %v96, %v107
  %v110 = vmul.f32 %v99, %v107
  %v111 = vld [vmem:[%s3] sm:$0x1]
  %v113 = vlaneseq
  %v114 = vshrl.u32 %v113, 7
  %v115 = vsub.s32 0, %v114
  %v116 = vrot.slane %v111, %v115
  %v118 = vadd.f32 %v109, %v116
  %v119 = vadd.f32 %v110, %v116
  %v120 = vmax.f32 %v118, 0.0
  %v121 = vmax.f32 %v119, 0.0
  %v122 = vpack.c.bf16 %v121, %v120
  %v124 = vunpack.c.l.b16 %v122
  %v125 = vunpack.c.h.b16 %v122
  %v126 = vpack.c.b16 %v124, %v124
  %v127 = vpack.c.b16 %v125, %v125
  %vm130 = vcmask 257024
  %131 = vst.msk [vmem:[%s4] sm:$0xf] %vm130, %v126
  %132 = vst.msk [vmem:[%s4 + $0x4] sm:$0xf] %vm130, %v127
  // Predicated region
  $region18: #{forward.34} parent=0 // pred_check
    _
  $region19: #{forward.34} parent=0 // pred_check_branch
    %134 = sbr.rel (0) target = $region21
  $region20: #{forward.34} parent=0 // pred_region
    _
  $region21: #{forward.34} parent=0 // pred_fallthru
    _
  // Predicated region
  $region22: #{forward.34} parent=0 // pred_check
    _
  $region23: #{forward.34} parent=0 // pred_check_branch
    %136 = sbr.rel (0) target = $region25
  $region24: #{forward.34} parent=0 // pred_region
    _
  $region25: #{forward.34} parent=0 // pred_fallthru
    _

// kernel: forward.35
$region0: #{forward.35}
  #allocation0 [shape = 'u32[]', space=smem, size = 0x4, offset = 0x4, fixed_abs, tag = 'smem constant byte address 0x4 - core index']
  #allocation1 [shape = 'u32[144,128]{1,0:T(1,128)}', space=vmem, size = 0x12000, scoped, tag = 'internal scratch']
  %s0 = inlined_call_operand.vmem [shape: bf16[16,288], index: 0, kind: input, shape index: {}]
  %s1 = inlined_call_operand.vmem [shape: bf16[288,32], index: 1, kind: input, shape index: {}]
  %s2 = inlined_call_operand.vmem [shape: f32[1,32], index: 2, kind: input, shape index: {}]
  %s3 = inlined_call_operand.vmem [shape: f32[1,32], index: 3, kind: input, shape index: {}]
  %s4 = inlined_call_operand.vmem [shape: bf16[16,32], index: 4, kind: output, shape index: {}]
  %s5 = sld [smem:[#allocation0]]
  $region26: #{forward.35} parent=0
    _
  %s7 = ssub.s32 1, %s5
  %s8 = scalar_select 0, %s7, %s5
  // Predicated region
  $region2: #{forward.35} parent=0 // pred_check
    _
  $region3: #{forward.35} parent=0 // pred_check_branch
    %10 = sbr.rel (0) target = $region5
  $region4: #{forward.35} parent=0 // pred_region
    _
  $region5: #{forward.35} parent=0 // pred_fallthru
    _
  // Predicated region
  $region6: #{forward.35} parent=0 // pred_check
    _
  $region7: #{forward.35} parent=0 // pred_check_branch
    %12 = sbr.rel (0) target = $region9
  $region8: #{forward.35} parent=0 // pred_region
    _
  $region9: #{forward.35} parent=0 // pred_fallthru
    _
  // Predicated region
  $region10: #{forward.35} parent=0 // pred_check
    _
  $region11: #{forward.35} parent=0 // pred_check_branch
    %14 = sbr.rel (0) target = $region13
  $region12: #{forward.35} parent=0 // pred_region
    _
  $region13: #{forward.35} parent=0 // pred_fallthru
    _
  // Predicated region
  $region14: #{forward.35} parent=0 // pred_check
    _
  $region15: #{forward.35} parent=0 // pred_check_branch
    %16 = sbr.rel (0) target = $region17
  $region16: #{forward.35} parent=0 // pred_region
    _
  $region17: #{forward.35} parent=0 // pred_fallthru
    _
  %v18 = vld [vmem:[%s0] sm:$0xff]
  %v19 = vld [vmem:[%s0 + $0x8] sm:$0xf]
  %v20 = vld [vmem:[%s0 + $0xc] sm:$0xff]
  %v21 = vld [vmem:[%s0 + $0x14] sm:$0xf]
  %v22 = vld [vmem:[%s1] sm:$0xf]
  %v23 = vld [vmem:[%s1 + $0x4] sm:$0xf]
  %v24 = vld [vmem:[%s1 + $0x8] sm:$0xf]
  %v25 = vld [vmem:[%s1 + $0xc] sm:$0xf]
  %v26 = vld [vmem:[%s1 + $0x10] sm:$0xf]
  %v27 = vld [vmem:[%s1 + $0x14] sm:$0xf]
  %v28 = vld [vmem:[%s1 + $0x18] sm:$0xf]
  %v29 = vld [vmem:[%s1 + $0x1c] sm:$0xf]
  %v30 = vld [vmem:[%s1 + $0x20] sm:$0xf]
  %v31 = vld [vmem:[%s1 + $0x24] sm:$0xf]
  %v32 = vld [vmem:[%s1 + $0x28] sm:$0xf]
  %v33 = vld [vmem:[%s1 + $0x2c] sm:$0xf]
  %v34 = vld [vmem:[%s1 + $0x30] sm:$0xf]
  %v35 = vld [vmem:[%s1 + $0x34] sm:$0xf]
  %v36 = vld [vmem:[%s1 + $0x38] sm:$0xf]
  %v37 = vld [vmem:[%s1 + $0x3c] sm:$0xf]
  %v38 = vld [vmem:[%s1 + $0x40] sm:$0xf]
  %v39 = vld [vmem:[%s1 + $0x44] sm:$0xf]
  %v40 = vld [vmem:[%s1 + $0x48] sm:$0xf]
  %v41 = vld [vmem:[%s1 + $0x4c] sm:$0xf]
  %v42 = vld [vmem:[%s1 + $0x50] sm:$0xf]
  %v43 = vld [vmem:[%s1 + $0x54] sm:$0xf]
  %v44 = vld [vmem:[%s1 + $0x58] sm:$0xf]
  %v45 = vld [vmem:[%s1 + $0x5c] sm:$0xf]
  %v46 = vld [vmem:[%s1 + $0x60] sm:$0xf]
  %v47 = vld [vmem:[%s1 + $0x64] sm:$0xf]
  %v48 = vld [vmem:[%s1 + $0x68] sm:$0xf]
  %v49 = vld [vmem:[%s1 + $0x6c] sm:$0xf]
  %v50 = vld [vmem:[%s1 + $0x70] sm:$0xf]
  %v51 = vld [vmem:[%s1 + $0x74] sm:$0xf]
  %v52 = vld [vmem:[%s1 + $0x78] sm:$0xf]
  %v53 = vld [vmem:[%s1 + $0x7c] sm:$0xf]
  %v54 = vld [vmem:[%s1 + $0x80] sm:$0xf]
  %v55 = vld [vmem:[%s1 + $0x84] sm:$0xf]
  %v56 = vld [vmem:[%s1 + $0x88] sm:$0xf]
  %v57 = vld [vmem:[%s1 + $0x8c] sm:$0xf]
  %v62 = vunpack.c.l.b16 %v18
  %v63 = vunpack.c.h.b16 %v18
  %v64 = vunpack.c.l.b16 %v19
  %v65 = vunpack.c.l.b16 %v20
  %v66 = vunpack.c.h.b16 %v20
  %v67 = vunpack.c.l.b16 %v21
  %v68 = vpack.c.b16 %v65, %v62
  %v69 = vpack.c.b16 %v66, %v63
  %v70 = vpack.c.b16 %v67, %v64
  %v109 = vunpack.c.l.b16 %v22
  %v110 = vunpack.c.l.b16 %v23
  %v111 = vunpack.c.l.b16 %v24
  %v112 = vunpack.c.l.b16 %v25
  %v113 = vunpack.c.l.b16 %v26
  %v114 = vunpack.c.l.b16 %v27
  %v115 = vunpack.c.l.b16 %v28
  %v116 = vunpack.c.l.b16 %v29
  %v117 = vunpack.c.l.b16 %v30
  %v118 = vunpack.c.l.b16 %v31
  %v119 = vunpack.c.l.b16 %v32
  %v120 = vunpack.c.l.b16 %v33
  %v121 = vunpack.c.l.b16 %v34
  %v122 = vunpack.c.l.b16 %v35
  %v123 = vunpack.c.l.b16 %v36
  %v124 = vunpack.c.l.b16 %v37
  %v125 = vunpack.c.l.b16 %v38
  %v126 = vunpack.c.l.b16 %v39
  %v127 = vunpack.c.l.b16 %v40
  %v128 = vunpack.c.l.b16 %v41
  %v129 = vunpack.c.l.b16 %v42
  %v130 = vunpack.c.l.b16 %v43
  %v131 = vunpack.c.l.b16 %v44
  %v132 = vunpack.c.l.b16 %v45
  %v133 = vunpack.c.l.b16 %v46
  %v134 = vunpack.c.l.b16 %v47
  %v135 = vunpack.c.l.b16 %v48
  %v136 = vunpack.c.l.b16 %v49
  %v137 = vunpack.c.l.b16 %v50
  %v138 = vunpack.c.l.b16 %v51
  %v139 = vunpack.c.l.b16 %v52
  %v140 = vunpack.c.l.b16 %v53
  %v141 = vunpack.c.l.b16 %v54
  %v142 = vunpack.c.l.b16 %v55
  %v143 = vunpack.c.l.b16 %v56
  %v144 = vunpack.c.l.b16 %v57
  %v145 = vpack.c.b16 %v110, %v109
  %v146 = vpack.c.b16 %v112, %v111
  %v147 = vpack.c.b16 %v114, %v113
  %v148 = vpack.c.b16 %v116, %v115
  %v149 = vpack.c.b16 %v118, %v117
  %v150 = vpack.c.b16 %v120, %v119
  %v151 = vpack.c.b16 %v122, %v121
  %v152 = vpack.c.b16 %v124, %v123
  %v153 = vpack.c.b16 %v126, %v125
  %v154 = vpack.c.b16 %v128, %v127
  %v155 = vpack.c.b16 %v130, %v129
  %v156 = vpack.c.b16 %v132, %v131
  %v157 = vpack.c.b16 %v134, %v133
  %v158 = vpack.c.b16 %v136, %v135
  %v159 = vpack.c.b16 %v138, %v137
  %v160 = vpack.c.b16 %v140, %v139
  %v161 = vpack.c.b16 %v142, %v141
  %v162 = vpack.c.b16 %v144, %v143
  %vm181 = vcmask 261120
  %v183 = vsel %vm181, %v70, 0
  %185 = vmatprep.subr.bf16.mxu0 0
  %186 = vmatpush1.bf16.msra.mxu0 %v145
  %187 = vmatprep.subr.bf16.mxu0 0
  %188 = vmatpush1.bf16.msra.mxu0 %v146
  %189 = vmatprep.subr.bf16.mxu0 0
  %190 = vmatpush1.bf16.msra.mxu0 %v147
  %191 = vmatprep.subr.bf16.mxu0 0
  %192 = vmatpush1.bf16.msra.mxu0 %v148
  %193 = vmatprep.subr.bf16.mxu0 0
  %194 = vmatpush1.bf16.msra.mxu0 %v149
  %195 = vmatprep.subr.bf16.mxu0 0
  %196 = vmatpush1.bf16.msra.mxu0 %v150
  %197 = vmatprep.subr.bf16.mxu0 0
  %198 = vmatpush1.bf16.msra.mxu0 %v151
  %199 = vmatprep.subr.bf16.mxu0 0
  %200 = vmatpush1.bf16.msra.mxu0 %v152
  %201 = vmatprep.subr.bf16.mxu0 0
  %202 = vmatpush1.bf16.msra.mxu0 %v153
  %203 = vmatprep.subr.bf16.mxu0 0
  %204 = vmatpush1.bf16.msra.mxu0 %v154
  %205 = vmatprep.subr.bf16.mxu0 0
  %206 = vmatpush1.bf16.msra.mxu0 %v155
  %207 = vmatprep.subr.bf16.mxu0 0
  %208 = vmatpush1.bf16.msra.mxu0 %v156
  %209 = vmatprep.subr.bf16.mxu0 0
  %210 = vmatpush1.bf16.msra.mxu0 %v157
  %211 = vmatprep.subr.bf16.mxu0 0
  %212 = vmatpush1.bf16.msra.mxu0 %v158
  %213 = vmatprep.subr.bf16.mxu0 0
  %214 = vmatpush1.bf16.msra.mxu0 %v159
  %215 = vmatprep.subr.bf16.mxu0 0
  %216 = vmatpush1.bf16.msra.mxu0 %v160
  %217 = vmatprep.mubr.bf16.mxu0 %v69
  %218 = vmatmul.mubr.bf16.gmra.mrb[0].mxu0 %v68
  %v219 = vpop.f32.mrb[0].mxu0
  %v220 = vadd.f32 0.0, %v219
  %v221 = vpop.f32.mrb[0].mxu0
  %v222 = vpop.f32.mrb[0].mxu0
  %v223 = vadd.f32 0.0, %v222
  %v224 = vpop.f32.mrb[0].mxu0
  %225 = vdwg.mxu0
  %226 = vmatprep.subr.bf16.mxu0 0
  %227 = vmatpush1.bf16.msra.mxu0 %v161
  %228 = vmatprep.subr.bf16.mxu0 0
  %229 = vmatpush1.bf16.msra.mxu0 %v162
  %230 = vmatprep.subr.bf16.mxu0 0
  %231 = vmatpush1.bf16.msra.mxu0 0
  %232 = vmatprep.subr.bf16.mxu0 0
  %233 = vmatpush1.bf16.msra.mxu0 0
  %234 = vmatprep.subr.bf16.mxu0 0
  %235 = vmatpush1.bf16.msra.mxu0 0
  %236 = vmatprep.subr.bf16.mxu0 0
  %237 = vmatpush1.bf16.msra.mxu0 0
  %238 = vmatprep.subr.bf16.mxu0 0
  %239 = vmatpush1.bf16.msra.mxu0 0
  %240 = vmatprep.subr.bf16.mxu0 0
  %241 = vmatpush1.bf16.msra.mxu0 0
  %242 = vmatprep.subr.bf16.mxu0 0
  %243 = vmatpush1.bf16.msra.mxu0 0
  %244 = vmatprep.subr.bf16.mxu0 0
  %245 = vmatpush1.bf16.msra.mxu0 0
  %246 = vmatprep.subr.bf16.mxu0 0
  %247 = vmatpush1.bf16.msra.mxu0 0
  %248 = vmatprep.subr.bf16.mxu0 0
  %249 = vmatpush1.bf16.msra.mxu0 0
  %250 = vmatprep.subr.bf16.mxu0 0
  %251 = vmatpush1.bf16.msra.mxu0 0
  %252 = vmatprep.subr.bf16.mxu0 0
  %253 = vmatpush1.bf16.msra.mxu0 0
  %254 = vmatprep.subr.bf16.mxu0 0
  %255 = vmatpush1.bf16.msra.mxu0 0
  %256 = vmatprep.subr.bf16.mxu0 0
  %257 = vmatpush1.bf16.msra.mxu0 0
  %258 = vmatprep.mubr.bf16.mxu0 0
  %259 = vmatmul.mubr.bf16.gmra.mrb[0].mxu0 %v183
  %v260 = vpop.f32.mrb[0].mxu0
  %v261 = vadd.f32 %v220, %v260
  %v262 = vpop.f32.mrb[0].mxu0
  %v263 = vpop.f32.mrb[0].mxu0
  %v264 = vadd.f32 %v223, %v263
  %v265 = vpop.f32.mrb[0].mxu0
  %266 = vdwg.mxu0
  %v267 = vld [vmem:[%s2] sm:$0x1]
  %v269 = vlaneseq
  %v270 = vshrl.u32 %v269, 7
  %v271 = vsub.s32 0, %v270
  %v272 = vrot.slane %v267, %v271
  %v274 = vmul.f32 %v261, %v272
  %v275 = vmul.f32 %v264, %v272
  %v276 = vld [vmem:[%s3] sm:$0x1]
  %v278 = vlaneseq
  %v279 = vshrl.u32 %v278, 7
  %v280 = vsub.s32 0, %v279
  %v281 = vrot.slane %v276, %v280
  %v283 = vadd.f32 %v274, %v281
  %v284 = vadd.f32 %v275, %v281
  %v285 = vmax.f32 %v283, 0.0
  %v286 = vmax.f32 %v284, 0.0
  %v287 = vpack.c.bf16 %v286, %v285
  %v289 = vunpack.c.l.b16 %v287
  %v290 = vunpack.c.h.b16 %v287
  %v291 = vpack.c.b16 %v289, %v289
  %v292 = vpack.c.b16 %v290, %v290
  %vm295 = vcmask 257024
  %296 = vst.msk [vmem:[%s4] sm:$0xf] %vm295, %v291
  %297 = vst.msk [vmem:[%s4 + $0x4] sm:$0xf] %vm295, %v292
  // Predicated region
  $region18: #{forward.35} parent=0 // pred_check
    _
  $region19: #{forward.35} parent=0 // pred_check_branch
    %299 = sbr.rel (0) target = $region21
  $region20: #{forward.35} parent=0 // pred_region
    _
  $region21: #{forward.35} parent=0 // pred_fallthru
    _
  // Predicated region
  $region22: #{forward.35} parent=0 // pred_check
    _
  $region23: #{forward.35} parent=0 // pred_check_branch
    %301 = sbr.rel (0) target = $region25
  $region24: #{forward.35} parent=0 // pred_region
    _
  $region25: #{forward.35} parent=0 // pred_fallthru
    _

// kernel: forward.36
$region0: #{forward.36}
  #allocation0 [shape = 'u32[]', space=smem, size = 0x4, offset = 0x4, fixed_abs, tag = 'smem constant byte address 0x4 - core index']
  #allocation1 [shape = 'u32[144,128]{1,0:T(1,128)}', space=vmem, size = 0x12000, scoped, tag = 'internal scratch']
  %s0 = inlined_call_operand.vmem [shape: bf16[16,32], index: 0, kind: input, shape index: {}]
  %s1 = inlined_call_operand.vmem [shape: bf16[32,128], index: 1, kind: input, shape index: {}]
  %s2 = inlined_call_operand.vmem [shape: f32[1,128], index: 2, kind: input, shape index: {}]
  %s3 = inlined_call_operand.vmem [shape: f32[1,128], index: 3, kind: input, shape index: {}]
  %s4 = inlined_call_operand.vmem [shape: bf16[16,128], index: 4, kind: input, shape index: {}]
  %s5 = inlined_call_operand.vmem [shape: bf16[16,128], index: 5, kind: output, shape index: {}]
  %s6 = sld [smem:[#allocation0]]
  $region30: #{forward.36} parent=0
    _
  %s8 = ssub.s32 1, %s6
  %s9 = scalar_select 0, %s8, %s6
  // Predicated region
  $region2: #{forward.36} parent=0 // pred_check
    _
  $region3: #{forward.36} parent=0 // pred_check_branch
    %11 = sbr.rel (0) target = $region5
  $region4: #{forward.36} parent=0 // pred_region
    _
  $region5: #{forward.36} parent=0 // pred_fallthru
    _
  // Predicated region
  $region6: #{forward.36} parent=0 // pred_check
    _
  $region7: #{forward.36} parent=0 // pred_check_branch
    %13 = sbr.rel (0) target = $region9
  $region8: #{forward.36} parent=0 // pred_region
    _
  $region9: #{forward.36} parent=0 // pred_fallthru
    _
  // Predicated region
  $region10: #{forward.36} parent=0 // pred_check
    _
  $region11: #{forward.36} parent=0 // pred_check_branch
    %15 = sbr.rel (0) target = $region13
  $region12: #{forward.36} parent=0 // pred_region
    _
  $region13: #{forward.36} parent=0 // pred_fallthru
    _
  // Predicated region
  $region14: #{forward.36} parent=0 // pred_check
    _
  $region15: #{forward.36} parent=0 // pred_check_branch
    %17 = sbr.rel (0) target = $region17
  $region16: #{forward.36} parent=0 // pred_region
    _
  $region17: #{forward.36} parent=0 // pred_fallthru
    _
  // Predicated region
  $region18: #{forward.36} parent=0 // pred_check
    _
  $region19: #{forward.36} parent=0 // pred_check_branch
    %19 = sbr.rel (0) target = $region21
  $region20: #{forward.36} parent=0 // pred_region
    _
  $region21: #{forward.36} parent=0 // pred_fallthru
    _
  %v21 = vld [vmem:[%s0] sm:$0xf]
  %v22 = vld [vmem:[%s0 + $0x4] sm:$0xf]
  %v23 = vld [vmem:[%s1] sm:$0xf]
  %v24 = vld [vmem:[%s1 + $0x4] sm:$0xf]
  %v25 = vld [vmem:[%s1 + $0x8] sm:$0xf]
  %v26 = vld [vmem:[%s1 + $0xc] sm:$0xf]
  %v29 = vunpack.c.l.b16 %v21
  %v30 = vunpack.c.l.b16 %v22
  %v31 = vpack.c.b16 %v30, %v29
  %v36 = vunpack.c.l.b16 %v23
  %v37 = vunpack.c.l.b16 %v24
  %v38 = vunpack.c.l.b16 %v25
  %v39 = vunpack.c.l.b16 %v26
  %v40 = vpack.c.b16 %v37, %v36
  %v41 = vpack.c.b16 %v39, %v38
  %vm44 = vcmask 261120
  %v46 = vsel %vm44, %v31, 0
  %48 = vmatprep.subr.bf16.mxu0 0
  %49 = vmatpush1.bf16.msra.mxu0 %v40
  %50 = vmatprep.subr.bf16.mxu0 0
  %51 = vmatpush1.bf16.msra.mxu0 %v41
  %52 = vmatprep.subr.bf16.mxu0 0
  %53 = vmatpush1.bf16.msra.mxu0 0
  %54 = vmatprep.subr.bf16.mxu0 0
  %55 = vmatpush1.bf16.msra.mxu0 0
  %56 = vmatprep.subr.bf16.mxu0 0
  %57 = vmatpush1.bf16.msra.mxu0 0
  %58 = vmatprep.subr.bf16.mxu0 0
  %59 = vmatpush1.bf16.msra.mxu0 0
  %60 = vmatprep.subr.bf16.mxu0 0
  %61 = vmatpush1.bf16.msra.mxu0 0
  %62 = vmatprep.subr.bf16.mxu0 0
  %63 = vmatpush1.bf16.msra.mxu0 0
  %64 = vmatprep.subr.bf16.mxu0 0
  %65 = vmatpush1.bf16.msra.mxu0 0
  %66 = vmatprep.subr.bf16.mxu0 0
  %67 = vmatpush1.bf16.msra.mxu0 0
  %68 = vmatprep.subr.bf16.mxu0 0
  %69 = vmatpush1.bf16.msra.mxu0 0
  %70 = vmatprep.subr.bf16.mxu0 0
  %71 = vmatpush1.bf16.msra.mxu0 0
  %72 = vmatprep.subr.bf16.mxu0 0
  %73 = vmatpush1.bf16.msra.mxu0 0
  %74 = vmatprep.subr.bf16.mxu0 0
  %75 = vmatpush1.bf16.msra.mxu0 0
  %76 = vmatprep.subr.bf16.mxu0 0
  %77 = vmatpush1.bf16.msra.mxu0 0
  %78 = vmatprep.subr.bf16.mxu0 0
  %79 = vmatpush1.bf16.msra.mxu0 0
  %80 = vmatprep.mubr.bf16.mxu0 0
  %81 = vmatmul.mubr.bf16.gmra.mrb[0].mxu0 %v46
  %v82 = vpop.f32.mrb[0].mxu0
  %v83 = vadd.f32 0.0, %v82
  %v84 = vpop.f32.mrb[0].mxu0
  %v85 = vpop.f32.mrb[0].mxu0
  %v86 = vadd.f32 0.0, %v85
  %v87 = vpop.f32.mrb[0].mxu0
  %88 = vdwg.mxu0
  %v89 = vld [vmem:[%s2] sm:$0x1]
  %v91 = vlaneseq
  %v92 = vshrl.u32 %v91, 7
  %v93 = vsub.s32 0, %v92
  %v94 = vrot.slane %v89, %v93
  %v96 = vmul.f32 %v83, %v94
  %v97 = vmul.f32 %v86, %v94
  %v98 = vld [vmem:[%s3] sm:$0x1]
  %v100 = vlaneseq
  %v101 = vshrl.u32 %v100, 7
  %v102 = vsub.s32 0, %v101
  %v103 = vrot.slane %v98, %v102
  %v105 = vadd.f32 %v96, %v103
  %v106 = vadd.f32 %v97, %v103
  %v107 = vld [vmem:[%s4] sm:$0xf]
  %v108 = vld [vmem:[%s4 + $0x4] sm:$0xf]
  %v109 = vunpack.c.l.bf16 %v107
  %v110 = vunpack.c.l.bf16 %v108
  %v111 = vadd.f32 %v105, %v109
  %v112 = vadd.f32 %v106, %v110
  %v113 = vmax.f32 %v111, 0.0
  %v114 = vmax.f32 %v112, 0.0
  %v115 = vpack.c.bf16 %v114, %v113
  %v117 = vunpack.c.l.b16 %v115
  %v118 = vunpack.c.h.b16 %v115
  %v119 = vpack.c.b16 %v117, %v117
  %v120 = vpack.c.b16 %v118, %v118
  %123 = vst [vmem:[%s5] sm:$0xf] %v119
  %124 = vst [vmem:[%s5 + $0x4] sm:$0xf] %v120
  // Predicated region
  $region22: #{forward.36} parent=0 // pred_check
    _
  $region23: #{forward.36} parent=0 // pred_check_branch
    %126 = sbr.rel (0) target = $region25
  $region24: #{forward.36} parent=0 // pred_region
    _
  $region25: #{forward.36} parent=0 // pred_fallthru
    _
  // Predicated region
  $region26: #{forward.36} parent=0 // pred_check
    _
  $region27: #{forward.36} parent=0 // pred_check_branch
    %128 = sbr.rel (0) target = $region29
  $region28: #{forward.36} parent=0 // pred_region
    _
  $region29: #{forward.36} parent=0 // pred_fallthru
    _

// kernel: forward.33
$region0: #{forward.33}
  #allocation0 [shape = 'u32[]', space=smem, size = 0x4, offset = 0x4, fixed_abs, tag = 'smem constant byte address 0x4 - core index']
  #allocation1 [shape = 'u32[144,128]{1,0:T(1,128)}', space=vmem, size = 0x12000, scoped, tag = 'internal scratch']
  %s0 = inlined_call_operand.vmem [shape: bf16[16,64], index: 0, kind: input, shape index: {}]
  %s1 = inlined_call_operand.vmem [shape: bf16[64,128], index: 1, kind: input, shape index: {}]
  %s2 = inlined_call_operand.vmem [shape: f32[1,128], index: 2, kind: input, shape index: {}]
  %s3 = inlined_call_operand.vmem [shape: f32[1,128], index: 3, kind: input, shape index: {}]
  %s4 = inlined_call_operand.vmem [shape: bf16[16,128], index: 4, kind: output, shape index: {}]
  %s5 = sld [smem:[#allocation0]]
  $region26: #{forward.33} parent=0
    _
  %s7 = ssub.s32 1, %s5
  %s8 = scalar_select 0, %s7, %s5
  // Predicated region
  $region2: #{forward.33} parent=0 // pred_check
    _
  $region3: #{forward.33} parent=0 // pred_check_branch
    %10 = sbr.rel (0) target = $region5
  $region4: #{forward.33} parent=0 // pred_region
    _
  $region5: #{forward.33} parent=0 // pred_fallthru
    _
  // Predicated region
  $region6: #{forward.33} parent=0 // pred_check
    _
  $region7: #{forward.33} parent=0 // pred_check_branch
    %12 = sbr.rel (0) target = $region9
  $region8: #{forward.33} parent=0 // pred_region
    _
  $region9: #{forward.33} parent=0 // pred_fallthru
    _
  // Predicated region
  $region10: #{forward.33} parent=0 // pred_check
    _
  $region11: #{forward.33} parent=0 // pred_check_branch
    %14 = sbr.rel (0) target = $region13
  $region12: #{forward.33} parent=0 // pred_region
    _
  $region13: #{forward.33} parent=0 // pred_fallthru
    _
  // Predicated region
  $region14: #{forward.33} parent=0 // pred_check
    _
  $region15: #{forward.33} parent=0 // pred_check_branch
    %16 = sbr.rel (0) target = $region17
  $region16: #{forward.33} parent=0 // pred_region
    _
  $region17: #{forward.33} parent=0 // pred_fallthru
    _
  %v18 = vld [vmem:[%s0] sm:$0xf]
  %v19 = vld [vmem:[%s0 + $0x4] sm:$0xf]
  %v20 = vld [vmem:[%s1] sm:$0xf]
  %v21 = vld [vmem:[%s1 + $0x4] sm:$0xf]
  %v22 = vld [vmem:[%s1 + $0x8] sm:$0xf]
  %v23 = vld [vmem:[%s1 + $0xc] sm:$0xf]
  %v24 = vld [vmem:[%s1 + $0x10] sm:$0xf]
  %v25 = vld [vmem:[%s1 + $0x14] sm:$0xf]
  %v26 = vld [vmem:[%s1 + $0x18] sm:$0xf]
  %v27 = vld [vmem:[%s1 + $0x1c] sm:$0xf]
  %v30 = vunpack.c.l.b16 %v18
  %v31 = vunpack.c.l.b16 %v19
  %v32 = vpack.c.b16 %v31, %v30
  %v41 = vunpack.c.l.b16 %v20
  %v42 = vunpack.c.l.b16 %v21
  %v43 = vunpack.c.l.b16 %v22
  %v44 = vunpack.c.l.b16 %v23
  %v45 = vunpack.c.l.b16 %v24
  %v46 = vunpack.c.l.b16 %v25
  %v47 = vunpack.c.l.b16 %v26
  %v48 = vunpack.c.l.b16 %v27
  %v49 = vpack.c.b16 %v42, %v41
  %v50 = vpack.c.b16 %v44, %v43
  %v51 = vpack.c.b16 %v46, %v45
  %v52 = vpack.c.b16 %v48, %v47
  %vm57 = vcmask 523264
  %v59 = vsel %vm57, %v32, 0
  %61 = vmatprep.subr.bf16.mxu0 0
  %62 = vmatpush1.bf16.msra.mxu0 %v49
  %63 = vmatprep.subr.bf16.mxu0 0
  %64 = vmatpush1.bf16.msra.mxu0 %v50
  %65 = vmatprep.subr.bf16.mxu0 0
  %66 = vmatpush1.bf16.msra.mxu0 %v51
  %67 = vmatprep.subr.bf16.mxu0 0
  %68 = vmatpush1.bf16.msra.mxu0 %v52
  %69 = vmatprep.subr.bf16.mxu0 0
  %70 = vmatpush1.bf16.msra.mxu0 0
  %71 = vmatprep.subr.bf16.mxu0 0
  %72 = vmatpush1.bf16.msra.mxu0 0
  %73 = vmatprep.subr.bf16.mxu0 0
  %74 = vmatpush1.bf16.msra.mxu0 0
  %75 = vmatprep.subr.bf16.mxu0 0
  %76 = vmatpush1.bf16.msra.mxu0 0
  %77 = vmatprep.subr.bf16.mxu0 0
  %78 = vmatpush1.bf16.msra.mxu0 0
  %79 = vmatprep.subr.bf16.mxu0 0
  %80 = vmatpush1.bf16.msra.mxu0 0
  %81 = vmatprep.subr.bf16.mxu0 0
  %82 = vmatpush1.bf16.msra.mxu0 0
  %83 = vmatprep.subr.bf16.mxu0 0
  %84 = vmatpush1.bf16.msra.mxu0 0
  %85 = vmatprep.subr.bf16.mxu0 0
  %86 = vmatpush1.bf16.msra.mxu0 0
  %87 = vmatprep.subr.bf16.mxu0 0
  %88 = vmatpush1.bf16.msra.mxu0 0
  %89 = vmatprep.subr.bf16.mxu0 0
  %90 = vmatpush1.bf16.msra.mxu0 0
  %91 = vmatprep.subr.bf16.mxu0 0
  %92 = vmatpush1.bf16.msra.mxu0 0
  %93 = vmatprep.mubr.bf16.mxu0 0
  %94 = vmatmul.mubr.bf16.gmra.mrb[0].mxu0 %v59
  %v95 = vpop.f32.mrb[0].mxu0
  %v96 = vadd.f32 0.0, %v95
  %v97 = vpop.f32.mrb[0].mxu0
  %v98 = vpop.f32.mrb[0].mxu0
  %v99 = vadd.f32 0.0, %v98
  %v100 = vpop.f32.mrb[0].mxu0
  %101 = vdwg.mxu0
  %v102 = vld [vmem:[%s2] sm:$0x1]
  %v104 = vlaneseq
  %v105 = vshrl.u32 %v104, 7
  %v106 = vsub.s32 0, %v105
  %v107 = vrot.slane %v102, %v106
  %v109 = vmul.f32 %v96, %v107
  %v110 = vmul.f32 %v99, %v107
  %v111 = vld [vmem:[%s3] sm:$0x1]
  %v113 = vlaneseq
  %v114 = vshrl.u32 %v113, 7
  %v115 = vsub.s32 0, %v114
  %v116 = vrot.slane %v111, %v115
  %v118 = vadd.f32 %v109, %v116
  %v119 = vadd.f32 %v110, %v116
  %v120 = vpack.c.bf16 %v119, %v118
  %v122 = vunpack.c.l.b16 %v120
  %v123 = vunpack.c.h.b16 %v120
  %v124 = vpack.c.b16 %v122, %v122
  %v125 = vpack.c.b16 %v123, %v123
  %128 = vst [vmem:[%s4] sm:$0xf] %v124
  %129 = vst [vmem:[%s4 + $0x4] sm:$0xf] %v125
  // Predicated region
  $region18: #{forward.33} parent=0 // pred_check
    _
  $region19: #{forward.33} parent=0 // pred_check_branch
    %131 = sbr.rel (0) target = $region21
  $region20: #{forward.33} parent=0 // pred_region
    _
  $region21: #{forward.33} parent=0 // pred_fallthru
    _
  // Predicated region
  $region22: #{forward.33} parent=0 // pred_check
    _
  $region23: #{forward.33} parent=0 // pred_check_branch
    %133 = sbr.rel (0) target = $region25
  $region24: #{forward.33} parent=0 // pred_region
    _
  $region25: #{forward.33} parent=0 // pred_fallthru
    _

// kernel: forward.37
$region0: #{forward.37}
  #allocation0 [shape = 'u32[]', space=smem, size = 0x4, offset = 0x4, fixed_abs, tag = 'smem constant byte address 0x4 - core index']
  #allocation1 [shape = 'u32[144,128]{1,0:T(1,128)}', space=vmem, size = 0x12000, scoped, tag = 'internal scratch']
  %s0 = inlined_call_operand.vmem [shape: bf16[16,128], index: 0, kind: input, shape index: {}]
  %s1 = inlined_call_operand.vmem [shape: bf16[128,17], index: 1, kind: input, shape index: {}]
  %s2 = inlined_call_operand.vmem [shape: f32[1,17], index: 2, kind: input, shape index: {}]
  %s3 = inlined_call_operand.vmem [shape: f32[16,17], index: 3, kind: output, shape index: {}]
  %s4 = sld [smem:[#allocation0]]
  $region22: #{forward.37} parent=0
    _
  %s6 = ssub.s32 1, %s4
  %s7 = scalar_select 0, %s6, %s4
  // Predicated region
  $region2: #{forward.37} parent=0 // pred_check
    _
  $region3: #{forward.37} parent=0 // pred_check_branch
    %9 = sbr.rel (0) target = $region5
  $region4: #{forward.37} parent=0 // pred_region
    _
  $region5: #{forward.37} parent=0 // pred_fallthru
    _
  // Predicated region
  $region6: #{forward.37} parent=0 // pred_check
    _
  $region7: #{forward.37} parent=0 // pred_check_branch
    %11 = sbr.rel (0) target = $region9
  $region8: #{forward.37} parent=0 // pred_region
    _
  $region9: #{forward.37} parent=0 // pred_fallthru
    _
  // Predicated region
  $region10: #{forward.37} parent=0 // pred_check
    _
  $region11: #{forward.37} parent=0 // pred_check_branch
    %13 = sbr.rel (0) target = $region13
  $region12: #{forward.37} parent=0 // pred_region
    _
  $region13: #{forward.37} parent=0 // pred_fallthru
    _
  %v15 = vld [vmem:[%s0] sm:$0xf]
  %v16 = vld [vmem:[%s0 + $0x4] sm:$0xf]
  %v17 = vld [vmem:[%s1] sm:$0xf]
  %v18 = vld [vmem:[%s1 + $0x4] sm:$0xf]
  %v19 = vld [vmem:[%s1 + $0x8] sm:$0xf]
  %v20 = vld [vmem:[%s1 + $0xc] sm:$0xf]
  %v21 = vld [vmem:[%s1 + $0x10] sm:$0xf]
  %v22 = vld [vmem:[%s1 + $0x14] sm:$0xf]
  %v23 = vld [vmem:[%s1 + $0x18] sm:$0xf]
  %v24 = vld [vmem:[%s1 + $0x1c] sm:$0xf]
  %v25 = vld [vmem:[%s1 + $0x20] sm:$0xf]
  %v26 = vld [vmem:[%s1 + $0x24] sm:$0xf]
  %v27 = vld [vmem:[%s1 + $0x28] sm:$0xf]
  %v28 = vld [vmem:[%s1 + $0x2c] sm:$0xf]
  %v29 = vld [vmem:[%s1 + $0x30] sm:$0xf]
  %v30 = vld [vmem:[%s1 + $0x34] sm:$0xf]
  %v31 = vld [vmem:[%s1 + $0x38] sm:$0xf]
  %v32 = vld [vmem:[%s1 + $0x3c] sm:$0xf]
  %v33 = vld [vmem:[%s2] sm:$0x1]
  %v35 = vlaneseq
  %v36 = vshrl.u32 %v35, 7
  %v37 = vsub.s32 0, %v36
  %v38 = vrot.slane %v33, %v37
  %v42 = vunpack.c.l.b16 %v15
  %v43 = vunpack.c.l.b16 %v16
  %v44 = vpack.c.b16 %v43, %v42
  %v62 = vunpack.c.l.b16 %v17
  %v63 = vunpack.c.l.b16 %v18
  %v64 = vunpack.c.l.b16 %v19
  %v65 = vunpack.c.l.b16 %v20
  %v66 = vunpack.c.l.b16 %v21
  %v67 = vunpack.c.l.b16 %v22
  %v68 = vunpack.c.l.b16 %v23
  %v69 = vunpack.c.l.b16 %v24
  %v70 = vunpack.c.l.b16 %v25
  %v71 = vunpack.c.l.b16 %v26
  %v72 = vunpack.c.l.b16 %v27
  %v73 = vunpack.c.l.b16 %v28
  %v74 = vunpack.c.l.b16 %v29
  %v75 = vunpack.c.l.b16 %v30
  %v76 = vunpack.c.l.b16 %v31
  %v77 = vunpack.c.l.b16 %v32
  %v78 = vpack.c.b16 %v63, %v62
  %v79 = vpack.c.b16 %v65, %v64
  %v80 = vpack.c.b16 %v67, %v66
  %v81 = vpack.c.b16 %v69, %v68
  %v82 = vpack.c.b16 %v71, %v70
  %v83 = vpack.c.b16 %v73, %v72
  %v84 = vpack.c.b16 %v75, %v74
  %v85 = vpack.c.b16 %v77, %v76
  %94 = vmatprep.subr.bf16.mxu0 0
  %95 = vmatpush1.bf16.msra.mxu0 %v78
  %96 = vmatprep.subr.bf16.mxu0 0
  %97 = vmatpush1.bf16.msra.mxu0 %v79
  %98 = vmatprep.subr.bf16.mxu0 0
  %99 = vmatpush1.bf16.msra.mxu0 %v80
  %100 = vmatprep.subr.bf16.mxu0 0
  %101 = vmatpush1.bf16.msra.mxu0 %v81
  %102 = vmatprep.subr.bf16.mxu0 0
  %103 = vmatpush1.bf16.msra.mxu0 %v82
  %104 = vmatprep.subr.bf16.mxu0 0
  %105 = vmatpush1.bf16.msra.mxu0 %v83
  %106 = vmatprep.subr.bf16.mxu0 0
  %107 = vmatpush1.bf16.msra.mxu0 %v84
  %108 = vmatprep.subr.bf16.mxu0 0
  %109 = vmatpush1.bf16.msra.mxu0 %v85
  %110 = vmatprep.subr.bf16.mxu0 0
  %111 = vmatpush1.bf16.msra.mxu0 0
  %112 = vmatprep.subr.bf16.mxu0 0
  %113 = vmatpush1.bf16.msra.mxu0 0
  %114 = vmatprep.subr.bf16.mxu0 0
  %115 = vmatpush1.bf16.msra.mxu0 0
  %116 = vmatprep.subr.bf16.mxu0 0
  %117 = vmatpush1.bf16.msra.mxu0 0
  %118 = vmatprep.subr.bf16.mxu0 0
  %119 = vmatpush1.bf16.msra.mxu0 0
  %120 = vmatprep.subr.bf16.mxu0 0
  %121 = vmatpush1.bf16.msra.mxu0 0
  %122 = vmatprep.subr.bf16.mxu0 0
  %123 = vmatpush1.bf16.msra.mxu0 0
  %124 = vmatprep.subr.bf16.mxu0 0
  %125 = vmatpush1.bf16.msra.mxu0 0
  %126 = vmatprep.mubr.bf16.mxu0 0
  %127 = vmatmul.mubr.bf16.gmra.mrb[0].mxu0 %v44
  %v128 = vpop.f32.mrb[0].mxu0
  %v129 = vadd.f32 %v38, %v128
  %v130 = vpop.f32.mrb[0].mxu0
  %v131 = vpop.f32.mrb[0].mxu0
  %v132 = vadd.f32 %v38, %v131
  %v133 = vpop.f32.mrb[0].mxu0
  %134 = vdwg.mxu0
  %vm135 = vcmask 138240
  %136 = vst.msk [vmem:[%s3] sm:$0xff] %vm135, %v129
  %137 = vst.msk [vmem:[%s3 + $0x8] sm:$0xff] %vm135, %v132
  // Predicated region
  $region14: #{forward.37} parent=0 // pred_check
    _
  $region15: #{forward.37} parent=0 // pred_check_branch
    %139 = sbr.rel (0) target = $region17
  $region16: #{forward.37} parent=0 // pred_region
    _
  $region17: #{forward.37} parent=0 // pred_fallthru
    _
  // Predicated region
  $region18: #{forward.37} parent=0 // pred_check
    _
  $region19: #{forward.37} parent=0 // pred_check_branch
    %141 = sbr.rel (0) target = $region21
  $region20: #{forward.37} parent=0 // pred_region
    _
  $region21: #{forward.37} parent=0 // pred_fallthru
    _

// kernel: forward.38
$region0: #{forward.38}
  #allocation0 [shape = 'u32[]', space=smem, size = 0x4, offset = 0x4, fixed_abs, tag = 'smem constant byte address 0x4 - core index']
  #allocation1 [shape = 'u32[144,128]{1,0:T(1,128)}', space=vmem, size = 0x12000, scoped, tag = 'internal scratch']
  %s0 = inlined_call_operand.vmem [shape: f32[40,1,1], index: 0, kind: input, shape index: {}]
  %s1 = inlined_call_operand.vmem [shape: f32[40,1,1024], index: 1, kind: output, shape index: {}]
  %s2 = sld [smem:[#allocation0]]
  $region37: #{forward.38} parent=0
    _
  %s4 = ssub.s32 1, %s2
  %s5 = scalar_select 0, %s4, %s2
  loop: start=0, step=1, limit=7
  $region2: #{forward.38} parent=0 // loop_pre_header
    _
  $region3: #{forward.38} parent=0 // loop_header
    %s7 = sphi 0, %s11
    %p8 = scmp.ge.s32.totalorder %s7, 7
    %s17 = sphi 0, %s19
    %s20 = sphi 0, %s17
    %s21 = sphi 0, %s20
    %s37 = sphi 0, %s21
    %s43 = sphi 0, %s45
    %s46 = sphi 0, %s43
    %s47 = sphi 0, %s46
    %s63 = sphi 0, %s47
  $region4: #{forward.38} parent=0 // loop_header_branch
    %10 = sbr.rel (%p8) target = $region8
  $region5: #{forward.38} parent=0 // loop_body
    %s12 = ssub.s32 %s7, 1
    %s13 = ssub.s32 %s7, 2
    %s14 = sadd.s32 %s7, 1
    %s15 = ssub.s32 %s7, %s14
    %p16 = scmp.eq.s32.totalorder %s15, 0
    %s18 = sadd.s32 %s17, 1
    %s19 = scalar_select %p16, %s17, %s18
    %p22 = pneg %p16
    %p23 = scmp.eq.s32.totalorder %s7, 4
    %p24 = por %p22, %p23
    %p25 = scmp.ne.s32.totalorder %s17, %s20
    %p26 = scmp.eq.s32.totalorder %s7, 0
    %p27 = por %p25, %p26
    %p28 = scmp.ne.s32.totalorder %s17, %s20
    %p29 = scmp.eq.s32.totalorder %s12, 4
    %p30 = por %p28, %p29
    %p31 = scmp.ne.s32.totalorder %s20, %s21
    %p32 = scmp.eq.s32.totalorder %s12, 0
    %p33 = por %p31, %p32
    %p34 = scmp.ne.s32.totalorder %s20, %s21
    %p35 = scmp.eq.s32.totalorder %s13, 4
    %p36 = por %p34, %p35
    %p38 = scmp.ne.s32.totalorder %s21, %s37
    %p39 = scmp.eq.s32.totalorder %s13, 0
    %p40 = por %p38, %p39
    %s41 = ssub.s32 %s7, %s14
    %p42 = scmp.eq.s32.totalorder %s41, 0
    %s44 = sadd.s32 %s43, 1
    %s45 = scalar_select %p42, %s43, %s44
    %p48 = pneg %p42
    %p49 = scmp.eq.s32.totalorder %s7, 4
    %p50 = por %p48, %p49
    %p51 = scmp.ne.s32.totalorder %s43, %s46
    %p52 = scmp.eq.s32.totalorder %s7, 0
    %p53 = por %p51, %p52
    %p54 = scmp.ne.s32.totalorder %s43, %s46
    %p55 = scmp.eq.s32.totalorder %s12, 4
    %p56 = por %p54, %p55
    %p57 = scmp.ne.s32.totalorder %s46, %s47
    %p58 = scmp.eq.s32.totalorder %s12, 0
    %p59 = por %p57, %p58
    %p60 = scmp.ne.s32.totalorder %s46, %s47
    %p61 = scmp.eq.s32.totalorder %s13, 4
    %p62 = por %p60, %p61
    %p64 = scmp.ne.s32.totalorder %s47, %s63
    %p65 = scmp.eq.s32.totalorder %s13, 0
    %p66 = por %p64, %p65
    %p67 = scmp.le.s32.totalorder 1, %s7
    %p68 = scmp.lt.s32.totalorder %s7, 6
    %p69 = pnand %p67, %p68
    %p70 = pneg %p69
    // Predicated region
    $region9: #{forward.38} parent=5 // pred_check
      _
    $region10: #{forward.38} parent=5 // pred_check_branch
      %72 = sbr.rel (%p69) target = $region12
    $region11: #{forward.38} parent=5 // pred_region
      %s73 = ssub.s32 %s7, 1
    $region12: #{forward.38} parent=5 // pred_fallthru
      _
    %p74 = scmp.lt.s32.totalorder %s7, 5
    // Predicated region
    $region13: #{forward.38} parent=5 // pred_check
      %p75 = pneg %p74
    $region14: #{forward.38} parent=5 // pred_check_branch
      %77 = sbr.rel (%p75) target = $region16
    $region15: #{forward.38} parent=5 // pred_region
      // Predicated region
      $region17: #{forward.38} parent=15 // pred_check
        %p78 = pneg %p27
      $region18: #{forward.38} parent=15 // pred_check_branch
        %80 = sbr.rel (%p78) target = $region20
      $region19: #{forward.38} parent=15 // pred_region
        %s81 = smul.u32 8, %s7
        %p82 = scmp.lt.s32.totalorder %s81, 39
        %s83 = scalar_select %p82, %s81, 39
        %s84 = scalar_lea.vmem %s0, %s83
        %s85 = smul.u32 8, %s7
      $region20: #{forward.38} parent=15 // pred_fallthru
        _
    $region16: #{forward.38} parent=5 // pred_fallthru
      _
    %p86 = scmp.le.s32.totalorder 1, %s7
    %p87 = scmp.lt.s32.totalorder %s7, 6
    %p88 = pnand %p86, %p87
    %p89 = pneg %p88
    // Predicated region
    $region21: #{forward.38} parent=5 // pred_check
      _
    $region22: #{forward.38} parent=5 // pred_check_branch
      %91 = sbr.rel (%p88) target = $region24
    $region23: #{forward.38} parent=5 // pred_region
      %s92 = ssub.s32 %s7, 1
      %s93 = smul.u32 8, %s12
      %p94 = scmp.lt.s32.totalorder %s93, 39
      %s95 = scalar_select %p94, %s93, 39
      %s96 = scalar_lea.vmem %s0, %s95
      %p97 = pneg %p33
      %p98 = pneg %p30
      %p99 = pneg %p59
      %p100 = pneg %p56
      %s101 = smul.u32 8, %s12
      %p102 = scmp.lt.s32.totalorder %s101, 39
      %s103 = scalar_select %p102, %s101, 39
      %s104 = smul.addr %s103, 8
      %s105 = scalar_lea.vmem %s1, %s104
      %s106 = smul.u32 8, %s12
      %p107 = scmp.lt.s32.totalorder %s106, 39
      %s108 = scalar_select %p107, %s106, 39
      %s109 = scalar_lea.vmem %s0, %s108
      %s110 = smul.u32 8, %s12
      %s111 = smul.u32 8, %s12
      %p112 = scmp.lt.s32.totalorder %s111, 39
      %s113 = scalar_select %p112, %s111, 39
      %s114 = smul.addr %s113, 8
      %s115 = scalar_lea.vmem %s1, %s114
      %s116 = smul.u32 8, %s12
      %v117 = vld [vmem:[%s109] sm:$0x1]
      %v118 = vld [vmem:[%s109 + $0x1] sm:$0x1]
      %v119 = vld [vmem:[%s109 + $0x2] sm:$0x1]
      %v120 = vld [vmem:[%s109 + $0x3] sm:$0x1]
      %v121 = vld [vmem:[%s109 + $0x4] sm:$0x1]
      %v122 = vld [vmem:[%s109 + $0x5] sm:$0x1]
      %v123 = vld [vmem:[%s109 + $0x6] sm:$0x1]
      %v124 = vld [vmem:[%s109 + $0x7] sm:$0x1]
      %126 = vset.pattern.permute.xlu0 0
      %127 = vperm.xlu0 %126, %v117
      %v128 = vpop.permute.xlu0 %127
      %v130 = vlaneseq
      %v131 = vshrl.u32 %v130, 7
      %v132 = vsub.s32 0, %v131
      %v133 = vrot.slane %v128, %v132
      %135 = vset.pattern.permute.xlu0 0
      %136 = vperm.xlu0 %135, %v118
      %v137 = vpop.permute.xlu0 %136
      %v139 = vlaneseq
      %v140 = vshrl.u32 %v139, 7
      %v141 = vsub.s32 0, %v140
      %v142 = vrot.slane %v137, %v141
      %144 = vset.pattern.permute.xlu0 0
      %145 = vperm.xlu0 %144, %v119
      %v146 = vpop.permute.xlu0 %145
      %v148 = vlaneseq
      %v149 = vshrl.u32 %v148, 7
      %v150 = vsub.s32 0, %v149
      %v151 = vrot.slane %v146, %v150
      %153 = vset.pattern.permute.xlu0 0
      %154 = vperm.xlu0 %153, %v120
      %v155 = vpop.permute.xlu0 %154
      %v157 = vlaneseq
      %v158 = vshrl.u32 %v157, 7
      %v159 = vsub.s32 0, %v158
      %v160 = vrot.slane %v155, %v159
      %162 = vset.pattern.permute.xlu0 0
      %163 = vperm.xlu0 %162, %v121
      %v164 = vpop.permute.xlu0 %163
      %v166 = vlaneseq
      %v167 = vshrl.u32 %v166, 7
      %v168 = vsub.s32 0, %v167
      %v169 = vrot.slane %v164, %v168
      %171 = vset.pattern.permute.xlu0 0
      %172 = vperm.xlu0 %171, %v122
      %v173 = vpop.permute.xlu0 %172
      %v175 = vlaneseq
      %v176 = vshrl.u32 %v175, 7
      %v177 = vsub.s32 0, %v176
      %v178 = vrot.slane %v173, %v177
      %180 = vset.pattern.permute.xlu0 0
      %181 = vperm.xlu0 %180, %v123
      %v182 = vpop.permute.xlu0 %181
      %v184 = vlaneseq
      %v185 = vshrl.u32 %v184, 7
      %v186 = vsub.s32 0, %v185
      %v187 = vrot.slane %v182, %v186
      %189 = vset.pattern.permute.xlu0 0
      %190 = vperm.xlu0 %189, %v124
      %v191 = vpop.permute.xlu0 %190
      %v193 = vlaneseq
      %v194 = vshrl.u32 %v193, 7
      %v195 = vsub.s32 0, %v194
      %v196 = vrot.slane %v191, %v195
      %197 = vst [vmem:[%s115] sm:$0xff] %v133
      %198 = vst [vmem:[%s115 + $0x8] sm:$0xff] %v142
      %199 = vst [vmem:[%s115 + $0x10] sm:$0xff] %v151
      %200 = vst [vmem:[%s115 + $0x18] sm:$0xff] %v160
      %201 = vst [vmem:[%s115 + $0x20] sm:$0xff] %v169
      %202 = vst [vmem:[%s115 + $0x28] sm:$0xff] %v178
      %203 = vst [vmem:[%s115 + $0x30] sm:$0xff] %v187
      %204 = vst [vmem:[%s115 + $0x38] sm:$0xff] %v196
      %s205 = smul.u32 8, %s12
      %p206 = scmp.lt.s32.totalorder %s205, 39
      %s207 = scalar_select %p206, %s205, 39
      %s208 = smul.addr %s207, 8
      %s209 = scalar_lea.vmem %s1, %s208
      // Predicated region
      $region25: #{forward.38} parent=23 // pred_check
        %p210 = pneg %p56
      $region26: #{forward.38} parent=23 // pred_check_branch
        %212 = sbr.rel (%p210) target = $region28
      $region27: #{forward.38} parent=23 // pred_region
        %s213 = smul.u32 8, %s12
      $region28: #{forward.38} parent=23 // pred_fallthru
        _
    $region24: #{forward.38} parent=5 // pred_fallthru
      _
    %p214 = scmp.le.s32.totalorder 2, %s7
    // Predicated region
    $region29: #{forward.38} parent=5 // pred_check
      %p215 = pneg %p214
    $region30: #{forward.38} parent=5 // pred_check_branch
      %217 = sbr.rel (%p215) target = $region32
    $region31: #{forward.38} parent=5 // pred_region
      %s218 = ssub.s32 %s7, 2
      // Predicated region
      $region33: #{forward.38} parent=31 // pred_check
        %p219 = pneg %p62
      $region34: #{forward.38} parent=31 // pred_check_branch
        %221 = sbr.rel (%p219) target = $region36
      $region35: #{forward.38} parent=31 // pred_region
        %s222 = smul.u32 8, %s13
        %p223 = scmp.lt.s32.totalorder %s222, 39
        %s224 = scalar_select %p223, %s222, 39
        %s225 = smul.addr %s224, 8
        %s226 = scalar_lea.vmem %s1, %s225
      $region36: #{forward.38} parent=31 // pred_fallthru
        _
    $region32: #{forward.38} parent=5 // pred_fallthru
      _
  $region6: #{forward.38} parent=0 // loop_footer
    %s11 = sadd.s32 1, %s7
  $region7: #{forward.38} parent=0 // loop_footer_branch
    %6 = sbr.rel target = $region3
  $region8: #{forward.38} parent=0 // loop_exit
    _

// kernel: forward.39
$region0: #{forward.39}
  #allocation0 [shape = 'u32[]', space=smem, size = 0x4, offset = 0x4, fixed_abs, tag = 'smem constant byte address 0x4 - core index']
  #allocation1 [shape = 'u32[144,128]{1,0:T(1,128)}', space=vmem, size = 0x12000, scoped, tag = 'internal scratch']
  %s0 = inlined_call_operand.vmem [shape: f32[2,3,1024], index: 0, kind: input, shape index: {}]
  %s1 = inlined_call_operand.vmem [shape: f32[2,3,1024], index: 1, kind: output, shape index: {}]
  %s2 = sld [smem:[#allocation0]]
  $region37: #{forward.39} parent=0
    _
  %s4 = ssub.s32 1, %s2
  %s5 = scalar_select 0, %s4, %s2
  loop: start=0, step=1, limit=4
  $region2: #{forward.39} parent=0 // loop_pre_header
    _
  $region3: #{forward.39} parent=0 // loop_header
    %s7 = sphi 0, %s11
    %p8 = scmp.ge.s32.totalorder %s7, 4
    %s17 = sphi 0, %s19
    %s20 = sphi 0, %s17
    %s21 = sphi 0, %s20
    %s37 = sphi 0, %s21
    %s43 = sphi 0, %s45
    %s46 = sphi 0, %s43
    %s47 = sphi 0, %s46
    %s63 = sphi 0, %s47
  $region4: #{forward.39} parent=0 // loop_header_branch
    %10 = sbr.rel (%p8) target = $region8
  $region5: #{forward.39} parent=0 // loop_body
    %s12 = ssub.s32 %s7, 1
    %s13 = ssub.s32 %s7, 2
    %s14 = sadd.s32 %s7, 1
    %s15 = ssub.s32 %s7, %s14
    %p16 = scmp.eq.s32.totalorder %s15, 0
    %s18 = sadd.s32 %s17, 1
    %s19 = scalar_select %p16, %s17, %s18
    %p22 = pneg %p16
    %p23 = scmp.eq.s32.totalorder %s7, 1
    %p24 = por %p22, %p23
    %p25 = scmp.ne.s32.totalorder %s17, %s20
    %p26 = scmp.eq.s32.totalorder %s7, 0
    %p27 = por %p25, %p26
    %p28 = scmp.ne.s32.totalorder %s17, %s20
    %p29 = scmp.eq.s32.totalorder %s12, 1
    %p30 = por %p28, %p29
    %p31 = scmp.ne.s32.totalorder %s20, %s21
    %p32 = scmp.eq.s32.totalorder %s12, 0
    %p33 = por %p31, %p32
    %p34 = scmp.ne.s32.totalorder %s20, %s21
    %p35 = scmp.eq.s32.totalorder %s13, 1
    %p36 = por %p34, %p35
    %p38 = scmp.ne.s32.totalorder %s21, %s37
    %p39 = scmp.eq.s32.totalorder %s13, 0
    %p40 = por %p38, %p39
    %s41 = ssub.s32 %s7, %s14
    %p42 = scmp.eq.s32.totalorder %s41, 0
    %s44 = sadd.s32 %s43, 1
    %s45 = scalar_select %p42, %s43, %s44
    %p48 = pneg %p42
    %p49 = scmp.eq.s32.totalorder %s7, 1
    %p50 = por %p48, %p49
    %p51 = scmp.ne.s32.totalorder %s43, %s46
    %p52 = scmp.eq.s32.totalorder %s7, 0
    %p53 = por %p51, %p52
    %p54 = scmp.ne.s32.totalorder %s43, %s46
    %p55 = scmp.eq.s32.totalorder %s12, 1
    %p56 = por %p54, %p55
    %p57 = scmp.ne.s32.totalorder %s46, %s47
    %p58 = scmp.eq.s32.totalorder %s12, 0
    %p59 = por %p57, %p58
    %p60 = scmp.ne.s32.totalorder %s46, %s47
    %p61 = scmp.eq.s32.totalorder %s13, 1
    %p62 = por %p60, %p61
    %p64 = scmp.ne.s32.totalorder %s47, %s63
    %p65 = scmp.eq.s32.totalorder %s13, 0
    %p66 = por %p64, %p65
    %p67 = scmp.le.s32.totalorder 1, %s7
    %p68 = scmp.lt.s32.totalorder %s7, 3
    %p69 = pnand %p67, %p68
    %p70 = pneg %p69
    // Predicated region
    $region9: #{forward.39} parent=5 // pred_check
      _
    $region10: #{forward.39} parent=5 // pred_check_branch
      %72 = sbr.rel (%p69) target = $region12
    $region11: #{forward.39} parent=5 // pred_region
      %s73 = ssub.s32 %s7, 1
    $region12: #{forward.39} parent=5 // pred_fallthru
      _
    %p74 = scmp.lt.s32.totalorder %s7, 2
    // Predicated region
    $region13: #{forward.39} parent=5 // pred_check
      %p75 = pneg %p74
    $region14: #{forward.39} parent=5 // pred_check_branch
      %77 = sbr.rel (%p75) target = $region16
    $region15: #{forward.39} parent=5 // pred_region
      // Predicated region
      $region17: #{forward.39} parent=15 // pred_check
        %p78 = pneg %p27
      $region18: #{forward.39} parent=15 // pred_check_branch
        %80 = sbr.rel (%p78) target = $region20
      $region19: #{forward.39} parent=15 // pred_region
        %p81 = scmp.lt.s32.totalorder %s7, 1
        %s82 = scalar_select %p81, %s7, 1
        %s83 = smul.addr %s82, 8
        %s84 = smul.addr %s83, 4
        %s85 = scalar_lea.vmem %s0, %s84
      $region20: #{forward.39} parent=15 // pred_fallthru
        _
    $region16: #{forward.39} parent=5 // pred_fallthru
      _
    %p86 = scmp.le.s32.totalorder 1, %s7
    %p87 = scmp.lt.s32.totalorder %s7, 3
    %p88 = pnand %p86, %p87
    %p89 = pneg %p88
    // Predicated region
    $region21: #{forward.39} parent=5 // pred_check
      _
    $region22: #{forward.39} parent=5 // pred_check_branch
      %91 = sbr.rel (%p88) target = $region24
    $region23: #{forward.39} parent=5 // pred_region
      %s92 = ssub.s32 %s7, 1
      %p93 = scmp.lt.s32.totalorder %s12, 1
      %s94 = scalar_select %p93, %s12, 1
      %s95 = smul.addr %s94, 8
      %s96 = smul.addr %s95, 4
      %s97 = scalar_lea.vmem %s0, %s96
      %p98 = pneg %p33
      %p99 = pneg %p30
      %p100 = pneg %p59
      %p101 = pneg %p56
      %p102 = scmp.lt.s32.totalorder %s12, 1
      %s103 = scalar_select %p102, %s12, 1
      %s104 = smul.addr %s103, 8
      %s105 = smul.addr %s104, 4
      %s106 = scalar_lea.vmem %s1, %s105
      %p107 = scmp.lt.s32.totalorder %s12, 1
      %s108 = scalar_select %p107, %s12, 1
      %s109 = smul.addr %s108, 8
      %s110 = smul.addr %s109, 4
      %s111 = scalar_lea.vmem %s0, %s110
      %p112 = scmp.lt.s32.totalorder %s12, 1
      %s113 = scalar_select %p112, %s12, 1
      %s114 = smul.addr %s113, 8
      %s115 = smul.addr %s114, 4
      %s116 = scalar_lea.vmem %s1, %s115
      %v117 = vld [vmem:[%s111] sm:$0x77]
      %v118 = vld [vmem:[%s111 + $0x8] sm:$0x77]
      %v119 = vld [vmem:[%s111 + $0x10] sm:$0x77]
      %v120 = vld [vmem:[%s111 + $0x18] sm:$0x77]
      %v121 = vmul.f32 %v117, %v117
      %v122 = vmul.f32 %v118, %v118
      %v123 = vmul.f32 %v119, %v119
      %v124 = vmul.f32 %v120, %v120
      %v129 = vcombine.high %v121, %v121
      %v130 = vcombine.high %v122, %v122
      %v131 = vcombine.high %v123, %v123
      %v132 = vcombine.high %v124, %v124
      %vm137 = vcmask 1042432
      %v138 = vsel %vm137, %v121, 0.0
      %v139 = vrot.slane %v138, 4
      %v140 = vadd.f32 %v138, %v139
      %v141 = vrot.slane %v140, 2
      %v142 = vadd.f32 %v140, %v141
      %v143 = vrot.slane %v142, 1
      %v144 = vadd.f32 %v142, %v143
      %v145 = vsel %vm137, %v129, 0.0
      %v146 = vrot.slane %v145, 4
      %v147 = vadd.f32 %v145, %v146
      %v148 = vrot.slane %v147, 2
      %v149 = vadd.f32 %v147, %v148
      %v150 = vrot.slane %v149, 1
      %v151 = vadd.f32 %v149, %v150
      %v152 = vsel %vm137, %v122, 0.0
      %v153 = vrot.slane %v152, 4
      %v154 = vadd.f32 %v152, %v153
      %v155 = vrot.slane %v154, 2
      %v156 = vadd.f32 %v154, %v155
      %v157 = vrot.slane %v156, 1
      %v158 = vadd.f32 %v156, %v157
      %v159 = vsel %vm137, %v130, 0.0
      %v160 = vrot.slane %v159, 4
      %v161 = vadd.f32 %v159, %v160
      %v162 = vrot.slane %v161, 2
      %v163 = vadd.f32 %v161, %v162
      %v164 = vrot.slane %v163, 1
      %v165 = vadd.f32 %v163, %v164
      %v166 = vsel %vm137, %v123, 0.0
      %v167 = vrot.slane %v166, 4
      %v168 = vadd.f32 %v166, %v167
      %v169 = vrot.slane %v168, 2
      %v170 = vadd.f32 %v168, %v169
      %v171 = vrot.slane %v170, 1
      %v172 = vadd.f32 %v170, %v171
      %v173 = vsel %vm137, %v131, 0.0
      %v174 = vrot.slane %v173, 4
      %v175 = vadd.f32 %v173, %v174
      %v176 = vrot.slane %v175, 2
      %v177 = vadd.f32 %v175, %v176
      %v178 = vrot.slane %v177, 1
      %v179 = vadd.f32 %v177, %v178
      %v180 = vsel %vm137, %v124, 0.0
      %v181 = vrot.slane %v180, 4
      %v182 = vadd.f32 %v180, %v181
      %v183 = vrot.slane %v182, 2
      %v184 = vadd.f32 %v182, %v183
      %v185 = vrot.slane %v184, 1
      %v186 = vadd.f32 %v184, %v185
      %v187 = vsel %vm137, %v132, 0.0
      %v188 = vrot.slane %v187, 4
      %v189 = vadd.f32 %v187, %v188
      %v190 = vrot.slane %v189, 2
      %v191 = vadd.f32 %v189, %v190
      %v192 = vrot.slane %v191, 1
      %v193 = vadd.f32 %v191, %v192
      %v194 = vmax.f32 %v144, 1e-12
      %v195 = vmax.f32 %v151, 1e-12
      %v196 = vmax.f32 %v158, 1e-12
      %v197 = vmax.f32 %v165, 1e-12
      %v198 = vmax.f32 %v172, 1e-12
      %v199 = vmax.f32 %v179, 1e-12
      %v200 = vmax.f32 %v186, 1e-12
      %v201 = vmax.f32 %v193, 1e-12
      %v202 = vrsqrt.pop %v194
      %v203 = vrsqrt.pop %v195
      %v204 = vrsqrt.pop %v196
      %v205 = vrsqrt.pop %v197
      %v206 = vrsqrt.pop %v198
      %v207 = vrsqrt.pop %v199
      %v208 = vrsqrt.pop %v200
      %v209 = vrsqrt.pop %v201
      %v218 = vcombine.low %v202, %v203
      %v219 = vcombine.low %v204, %v205
      %v220 = vcombine.low %v206, %v207
      %v221 = vcombine.low %v208, %v209
      %v226 = vmul.f32 %v117, %v218
      %v227 = vmul.f32 %v118, %v219
      %v228 = vmul.f32 %v119, %v220
      %v229 = vmul.f32 %v120, %v221
      %230 = vst [vmem:[%s116] sm:$0x77] %v226
      %231 = vst [vmem:[%s116 + $0x8] sm:$0x77] %v227
      %232 = vst [vmem:[%s116 + $0x10] sm:$0x77] %v228
      %233 = vst [vmem:[%s116 + $0x18] sm:$0x77] %v229
      %p234 = scmp.lt.s32.totalorder %s12, 1
      %s235 = scalar_select %p234, %s12, 1
      %s236 = smul.addr %s235, 8
      %s237 = smul.addr %s236, 4
      %s238 = scalar_lea.vmem %s1, %s237
      // Predicated region
      $region25: #{forward.39} parent=23 // pred_check
        %p239 = pneg %p56
      $region26: #{forward.39} parent=23 // pred_check_branch
        %241 = sbr.rel (%p239) target = $region28
      $region27: #{forward.39} parent=23 // pred_region
        _
      $region28: #{forward.39} parent=23 // pred_fallthru
        _
    $region24: #{forward.39} parent=5 // pred_fallthru
      _
    %p242 = scmp.le.s32.totalorder 2, %s7
    // Predicated region
    $region29: #{forward.39} parent=5 // pred_check
      %p243 = pneg %p242
    $region30: #{forward.39} parent=5 // pred_check_branch
      %245 = sbr.rel (%p243) target = $region32
    $region31: #{forward.39} parent=5 // pred_region
      %s246 = ssub.s32 %s7, 2
      // Predicated region
      $region33: #{forward.39} parent=31 // pred_check
        %p247 = pneg %p62
      $region34: #{forward.39} parent=31 // pred_check_branch
        %249 = sbr.rel (%p247) target = $region36
      $region35: #{forward.39} parent=31 // pred_region
        %p250 = scmp.lt.s32.totalorder %s13, 1
        %s251 = scalar_select %p250, %s13, 1
        %s252 = smul.addr %s251, 8
        %s253 = smul.addr %s252, 4
        %s254 = scalar_lea.vmem %s1, %s253
      $region36: #{forward.39} parent=31 // pred_fallthru
        _
    $region32: #{forward.39} parent=5 // pred_fallthru
      _
  $region6: #{forward.39} parent=0 // loop_footer
    %s11 = sadd.s32 1, %s7
  $region7: #{forward.39} parent=0 // loop_footer_branch
    %6 = sbr.rel target = $region3
  $region8: #{forward.39} parent=0 // loop_exit
    _

</llo_original>
